<compile_context>
chip_gen: v5e
topology: v5e:2x2
jax: 0.10.0
libtpu: 0.0.40
codegen_flags: <defaults>
</compile_context>

<pallas_src>
import math

import jax
import jax.numpy as jnp
import numpy as np
from jax import lax
from jax.experimental import pallas as pl
from jax.experimental.pallas import tpu as pltpu


def _geometry(H, W):
    """Row pitch S with S >= W+2 and Mp = H*S a multiple of 128 (lane-dense)."""
    step = 128 // math.gcd(H, 128)
    S = ((W + 2 + step - 1) // step) * step      # padded row pitch
    Mp = H * S                                   # flat output plane (lane-dense)
    Rtot = (H + 2) * S                           # flat padded plane
    hb_base = (-(S + 1)) % 128                   # so the interior store is aligned
    hb_int0 = hb_base + S + 1                    # multiple of 128 by construction
    hbuf_cols = ((hb_base + Mp + 2 * S + 2 + 127) // 128) * 128
    assert hb_int0 % 128 == 0 and Mp % 128 == 0
    assert hb_int0 + Mp < hbuf_cols              # tail band never overlaps interior
    return S, Mp, Rtot, hb_base, hb_int0, hbuf_cols


def _make_resblock_kernel(H, W, C):
    """Builds the kernel body for static H, W, C (C must be 64)."""
    S, Mp, Rtot, hb_base, hb_int0, hbuf_cols = _geometry(H, W)

    def kernel(xs_ref, xc_ref, wg1_ref, wg2_ref, consts_ref, mask_ref,
               out_ref, hbuf_ref):
        # xs_ref   : (1, 9*C, Mp) bf16   pre-staggered conv1 taps, row = k*C + c
        # xc_ref   : (1, C, Mp)   f32    center plane (skip connection)
        # wg{1,2}  : (64, 9*C)    bf16   BN-scale-folded weights, col = k*C + c
        # consts   : (3, 64, 1)   f32    [shift1, shift2, prelu_slope]
        # mask     : (1, Mp)      f32    1.0 real columns, 0.0 junk columns
        # out_ref  : (1, 64, Mp)  f32
        # hbuf_ref : (64, hbuf_cols) bf16  zero-bordered intermediate activation

        # ---- conv1 (+ folded bias/BN1): single K=9C matmul, no in-kernel slices ----
        h = jnp.dot(wg1_ref[...], xs_ref[0],
                    preferred_element_type=jnp.float32)            # (64, Mp) f32
        h = h + consts_ref[0]                                      # bias + BN shift
        slope = consts_ref[2]                                      # (64, 1)
        h = jnp.where(h >= 0, h, slope * h)                        # PReLU (f32)
        h = jnp.where(mask_ref[...] > 0.5, h, 0.0)                 # zero junk cols

        # ---- zero-bordered intermediate in VMEM (all stores lane-aligned) ----
        hbuf_ref[:, 0:hb_int0] = jnp.zeros((64, hb_int0), jnp.bfloat16)
        hbuf_ref[:, hb_int0 + Mp:hbuf_cols] = jnp.zeros(
            (64, hbuf_cols - hb_int0 - Mp), jnp.bfloat16)
        hbuf_ref[:, hb_int0:hb_int0 + Mp] = h.astype(jnp.bfloat16)

        # ---- conv2 (+ folded bias/BN2) + residual: single K=9C matmul ----
        taps = jnp.concatenate(
            [hbuf_ref[:, hb_base + dy * S + dx:hb_base + dy * S + dx + Mp]
             for dy in range(3) for dx in range(3)], axis=0)       # (9C, Mp) bf16
        y = jnp.dot(wg2_ref[...], taps,
                    preferred_element_type=jnp.float32)            # (64, Mp) f32
        y = y + consts_ref[1]
        y = y + xc_ref[0]                                          # skip connection
        out_ref[0] = y.astype(out_ref.dtype)

    return kernel, S, Mp, Rtot, hbuf_cols


@jax.jit
def residual_block_nchw(x_nchw, wg1, wg2, consts):
    """PyTorch-layout entry point (NCHW in, NCHW out). Channels must be 64."""
    N, C, H, W = x_nchw.shape
    assert C == 64, "residual add requires input channels == 64"

    kernel, S, Mp, Rtot, hbuf_cols = _make_resblock_kernel(H, W, C)

    # host-side halo pad + flatten at lane-dense row pitch S (>= W+2)
    xp = jnp.pad(x_nchw, ((0, 0), (0, 0), (1, 1), (1, S - W - 1)))   # (N,C,H+2,S)
    xf = xp.reshape(N, C, Rtot)
    xf = jnp.pad(xf, ((0, 0), (0, 0), (0, 2)))        # slack lanes for the last tap

    # pre-staggered conv1 taps (bf16): channel index k*C + c, k = 3*dy + dx
    x_stag = jnp.concatenate(
        [xf[:, :, dy * S + dx:dy * S + dx + Mp]
         for dy in range(3) for dx in range(3)], axis=1).astype(jnp.bfloat16)
    x_center = xf[:, :, S + 1:S + 1 + Mp]             # f32 center plane (skip add)

    # trace-time junk-column mask (1.0 where col < W within each pitch-S row)
    mask = jnp.asarray((np.arange(Mp) % S < W).astype(np.float32)).reshape(1, Mp)

    out_flat = pl.pallas_call(
        kernel,
        out_shape=jax.ShapeDtypeStruct((N, 64, Mp), jnp.float32),
        grid_spec=pltpu.PrefetchScalarGridSpec(
            num_scalar_prefetch=0,
            grid=(N,),
            in_specs=[
                pl.BlockSpec((1, 9 * C, Mp), lambda n: (n, 0, 0)),   # staggered x
                pl.BlockSpec((1, C, Mp), lambda n: (n, 0, 0)),       # skip plane
                pl.BlockSpec((64, 9 * C), lambda n: (0, 0)),         # packed w1
                pl.BlockSpec((64, 9 * 64), lambda n: (0, 0)),        # packed w2
                pl.BlockSpec((3, 64, 1), lambda n: (0, 0, 0)),       # shifts+slope
                pl.BlockSpec((1, Mp), lambda n: (0, 0)),             # column mask
            ],
            out_specs=pl.BlockSpec((1, 64, Mp), lambda n: (n, 0, 0)),
            scratch_shapes=[pltpu.VMEM((64, hbuf_cols), jnp.bfloat16)],
        ),
        compiler_params=pltpu.CompilerParams(
            dimension_semantics=("parallel",),
            vmem_limit_bytes=32 * 1024 * 1024),
    )(x_stag, x_center, wg1, wg2, consts, mask)

    # drop the junk columns per row and restore NCHW
    # TODO(synk): consumers that accept the padded-W layout can skip this slice
    #             (it is an extra XLA memory pass once H, W grow).
    return out_flat.reshape(N, 64, H, S)[:, :, :, :W]


def pack_params(params):
    """Fold conv bias + eval-mode BN into weights/shift and pack for the kernel."""
    (w1, b1, s1, t1, a, w2, b2, s2, t2) = params
    w1f = w1 * s1.reshape(1, 1, 1, 64)            # fold BN scale (per out channel)
    w2f = w2 * s2.reshape(1, 1, 1, 64)

    def pack(w):                                   # (3,3,Cin,64) -> (64, 9*Cin)
        return jnp.concatenate([w[dy, dx].T for dy in range(3) for dx in range(3)],
                               axis=1)

    wg1 = pack(w1f).astype(jnp.bfloat16)           # bf16 MXU operands
    wg2 = pack(w2f).astype(jnp.bfloat16)
    shift1 = (t1 + s1 * b1).reshape(64, 1)         # fused conv bias + BN shift
    shift2 = (t2 + s2 * b2).reshape(64, 1)
    slope = jnp.full((64, 1), a[0, 0], jnp.float32)
    consts = jnp.stack([shift1, shift2, slope], axis=0)   # (3, 64, 1) f32
    return wg1, wg2, consts


def _ref_forward_nhwc(x, params):
    """Pure-JAX reference (eval-mode BN folded, same semantics as the kernel)."""
    (w1, b1, s1, t1, a, w2, b2, s2, t2) = params
    dn = ('NHWC', 'HWIO', 'NHWC')
    h = lax.conv_general_dilated(x, w1, (1, 1), 'SAME', dimension_numbers=dn,
                                 precision=lax.Precision.HIGHEST) + b1.reshape(-1)
    h = h * s1.reshape(-1) + t1.reshape(-1)
    h = jnp.where(h >= 0, h, a[0, 0] * h)
    y = lax.conv_general_dilated(h, w2, (1, 1), 'SAME', dimension_numbers=dn,
                                 precision=lax.Precision.HIGHEST) + b2.reshape(-1)
    y = y * s2.reshape(-1) + t2.reshape(-1)
    return x + y


def make_params(key, channels=64):
    """Deterministic synthetic parameters (same shapes as the PyTorch module)."""
    ks = jax.random.split(key, 12)
    eps = 1e-5
    # conv1: Conv2d(channels, 64, 3) -> HWIO (3,3,channels,64)
    w1 = jax.random.normal(ks[0], (3, 3, channels, 64), jnp.float32) * 0.05
    b1 = jax.random.normal(ks[1], (1, 64), jnp.float32) * 0.05
    # BN1 (gamma, beta, running mean/var) folded to scale/shift
    g1 = 1.0 + 0.1 * jax.random.normal(ks[2], (1, 64), jnp.float32)
    be1 = 0.1 * jax.random.normal(ks[3], (1, 64), jnp.float32)
    rm1 = 0.1 * jax.random.normal(ks[4], (1, 64), jnp.float32)
    rv1 = 1.0 + 0.1 * jax.random.uniform(ks[5], (1, 64), jnp.float32)
    s1 = g1 / jnp.sqrt(rv1 + eps)
    t1 = be1 - rm1 * s1
    # PReLU (single shared slope, PyTorch default init 0.25)
    a = jnp.full((1, 1), 0.25, jnp.float32)
    # conv2: Conv2d(64, 64, 3)
    w2 = jax.random.normal(ks[6], (3, 3, 64, 64), jnp.float32) * 0.05
    b2 = jax.random.normal(ks[7], (1, 64), jnp.float32) * 0.05
    # BN2
    g2 = 1.0 + 0.1 * jax.random.normal(ks[8], (1, 64), jnp.float32)
    be2 = 0.1 * jax.random.normal(ks[9], (1, 64), jnp.float32)
    rm2 = 0.1 * jax.random.normal(ks[10], (1, 64), jnp.float32)
    rv2 = 1.0 + 0.1 * jax.random.uniform(ks[11], (1, 64), jnp.float32)
    s2 = g2 / jnp.sqrt(rv2 + eps)
    t2 = be2 - rm2 * s2
    return (w1, b1, s1, t1, a, w2, b2, s2, t2)


if __name__ == "__main__":
    key = jax.random.PRNGKey(0)
    k_x, k_p = jax.random.split(key)

    N, C, H, W = 2, 64, 16, 16            # channels must be 64 for the skip add
    x_nchw = jax.random.normal(k_x, (N, C, H, W), jnp.float32)
    params = make_params(k_p, channels=C)
    wg1, wg2, consts = pack_params(params)

    out = residual_block_nchw(x_nchw, wg1, wg2, consts)
    out = jax.block_until_ready(out)

    # correctness check against a pure-JAX f32 reference; tolerance accounts for
    # the bf16 MXU operands (weights, staggered input, intermediate activation).
    x_nhwc = jnp.transpose(x_nchw, (0, 2, 3, 1))
    ref = jnp.transpose(_ref_forward_nhwc(x_nhwc, params), (0, 3, 1, 2))
    assert out.shape == x_nchw.shape
    max_err = jnp.max(jnp.abs(out - ref))
    assert jnp.allclose(out, ref, atol=5e-2, rtol=5e-2), f"max err {max_err}"

    print("KERNEL_OK")
</pallas_src>

<mosaic_0001>
module attributes {stable_mosaic.version = 11 : i64} {
  func.func @kernel(%arg0: i32, %arg1: memref<1x576x384xbf16, #tpu.memory_space<vmem>>, %arg2: memref<1x64x384xf32, #tpu.memory_space<vmem>>, %arg3: memref<64x576xbf16, #tpu.memory_space<vmem>>, %arg4: memref<64x576xbf16, #tpu.memory_space<vmem>>, %arg5: memref<3x64x1xf32, #tpu.memory_space<vmem>>, %arg6: memref<1x384xf32, #tpu.memory_space<vmem>>, %arg7: memref<1x64x384xf32, #tpu.memory_space<vmem>>, %arg8: memref<64x640xbf16, #tpu.memory_space<vmem>>) attributes {dimension_semantics = [#tpu.dimension_semantics<parallel>], iteration_bounds = array<i64: 2>, scalar_prefetch = 0 : i64, scratch_operands = 1 : i64, tpu.core_type = #tpu.core_type<tc>, window_params = [{transform_indices = @transform_0, window_bounds = array<i64: 1, 576, 384>}, {transform_indices = @transform_1, window_bounds = array<i64: 1, 64, 384>}, {pipeline_mode = #tpu.pipeline_mode<synchronous>, transform_indices = @transform_2, window_bounds = array<i64: 64, 576>}, {pipeline_mode = #tpu.pipeline_mode<synchronous>, transform_indices = @transform_3, window_bounds = array<i64: 64, 576>}, {pipeline_mode = #tpu.pipeline_mode<synchronous>, transform_indices = @transform_4, window_bounds = array<i64: 3, 64, 1>}, {pipeline_mode = #tpu.pipeline_mode<synchronous>, transform_indices = @transform_5, window_bounds = array<i64: 1, 384>}, {transform_indices = @transform_6, window_bounds = array<i64: 1, 64, 384>}]} {
    %c0 = arith.constant 0 : index
    %c0_0 = arith.constant 0 : index
    %0 = vector.load %arg3[%c0, %c0_0] : memref<64x576xbf16, #tpu.memory_space<vmem>>, vector<64x576xbf16>
    %c0_1 = arith.constant 0 : index
    %c0_2 = arith.constant 0 : index
    %c0_3 = arith.constant 0 : index
    %1 = vector.load %arg1[%c0_1, %c0_2, %c0_3] : memref<1x576x384xbf16, #tpu.memory_space<vmem>>, vector<1x576x384xbf16>
    %2 = vector.shape_cast %1 : vector<1x576x384xbf16> to vector<576x384xbf16>
    %cst = arith.constant dense<0.000000e+00> : vector<64x384xf32>
    %3 = tpu.matmul %0, %2, %cst {dimension_numbers = #tpu.dot_dimension_numbers<[1], [0], [0], [1], [0, 0, 1, 1], [], []>} : vector<64x576xbf16>, vector<576x384xbf16>, vector<64x384xf32> -> vector<64x384xf32>
    %c0_4 = arith.constant 0 : index
    %c0_5 = arith.constant 0 : index
    %c0_6 = arith.constant 0 : index
    %4 = vector.load %arg5[%c0_4, %c0_5, %c0_6] : memref<3x64x1xf32, #tpu.memory_space<vmem>>, vector<1x64x1xf32>
    %5 = vector.shape_cast %4 : vector<1x64x1xf32> to vector<64x1xf32>
    %6 = vector.broadcast %5 : vector<64x1xf32> to vector<64x384xf32>
    %7 = arith.addf %3, %6 : vector<64x384xf32>
    %c2 = arith.constant 2 : index
    %c0_7 = arith.constant 0 : index
    %c0_8 = arith.constant 0 : index
    %8 = vector.load %arg5[%c2, %c0_7, %c0_8] : memref<3x64x1xf32, #tpu.memory_space<vmem>>, vector<1x64x1xf32>
    %9 = vector.shape_cast %8 : vector<1x64x1xf32> to vector<64x1xf32>
    %cst_9 = arith.constant 0.000000e+00 : f32
    %10 = vector.broadcast %cst_9 : f32 to vector<64x384xf32>
    %11 = arith.cmpf oge, %7, %10 : vector<64x384xf32>
    %12 = vector.broadcast %9 : vector<64x1xf32> to vector<64x384xf32>
    %13 = arith.mulf %12, %7 : vector<64x384xf32>
    %14 = arith.select %11, %7, %13 : vector<64x384xi1>, vector<64x384xf32>
    %c0_10 = arith.constant 0 : index
    %c0_11 = arith.constant 0 : index
    %15 = vector.load %arg6[%c0_10, %c0_11] : memref<1x384xf32, #tpu.memory_space<vmem>>, vector<1x384xf32>
    %cst_12 = arith.constant 5.000000e-01 : f32
    %16 = vector.broadcast %cst_12 : f32 to vector<1x384xf32>
    %17 = arith.cmpf ogt, %15, %16 : vector<1x384xf32>
    %cst_13 = arith.constant 0.000000e+00 : f32
    %18 = vector.shape_cast %17 : vector<1x384xi1> to vector<1x384xi1>
    %19 = vector.broadcast %18 : vector<1x384xi1> to vector<64x384xi1>
    %20 = vector.broadcast %cst_13 : f32 to vector<64x384xf32>
    %21 = arith.select %19, %14, %20 : vector<64x384xi1>, vector<64x384xf32>
    %cst_14 = arith.constant 0.000000e+00 : bf16
    %22 = vector.broadcast %cst_14 : bf16 to vector<64x128xbf16>
    %c0_15 = arith.constant 0 : index
    %c0_16 = arith.constant 0 : index
    %23 = vector.load %arg8[%c0_15, %c0_16] : memref<64x640xbf16, #tpu.memory_space<vmem>>, vector<64x128xbf16>
    tpu.vector_store %arg8[%c0_15, %c0_16], %22 {strides = array<i32>} : memref<64x640xbf16, #tpu.memory_space<vmem>>, vector<64x128xbf16>,
    %cst_17 = arith.constant 0.000000e+00 : bf16
    %24 = vector.broadcast %cst_17 : bf16 to vector<64x128xbf16>
    %c0_18 = arith.constant 0 : index
    %c512 = arith.constant 512 : index
    %25 = vector.load %arg8[%c0_18, %c512] : memref<64x640xbf16, #tpu.memory_space<vmem>>, vector<64x128xbf16>
    tpu.vector_store %arg8[%c0_18, %c512], %24 {strides = array<i32>} : memref<64x640xbf16, #tpu.memory_space<vmem>>, vector<64x128xbf16>,
    %26 = arith.truncf %21 : vector<64x384xf32> to vector<64x384xbf16>
    %c0_19 = arith.constant 0 : index
    %c128 = arith.constant 128 : index
    %27 = vector.load %arg8[%c0_19, %c128] : memref<64x640xbf16, #tpu.memory_space<vmem>>, vector<64x384xbf16>
    tpu.vector_store %arg8[%c0_19, %c128], %26 {strides = array<i32>} : memref<64x640xbf16, #tpu.memory_space<vmem>>, vector<64x384xbf16>,
    %c0_20 = arith.constant 0 : index
    %c103 = arith.constant 103 : index
    %28 = vector.load %arg8[%c0_20, %c103] : memref<64x640xbf16, #tpu.memory_space<vmem>>, vector<64x384xbf16>
    %c0_21 = arith.constant 0 : index
    %c104 = arith.constant 104 : index
    %29 = vector.load %arg8[%c0_21, %c104] : memref<64x640xbf16, #tpu.memory_space<vmem>>, vector<64x384xbf16>
    %c0_22 = arith.constant 0 : index
    %c105 = arith.constant 105 : index
    %30 = vector.load %arg8[%c0_22, %c105] : memref<64x640xbf16, #tpu.memory_space<vmem>>, vector<64x384xbf16>
    %c0_23 = arith.constant 0 : index
    %c127 = arith.constant 127 : index
    %31 = vector.load %arg8[%c0_23, %c127] : memref<64x640xbf16, #tpu.memory_space<vmem>>, vector<64x384xbf16>
    %c0_24 = arith.constant 0 : index
    %c128_25 = arith.constant 128 : index
    %32 = vector.load %arg8[%c0_24, %c128_25] : memref<64x640xbf16, #tpu.memory_space<vmem>>, vector<64x384xbf16>
    %c0_26 = arith.constant 0 : index
    %c129 = arith.constant 129 : index
    %33 = vector.load %arg8[%c0_26, %c129] : memref<64x640xbf16, #tpu.memory_space<vmem>>, vector<64x384xbf16>
    %c0_27 = arith.constant 0 : index
    %c151 = arith.constant 151 : index
    %34 = vector.load %arg8[%c0_27, %c151] : memref<64x640xbf16, #tpu.memory_space<vmem>>, vector<64x384xbf16>
    %c0_28 = arith.constant 0 : index
    %c152 = arith.constant 152 : index
    %35 = vector.load %arg8[%c0_28, %c152] : memref<64x640xbf16, #tpu.memory_space<vmem>>, vector<64x384xbf16>
    %c0_29 = arith.constant 0 : index
    %c153 = arith.constant 153 : index
    %36 = vector.load %arg8[%c0_29, %c153] : memref<64x640xbf16, #tpu.memory_space<vmem>>, vector<64x384xbf16>
    %37 = tpu.concatenate %28, %29, %30, %31, %32, %33, %34, %35, %36 in 0 : vector<64x384xbf16>, vector<64x384xbf16>, vector<64x384xbf16>, vector<64x384xbf16>, vector<64x384xbf16>, vector<64x384xbf16>, vector<64x384xbf16>, vector<64x384xbf16>, vector<64x384xbf16> -> vector<576x384xbf16>
    %c0_30 = arith.constant 0 : index
    %c0_31 = arith.constant 0 : index
    %38 = vector.load %arg4[%c0_30, %c0_31] : memref<64x576xbf16, #tpu.memory_space<vmem>>, vector<64x576xbf16>
    %cst_32 = arith.constant dense<0.000000e+00> : vector<64x384xf32>
    %39 = tpu.matmul %38, %37, %cst_32 {dimension_numbers = #tpu.dot_dimension_numbers<[1], [0], [0], [1], [0, 0, 1, 1], [], []>} : vector<64x576xbf16>, vector<576x384xbf16>, vector<64x384xf32> -> vector<64x384xf32>
    %c1 = arith.constant 1 : index
    %c0_33 = arith.constant 0 : index
    %c0_34 = arith.constant 0 : index
    %40 = vector.load %arg5[%c1, %c0_33, %c0_34] : memref<3x64x1xf32, #tpu.memory_space<vmem>>, vector<1x64x1xf32>
    %41 = vector.shape_cast %40 : vector<1x64x1xf32> to vector<64x1xf32>
    %42 = vector.broadcast %41 : vector<64x1xf32> to vector<64x384xf32>
    %43 = arith.addf %39, %42 : vector<64x384xf32>
    %c0_35 = arith.constant 0 : index
    %c0_36 = arith.constant 0 : index
    %c0_37 = arith.constant 0 : index
    %44 = vector.load %arg2[%c0_35, %c0_36, %c0_37] : memref<1x64x384xf32, #tpu.memory_space<vmem>>, vector<1x64x384xf32>
    %45 = vector.shape_cast %44 : vector<1x64x384xf32> to vector<64x384xf32>
    %46 = arith.addf %43, %45 : vector<64x384xf32>
    %c0_38 = arith.constant 0 : index
    %c0_39 = arith.constant 0 : index
    %c0_40 = arith.constant 0 : index
    %47 = vector.load %arg7[%c0_38, %c0_39, %c0_40] : memref<1x64x384xf32, #tpu.memory_space<vmem>>, vector<1x64x384xf32>
    %48 = vector.shape_cast %47 : vector<1x64x384xf32> to vector<64x384xf32>
    %49 = vector.shape_cast %46 : vector<64x384xf32> to vector<1x64x384xf32>
    tpu.vector_store %arg7[%c0_38, %c0_39, %c0_40], %49 {strides = array<i32>} : memref<1x64x384xf32, #tpu.memory_space<vmem>>, vector<1x64x384xf32>,
    return
  }
  func.func @transform_0(%arg0: i32) -> (i32, i32, i32) {
    %c0_i32 = arith.constant 0 : i32
    %c0_i32_0 = arith.constant 0 : i32
    %c0_i32_1 = arith.constant 0 : i32
    return %arg0, %c0_i32, %c0_i32_0 : i32, i32, i32
  }
  func.func @transform_1(%arg0: i32) -> (i32, i32, i32) {
    %c0_i32 = arith.constant 0 : i32
    %c0_i32_0 = arith.constant 0 : i32
    %c0_i32_1 = arith.constant 0 : i32
    return %arg0, %c0_i32, %c0_i32_0 : i32, i32, i32
  }
  func.func @transform_2(%arg0: i32) -> (i32, i32) {
    %c0_i32 = arith.constant 0 : i32
    %c0_i32_0 = arith.constant 0 : i32
    %c0_i32_1 = arith.constant 0 : i32
    return %c0_i32, %c0_i32_0 : i32, i32
  }
  func.func @transform_3(%arg0: i32) -> (i32, i32) {
    %c0_i32 = arith.constant 0 : i32
    %c0_i32_0 = arith.constant 0 : i32
    %c0_i32_1 = arith.constant 0 : i32
    return %c0_i32, %c0_i32_0 : i32, i32
  }
  func.func @transform_4(%arg0: i32) -> (i32, i32, i32) {
    %c0_i32 = arith.constant 0 : i32
    %c0_i32_0 = arith.constant 0 : i32
    %c0_i32_1 = arith.constant 0 : i32
    %c0_i32_2 = arith.constant 0 : i32
    return %c0_i32, %c0_i32_0, %c0_i32_1 : i32, i32, i32
  }
  func.func @transform_5(%arg0: i32) -> (i32, i32) {
    %c0_i32 = arith.constant 0 : i32
    %c0_i32_0 = arith.constant 0 : i32
    %c0_i32_1 = arith.constant 0 : i32
    return %c0_i32, %c0_i32_0 : i32, i32
  }
  func.func @transform_6(%arg0: i32) -> (i32, i32, i32) {
    %c0_i32 = arith.constant 0 : i32
    %c0_i32_0 = arith.constant 0 : i32
    %c0_i32_1 = arith.constant 0 : i32
    return %arg0, %c0_i32, %c0_i32_0 : i32, i32, i32
  }
}

</mosaic_0001>

<llo_original>
// kernel: residual_block_nchw.1
$region0: #{residual_block_nchw.1}
  #allocation0 [shape = 'u32[]', space=smem, size = 0x4, offset = 0x4, fixed_abs, tag = 'smem constant byte address 0x4 - core index']
  #allocation1 [shape = 'u32[72,128]{1,0:T(1,128)}', space=vmem, size = 0x9000, scoped, tag = 'internal scratch']
  #allocation2 [shape = 'bf16[64,640]{1,0:T(8,128)(2,1)}', space=vmem, size = 0x14000, scoped, tag = 'scratch operand']
  %s0 = inlined_call_operand.vmem [shape: bf16[2,576,384], index: 0, kind: input, shape index: {}]
  %s1 = inlined_call_operand.vmem [shape: f32[2,64,384], index: 1, kind: input, shape index: {}]
  %s2 = inlined_call_operand.vmem [shape: bf16[64,576], index: 2, kind: input, shape index: {}]
  %s3 = inlined_call_operand.vmem [shape: bf16[64,576], index: 3, kind: input, shape index: {}]
  %s4 = inlined_call_operand.vmem [shape: f32[3,64,1], index: 4, kind: input, shape index: {}]
  %s5 = inlined_call_operand.vmem [shape: f32[1,384], index: 5, kind: input, shape index: {}]
  %s6 = inlined_call_operand.vmem [shape: f32[2,64,384], index: 6, kind: output, shape index: {}]
  %s7 = sld [smem:[#allocation0]]
  $region57: #{residual_block_nchw.1} parent=0
    _
  %s9 = ssub.s32 1, %s7
  %s10 = scalar_select 0, %s9, %s7
  loop: start=0, step=1, limit=4
  $region2: #{residual_block_nchw.1} parent=0 // loop_pre_header
    _
  $region3: #{residual_block_nchw.1} parent=0 // loop_header
    %s12 = sphi 0, %s16
    %p13 = scmp.ge.s32.totalorder %s12, 4
    %s22 = sphi 0, %s24
    %s25 = sphi 0, %s22
    %s26 = sphi 0, %s25
    %s42 = sphi 0, %s26
    %s48 = sphi 0, %s50
    %s51 = sphi 0, %s48
    %s52 = sphi 0, %s51
    %s68 = sphi 0, %s52
    %s72 = sphi 0, %s72
    %s74 = sphi 0, %s72
    %s75 = sphi 0, %s74
    %s89 = sphi 0, %s75
    %s93 = sphi 0, %s93
    %s95 = sphi 0, %s93
    %s96 = sphi 0, %s95
    %s110 = sphi 0, %s96
    %s114 = sphi 0, %s114
    %s116 = sphi 0, %s114
    %s117 = sphi 0, %s116
    %s131 = sphi 0, %s117
    %s135 = sphi 0, %s135
    %s137 = sphi 0, %s135
    %s138 = sphi 0, %s137
    %s152 = sphi 0, %s138
    %s158 = sphi 0, %s160
    %s161 = sphi 0, %s158
    %s162 = sphi 0, %s161
    %s178 = sphi 0, %s162
  $region4: #{residual_block_nchw.1} parent=0 // loop_header_branch
    %15 = sbr.rel (%p13) target = $region8
  $region5: #{residual_block_nchw.1} parent=0 // loop_body
    %s17 = ssub.s32 %s12, 1
    %s18 = ssub.s32 %s12, 2
    %s19 = sadd.s32 %s12, 1
    %s20 = ssub.s32 %s12, %s19
    %p21 = scmp.eq.s32.totalorder %s20, 0
    %s23 = sadd.s32 %s22, 1
    %s24 = scalar_select %p21, %s22, %s23
    %p27 = pneg %p21
    %p28 = scmp.eq.s32.totalorder %s12, 1
    %p29 = por %p27, %p28
    %p30 = scmp.ne.s32.totalorder %s22, %s25
    %p31 = scmp.eq.s32.totalorder %s12, 0
    %p32 = por %p30, %p31
    %p33 = scmp.ne.s32.totalorder %s22, %s25
    %p34 = scmp.eq.s32.totalorder %s17, 1
    %p35 = por %p33, %p34
    %p36 = scmp.ne.s32.totalorder %s25, %s26
    %p37 = scmp.eq.s32.totalorder %s17, 0
    %p38 = por %p36, %p37
    %p39 = scmp.ne.s32.totalorder %s25, %s26
    %p40 = scmp.eq.s32.totalorder %s18, 1
    %p41 = por %p39, %p40
    %p43 = scmp.ne.s32.totalorder %s26, %s42
    %p44 = scmp.eq.s32.totalorder %s18, 0
    %p45 = por %p43, %p44
    %s46 = ssub.s32 %s12, %s19
    %p47 = scmp.eq.s32.totalorder %s46, 0
    %s49 = sadd.s32 %s48, 1
    %s50 = scalar_select %p47, %s48, %s49
    %p53 = pneg %p47
    %p54 = scmp.eq.s32.totalorder %s12, 1
    %p55 = por %p53, %p54
    %p56 = scmp.ne.s32.totalorder %s48, %s51
    %p57 = scmp.eq.s32.totalorder %s12, 0
    %p58 = por %p56, %p57
    %p59 = scmp.ne.s32.totalorder %s48, %s51
    %p60 = scmp.eq.s32.totalorder %s17, 1
    %p61 = por %p59, %p60
    %p62 = scmp.ne.s32.totalorder %s51, %s52
    %p63 = scmp.eq.s32.totalorder %s17, 0
    %p64 = por %p62, %p63
    %p65 = scmp.ne.s32.totalorder %s51, %s52
    %p66 = scmp.eq.s32.totalorder %s18, 1
    %p67 = por %p65, %p66
    %p69 = scmp.ne.s32.totalorder %s52, %s68
    %p70 = scmp.eq.s32.totalorder %s18, 0
    %p71 = por %p69, %p70
    %s73 = sadd.s32 %s72, 1
    %p76 = scmp.eq.s32.totalorder %s12, 1
    %p77 = scmp.ne.s32.totalorder %s72, %s74
    %p78 = scmp.eq.s32.totalorder %s12, 0
    %p79 = por %p77, %p78
    %p80 = scmp.ne.s32.totalorder %s72, %s74
    %p81 = scmp.eq.s32.totalorder %s17, 1
    %p82 = por %p80, %p81
    %p83 = scmp.ne.s32.totalorder %s74, %s75
    %p84 = scmp.eq.s32.totalorder %s17, 0
    %p85 = por %p83, %p84
    %p86 = scmp.ne.s32.totalorder %s74, %s75
    %p87 = scmp.eq.s32.totalorder %s18, 1
    %p88 = por %p86, %p87
    %p90 = scmp.ne.s32.totalorder %s75, %s89
    %p91 = scmp.eq.s32.totalorder %s18, 0
    %p92 = por %p90, %p91
    %s94 = sadd.s32 %s93, 1
    %p97 = scmp.eq.s32.totalorder %s12, 1
    %p98 = scmp.ne.s32.totalorder %s93, %s95
    %p99 = scmp.eq.s32.totalorder %s12, 0
    %p100 = por %p98, %p99
    %p101 = scmp.ne.s32.totalorder %s93, %s95
    %p102 = scmp.eq.s32.totalorder %s17, 1
    %p103 = por %p101, %p102
    %p104 = scmp.ne.s32.totalorder %s95, %s96
    %p105 = scmp.eq.s32.totalorder %s17, 0
    %p106 = por %p104, %p105
    %p107 = scmp.ne.s32.totalorder %s95, %s96
    %p108 = scmp.eq.s32.totalorder %s18, 1
    %p109 = por %p107, %p108
    %p111 = scmp.ne.s32.totalorder %s96, %s110
    %p112 = scmp.eq.s32.totalorder %s18, 0
    %p113 = por %p111, %p112
    %s115 = sadd.s32 %s114, 1
    %p118 = scmp.eq.s32.totalorder %s12, 1
    %p119 = scmp.ne.s32.totalorder %s114, %s116
    %p120 = scmp.eq.s32.totalorder %s12, 0
    %p121 = por %p119, %p120
    %p122 = scmp.ne.s32.totalorder %s114, %s116
    %p123 = scmp.eq.s32.totalorder %s17, 1
    %p124 = por %p122, %p123
    %p125 = scmp.ne.s32.totalorder %s116, %s117
    %p126 = scmp.eq.s32.totalorder %s17, 0
    %p127 = por %p125, %p126
    %p128 = scmp.ne.s32.totalorder %s116, %s117
    %p129 = scmp.eq.s32.totalorder %s18, 1
    %p130 = por %p128, %p129
    %p132 = scmp.ne.s32.totalorder %s117, %s131
    %p133 = scmp.eq.s32.totalorder %s18, 0
    %p134 = por %p132, %p133
    %s136 = sadd.s32 %s135, 1
    %p139 = scmp.eq.s32.totalorder %s12, 1
    %p140 = scmp.ne.s32.totalorder %s135, %s137
    %p141 = scmp.eq.s32.totalorder %s12, 0
    %p142 = por %p140, %p141
    %p143 = scmp.ne.s32.totalorder %s135, %s137
    %p144 = scmp.eq.s32.totalorder %s17, 1
    %p145 = por %p143, %p144
    %p146 = scmp.ne.s32.totalorder %s137, %s138
    %p147 = scmp.eq.s32.totalorder %s17, 0
    %p148 = por %p146, %p147
    %p149 = scmp.ne.s32.totalorder %s137, %s138
    %p150 = scmp.eq.s32.totalorder %s18, 1
    %p151 = por %p149, %p150
    %p153 = scmp.ne.s32.totalorder %s138, %s152
    %p154 = scmp.eq.s32.totalorder %s18, 0
    %p155 = por %p153, %p154
    %s156 = ssub.s32 %s12, %s19
    %p157 = scmp.eq.s32.totalorder %s156, 0
    %s159 = sadd.s32 %s158, 1
    %s160 = scalar_select %p157, %s158, %s159
    %p163 = pneg %p157
    %p164 = scmp.eq.s32.totalorder %s12, 1
    %p165 = por %p163, %p164
    %p166 = scmp.ne.s32.totalorder %s158, %s161
    %p167 = scmp.eq.s32.totalorder %s12, 0
    %p168 = por %p166, %p167
    %p169 = scmp.ne.s32.totalorder %s158, %s161
    %p170 = scmp.eq.s32.totalorder %s17, 1
    %p171 = por %p169, %p170
    %p172 = scmp.ne.s32.totalorder %s161, %s162
    %p173 = scmp.eq.s32.totalorder %s17, 0
    %p174 = por %p172, %p173
    %p175 = scmp.ne.s32.totalorder %s161, %s162
    %p176 = scmp.eq.s32.totalorder %s18, 1
    %p177 = por %p175, %p176
    %p179 = scmp.ne.s32.totalorder %s162, %s178
    %p180 = scmp.eq.s32.totalorder %s18, 0
    %p181 = por %p179, %p180
    %p182 = scmp.le.s32.totalorder 1, %s12
    %p183 = scmp.lt.s32.totalorder %s12, 3
    %p184 = pnand %p182, %p183
    %p185 = pneg %p184
    // Predicated region
    $region9: #{residual_block_nchw.1} parent=5 // pred_check
      _
    $region10: #{residual_block_nchw.1} parent=5 // pred_check_branch
      %187 = sbr.rel (%p184) target = $region12
    $region11: #{residual_block_nchw.1} parent=5 // pred_region
      %s188 = ssub.s32 %s12, 1
      // Predicated region
      $region13: #{residual_block_nchw.1} parent=11 // pred_check
        %p189 = pneg %p85
      $region14: #{residual_block_nchw.1} parent=11 // pred_check_branch
        %191 = sbr.rel (%p189) target = $region16
      $region15: #{residual_block_nchw.1} parent=11 // pred_region
        _
      $region16: #{residual_block_nchw.1} parent=11 // pred_fallthru
        _
      // Predicated region
      $region17: #{residual_block_nchw.1} parent=11 // pred_check
        %p192 = pneg %p106
      $region18: #{residual_block_nchw.1} parent=11 // pred_check_branch
        %194 = sbr.rel (%p192) target = $region20
      $region19: #{residual_block_nchw.1} parent=11 // pred_region
        _
      $region20: #{residual_block_nchw.1} parent=11 // pred_fallthru
        _
      // Predicated region
      $region21: #{residual_block_nchw.1} parent=11 // pred_check
        %p195 = pneg %p127
      $region22: #{residual_block_nchw.1} parent=11 // pred_check_branch
        %197 = sbr.rel (%p195) target = $region24
      $region23: #{residual_block_nchw.1} parent=11 // pred_region
        _
      $region24: #{residual_block_nchw.1} parent=11 // pred_fallthru
        _
      // Predicated region
      $region25: #{residual_block_nchw.1} parent=11 // pred_check
        %p198 = pneg %p148
      $region26: #{residual_block_nchw.1} parent=11 // pred_check_branch
        %200 = sbr.rel (%p198) target = $region28
      $region27: #{residual_block_nchw.1} parent=11 // pred_region
        _
      $region28: #{residual_block_nchw.1} parent=11 // pred_fallthru
        _
    $region12: #{residual_block_nchw.1} parent=5 // pred_fallthru
      _
    %p201 = scmp.lt.s32.totalorder %s12, 2
    // Predicated region
    $region29: #{residual_block_nchw.1} parent=5 // pred_check
      %p202 = pneg %p201
    $region30: #{residual_block_nchw.1} parent=5 // pred_check_branch
      %204 = sbr.rel (%p202) target = $region32
    $region31: #{residual_block_nchw.1} parent=5 // pred_region
      // Predicated region
      $region33: #{residual_block_nchw.1} parent=31 // pred_check
        %p205 = pneg %p32
      $region34: #{residual_block_nchw.1} parent=31 // pred_check_branch
        %207 = sbr.rel (%p205) target = $region36
      $region35: #{residual_block_nchw.1} parent=31 // pred_region
        %p208 = scmp.lt.s32.totalorder %s12, 1
        %s209 = scalar_select %p208, %s12, 1
        %s210 = smul.addr %s209, 216
        %s211 = smul.addr %s210, 4
        %s212 = scalar_lea.vmem %s0, %s211
      $region36: #{residual_block_nchw.1} parent=31 // pred_fallthru
        _
      // Predicated region
      $region37: #{residual_block_nchw.1} parent=31 // pred_check
        %p213 = pneg %p58
      $region38: #{residual_block_nchw.1} parent=31 // pred_check_branch
        %215 = sbr.rel (%p213) target = $region40
      $region39: #{residual_block_nchw.1} parent=31 // pred_region
        %p216 = scmp.lt.s32.totalorder %s12, 1
        %s217 = scalar_select %p216, %s12, 1
        %s218 = smul.addr %s217, 24
        %s219 = smul.addr %s218, 8
        %s220 = scalar_lea.vmem %s1, %s219
      $region40: #{residual_block_nchw.1} parent=31 // pred_fallthru
        _
    $region32: #{residual_block_nchw.1} parent=5 // pred_fallthru
      _
    %p221 = scmp.le.s32.totalorder 1, %s12
    %p222 = scmp.lt.s32.totalorder %s12, 3
    %p223 = pnand %p221, %p222
    %p224 = pneg %p223
    // Predicated region
    $region41: #{residual_block_nchw.1} parent=5 // pred_check
      _
    $region42: #{residual_block_nchw.1} parent=5 // pred_check_branch
      %226 = sbr.rel (%p223) target = $region44
    $region43: #{residual_block_nchw.1} parent=5 // pred_region
      %s227 = ssub.s32 %s12, 1
      %p228 = scmp.lt.s32.totalorder %s17, 1
      %s229 = scalar_select %p228, %s17, 1
      %s230 = smul.addr %s229, 216
      %s231 = smul.addr %s230, 4
      %s232 = scalar_lea.vmem %s0, %s231
      %p233 = pneg %p38
      %p234 = pneg %p35
      %p235 = scmp.lt.s32.totalorder %s17, 1
      %s236 = scalar_select %p235, %s17, 1
      %s237 = smul.addr %s236, 24
      %s238 = smul.addr %s237, 8
      %s239 = scalar_lea.vmem %s1, %s238
      %p240 = pneg %p64
      %p241 = pneg %p61
      %p242 = pneg %p85
      %p243 = pneg %p82
      %p244 = pneg %p106
      %p245 = pneg %p103
      %p246 = pneg %p127
      %p247 = pneg %p124
      %p248 = pneg %p148
      %p249 = pneg %p145
      %p250 = pneg %p174
      %p251 = pneg %p171
      %p252 = scmp.lt.s32.totalorder %s17, 1
      %s253 = scalar_select %p252, %s17, 1
      %s254 = smul.addr %s253, 24
      %s255 = smul.addr %s254, 8
      %s256 = scalar_lea.vmem %s6, %s255
      %p257 = scmp.lt.s32.totalorder %s17, 1
      %s258 = scalar_select %p257, %s17, 1
      %s259 = smul.addr %s258, 216
      %s260 = smul.addr %s259, 4
      %s261 = scalar_lea.vmem %s0, %s260
      %p262 = scmp.lt.s32.totalorder %s17, 1
      %s263 = scalar_select %p262, %s17, 1
      %s264 = smul.addr %s263, 24
      %s265 = smul.addr %s264, 8
      %s266 = scalar_lea.vmem %s1, %s265
      %p267 = scmp.lt.s32.totalorder %s17, 1
      %s268 = scalar_select %p267, %s17, 1
      %s269 = smul.addr %s268, 24
      %s270 = smul.addr %s269, 8
      %s271 = scalar_lea.vmem %s6, %s270
      %v273 = vld [vmem:[%s2] sm:$0xff]
      %v274 = vld [vmem:[%s2 + $0x8] sm:$0xff]
      %v275 = vld [vmem:[%s2 + $0x10] sm:$0xf]
      %v276 = vld [vmem:[%s2 + $0x14] sm:$0xff]
      %v277 = vld [vmem:[%s2 + $0x1c] sm:$0xff]
      %v278 = vld [vmem:[%s2 + $0x24] sm:$0xf]
      %v279 = vld [vmem:[%s2 + $0x28] sm:$0xff]
      %v280 = vld [vmem:[%s2 + $0x30] sm:$0xff]
      %v281 = vld [vmem:[%s2 + $0x38] sm:$0xf]
      %v282 = vld [vmem:[%s2 + $0x3c] sm:$0xff]
      %v283 = vld [vmem:[%s2 + $0x44] sm:$0xff]
      %v284 = vld [vmem:[%s2 + $0x4c] sm:$0xf]
      %v285 = vld [vmem:[%s2 + $0x50] sm:$0xff]
      %v286 = vld [vmem:[%s2 + $0x58] sm:$0xff]
      %v287 = vld [vmem:[%s2 + $0x60] sm:$0xf]
      %v288 = vld [vmem:[%s2 + $0x64] sm:$0xff]
      %v289 = vld [vmem:[%s2 + $0x6c] sm:$0xff]
      %v290 = vld [vmem:[%s2 + $0x74] sm:$0xf]
      %v291 = vld [vmem:[%s2 + $0x78] sm:$0xff]
      %v292 = vld [vmem:[%s2 + $0x80] sm:$0xff]
      %v293 = vld [vmem:[%s2 + $0x88] sm:$0xf]
      %v294 = vld [vmem:[%s2 + $0x8c] sm:$0xff]
      %v295 = vld [vmem:[%s2 + $0x94] sm:$0xff]
      %v296 = vld [vmem:[%s2 + $0x9c] sm:$0xf]
      %v297 = vld [vmem:[%s261] sm:$0xff]
      %v298 = vld [vmem:[%s261 + $0x8] sm:$0xf]
      %v299 = vld [vmem:[%s261 + $0xc] sm:$0xff]
      %v300 = vld [vmem:[%s261 + $0x14] sm:$0xf]
      %v301 = vld [vmem:[%s261 + $0x18] sm:$0xff]
      %v302 = vld [vmem:[%s261 + $0x20] sm:$0xf]
      %v303 = vld [vmem:[%s261 + $0x24] sm:$0xff]
      %v304 = vld [vmem:[%s261 + $0x2c] sm:$0xf]
      %v305 = vld [vmem:[%s261 + $0x30] sm:$0xff]
      %v306 = vld [vmem:[%s261 + $0x38] sm:$0xf]
      %v307 = vld [vmem:[%s261 + $0x3c] sm:$0xff]
      %v308 = vld [vmem:[%s261 + $0x44] sm:$0xf]
      %v309 = vld [vmem:[%s261 + $0x48] sm:$0xff]
      %v310 = vld [vmem:[%s261 + $0x50] sm:$0xf]
      %v311 = vld [vmem:[%s261 + $0x54] sm:$0xff]
      %v312 = vld [vmem:[%s261 + $0x5c] sm:$0xf]
      %v313 = vld [vmem:[%s261 + $0x60] sm:$0xff]
      %v314 = vld [vmem:[%s261 + $0x68] sm:$0xf]
      %v315 = vld [vmem:[%s261 + $0x6c] sm:$0xff]
      %v316 = vld [vmem:[%s261 + $0x74] sm:$0xf]
      %v317 = vld [vmem:[%s261 + $0x78] sm:$0xff]
      %v318 = vld [vmem:[%s261 + $0x80] sm:$0xf]
      %v319 = vld [vmem:[%s261 + $0x84] sm:$0xff]
      %v320 = vld [vmem:[%s261 + $0x8c] sm:$0xf]
      %v321 = vld [vmem:[%s261 + $0x90] sm:$0xff]
      %v322 = vld [vmem:[%s261 + $0x98] sm:$0xf]
      %v323 = vld [vmem:[%s261 + $0x9c] sm:$0xff]
      %v324 = vld [vmem:[%s261 + $0xa4] sm:$0xf]
      %v325 = vld [vmem:[%s261 + $0xa8] sm:$0xff]
      %v326 = vld [vmem:[%s261 + $0xb0] sm:$0xf]
      %v327 = vld [vmem:[%s261 + $0xb4] sm:$0xff]
      %v328 = vld [vmem:[%s261 + $0xbc] sm:$0xf]
      %v329 = vld [vmem:[%s261 + $0xc0] sm:$0xff]
      %v330 = vld [vmem:[%s261 + $0xc8] sm:$0xf]
      %v331 = vld [vmem:[%s261 + $0xcc] sm:$0xff]
      %v332 = vld [vmem:[%s261 + $0xd4] sm:$0xf]
      %v333 = vld [vmem:[%s261 + $0xd8] sm:$0xff]
      %v334 = vld [vmem:[%s261 + $0xe0] sm:$0xf]
      %v335 = vld [vmem:[%s261 + $0xe4] sm:$0xff]
      %v336 = vld [vmem:[%s261 + $0xec] sm:$0xf]
      %v337 = vld [vmem:[%s261 + $0xf0] sm:$0xff]
      %v338 = vld [vmem:[%s261 + $0xf8] sm:$0xf]
      %v339 = vld [vmem:[%s261 + $0xfc] sm:$0xff]
      %v340 = vld [vmem:[%s261 + $0x104] sm:$0xf]
      %v341 = vld [vmem:[%s261 + $0x108] sm:$0xff]
      %v342 = vld [vmem:[%s261 + $0x110] sm:$0xf]
      %v343 = vld [vmem:[%s261 + $0x114] sm:$0xff]
      %v344 = vld [vmem:[%s261 + $0x11c] sm:$0xf]
      %v345 = vld [vmem:[%s261 + $0x120] sm:$0xff]
      %v346 = vld [vmem:[%s261 + $0x128] sm:$0xf]
      %v347 = vld [vmem:[%s261 + $0x12c] sm:$0xff]
      %v348 = vld [vmem:[%s261 + $0x134] sm:$0xf]
      %v349 = vld [vmem:[%s261 + $0x138] sm:$0xff]
      %v350 = vld [vmem:[%s261 + $0x140] sm:$0xf]
      %v351 = vld [vmem:[%s261 + $0x144] sm:$0xff]
      %v352 = vld [vmem:[%s261 + $0x14c] sm:$0xf]
      %v353 = vld [vmem:[%s261 + $0x150] sm:$0xff]
      %v354 = vld [vmem:[%s261 + $0x158] sm:$0xf]
      %v355 = vld [vmem:[%s261 + $0x15c] sm:$0xff]
      %v356 = vld [vmem:[%s261 + $0x164] sm:$0xf]
      %v357 = vld [vmem:[%s261 + $0x168] sm:$0xff]
      %v358 = vld [vmem:[%s261 + $0x170] sm:$0xf]
      %v359 = vld [vmem:[%s261 + $0x174] sm:$0xff]
      %v360 = vld [vmem:[%s261 + $0x17c] sm:$0xf]
      %v361 = vld [vmem:[%s261 + $0x180] sm:$0xff]
      %v362 = vld [vmem:[%s261 + $0x188] sm:$0xf]
      %v363 = vld [vmem:[%s261 + $0x18c] sm:$0xff]
      %v364 = vld [vmem:[%s261 + $0x194] sm:$0xf]
      %v365 = vld [vmem:[%s261 + $0x198] sm:$0xff]
      %v366 = vld [vmem:[%s261 + $0x1a0] sm:$0xf]
      %v367 = vld [vmem:[%s261 + $0x1a4] sm:$0xff]
      %v368 = vld [vmem:[%s261 + $0x1ac] sm:$0xf]
      %v369 = vld [vmem:[%s261 + $0x1b0] sm:$0xff]
      %v370 = vld [vmem:[%s261 + $0x1b8] sm:$0xf]
      %v371 = vld [vmem:[%s261 + $0x1bc] sm:$0xff]
      %v372 = vld [vmem:[%s261 + $0x1c4] sm:$0xf]
      %v373 = vld [vmem:[%s261 + $0x1c8] sm:$0xff]
      %v374 = vld [vmem:[%s261 + $0x1d0] sm:$0xf]
      %v375 = vld [vmem:[%s261 + $0x1d4] sm:$0xff]
      %v376 = vld [vmem:[%s261 + $0x1dc] sm:$0xf]
      %v377 = vld [vmem:[%s261 + $0x1e0] sm:$0xff]
      %v378 = vld [vmem:[%s261 + $0x1e8] sm:$0xf]
      %v379 = vld [vmem:[%s261 + $0x1ec] sm:$0xff]
      %v380 = vld [vmem:[%s261 + $0x1f4] sm:$0xf]
      %v381 = vld [vmem:[%s261 + $0x1f8] sm:$0xff]
      %v382 = vld [vmem:[%s261 + $0x200] sm:$0xf]
      %v383 = vld [vmem:[%s261 + $0x204] sm:$0xff]
      %v384 = vld [vmem:[%s261 + $0x20c] sm:$0xf]
      %v385 = vld [vmem:[%s261 + $0x210] sm:$0xff]
      %v386 = vld [vmem:[%s261 + $0x218] sm:$0xf]
      %v387 = vld [vmem:[%s261 + $0x21c] sm:$0xff]
      %v388 = vld [vmem:[%s261 + $0x224] sm:$0xf]
      %v389 = vld [vmem:[%s261 + $0x228] sm:$0xff]
      %v390 = vld [vmem:[%s261 + $0x230] sm:$0xf]
      %v391 = vld [vmem:[%s261 + $0x234] sm:$0xff]
      %v392 = vld [vmem:[%s261 + $0x23c] sm:$0xf]
      %v393 = vld [vmem:[%s261 + $0x240] sm:$0xff]
      %v394 = vld [vmem:[%s261 + $0x248] sm:$0xf]
      %v395 = vld [vmem:[%s261 + $0x24c] sm:$0xff]
      %v396 = vld [vmem:[%s261 + $0x254] sm:$0xf]
      %v397 = vld [vmem:[%s261 + $0x258] sm:$0xff]
      %v398 = vld [vmem:[%s261 + $0x260] sm:$0xf]
      %v399 = vld [vmem:[%s261 + $0x264] sm:$0xff]
      %v400 = vld [vmem:[%s261 + $0x26c] sm:$0xf]
      %v401 = vld [vmem:[%s261 + $0x270] sm:$0xff]
      %v402 = vld [vmem:[%s261 + $0x278] sm:$0xf]
      %v403 = vld [vmem:[%s261 + $0x27c] sm:$0xff]
      %v404 = vld [vmem:[%s261 + $0x284] sm:$0xf]
      %v405 = vld [vmem:[%s261 + $0x288] sm:$0xff]
      %v406 = vld [vmem:[%s261 + $0x290] sm:$0xf]
      %v407 = vld [vmem:[%s261 + $0x294] sm:$0xff]
      %v408 = vld [vmem:[%s261 + $0x29c] sm:$0xf]
      %v409 = vld [vmem:[%s261 + $0x2a0] sm:$0xff]
      %v410 = vld [vmem:[%s261 + $0x2a8] sm:$0xf]
      %v411 = vld [vmem:[%s261 + $0x2ac] sm:$0xff]
      %v412 = vld [vmem:[%s261 + $0x2b4] sm:$0xf]
      %v413 = vld [vmem:[%s261 + $0x2b8] sm:$0xff]
      %v414 = vld [vmem:[%s261 + $0x2c0] sm:$0xf]
      %v415 = vld [vmem:[%s261 + $0x2c4] sm:$0xff]
      %v416 = vld [vmem:[%s261 + $0x2cc] sm:$0xf]
      %v417 = vld [vmem:[%s261 + $0x2d0] sm:$0xff]
      %v418 = vld [vmem:[%s261 + $0x2d8] sm:$0xf]
      %v419 = vld [vmem:[%s261 + $0x2dc] sm:$0xff]
      %v420 = vld [vmem:[%s261 + $0x2e4] sm:$0xf]
      %v421 = vld [vmem:[%s261 + $0x2e8] sm:$0xff]
      %v422 = vld [vmem:[%s261 + $0x2f0] sm:$0xf]
      %v423 = vld [vmem:[%s261 + $0x2f4] sm:$0xff]
      %v424 = vld [vmem:[%s261 + $0x2fc] sm:$0xf]
      %v425 = vld [vmem:[%s261 + $0x300] sm:$0xff]
      %v426 = vld [vmem:[%s261 + $0x308] sm:$0xf]
      %v427 = vld [vmem:[%s261 + $0x30c] sm:$0xff]
      %v428 = vld [vmem:[%s261 + $0x314] sm:$0xf]
      %v429 = vld [vmem:[%s261 + $0x318] sm:$0xff]
      %v430 = vld [vmem:[%s261 + $0x320] sm:$0xf]
      %v431 = vld [vmem:[%s261 + $0x324] sm:$0xff]
      %v432 = vld [vmem:[%s261 + $0x32c] sm:$0xf]
      %v433 = vld [vmem:[%s261 + $0x330] sm:$0xff]
      %v434 = vld [vmem:[%s261 + $0x338] sm:$0xf]
      %v435 = vld [vmem:[%s261 + $0x33c] sm:$0xff]
      %v436 = vld [vmem:[%s261 + $0x344] sm:$0xf]
      %v437 = vld [vmem:[%s261 + $0x348] sm:$0xff]
      %v438 = vld [vmem:[%s261 + $0x350] sm:$0xf]
      %v439 = vld [vmem:[%s261 + $0x354] sm:$0xff]
      %v440 = vld [vmem:[%s261 + $0x35c] sm:$0xf]
      %v441 = vld [vmem:[%s4] sm:$0xff]
      %v442 = vld [vmem:[%s4 + $0x8] sm:$0xff]
      %v443 = vld [vmem:[%s4 + $0x10] sm:$0xff]
      %v444 = vld [vmem:[%s4 + $0x18] sm:$0xff]
      %v445 = vld [vmem:[%s4 + $0x20] sm:$0xff]
      %v446 = vld [vmem:[%s4 + $0x28] sm:$0xff]
      %v447 = vld [vmem:[%s4 + $0x30] sm:$0xff]
      %v448 = vld [vmem:[%s4 + $0x38] sm:$0xff]
      %450 = vset.pattern.permute.xlu0 0
      %451 = vperm.xlu0 %450, %v441
      %v452 = vpop.permute.xlu0 %451
      %455 = vset.pattern.permute.xlu0 0
      %456 = vperm.xlu0 %455, %v442
      %v457 = vpop.permute.xlu0 %456
      %460 = vset.pattern.permute.xlu0 0
      %461 = vperm.xlu0 %460, %v443
      %v462 = vpop.permute.xlu0 %461
      %465 = vset.pattern.permute.xlu0 0
      %466 = vperm.xlu0 %465, %v444
      %v467 = vpop.permute.xlu0 %466
      %470 = vset.pattern.permute.xlu0 0
      %471 = vperm.xlu0 %470, %v445
      %v472 = vpop.permute.xlu0 %471
      %475 = vset.pattern.permute.xlu0 0
      %476 = vperm.xlu0 %475, %v446
      %v477 = vpop.permute.xlu0 %476
      %480 = vset.pattern.permute.xlu0 0
      %481 = vperm.xlu0 %480, %v447
      %v482 = vpop.permute.xlu0 %481
      %485 = vset.pattern.permute.xlu0 0
      %486 = vperm.xlu0 %485, %v448
      %v487 = vpop.permute.xlu0 %486
      %v513 = vunpack.c.l.b16 %v273
      %v514 = vunpack.c.h.b16 %v273
      %v515 = vunpack.c.l.b16 %v274
      %v516 = vunpack.c.h.b16 %v274
      %v517 = vunpack.c.l.b16 %v275
      %v518 = vunpack.c.l.b16 %v276
      %v519 = vunpack.c.h.b16 %v276
      %v520 = vunpack.c.l.b16 %v277
      %v521 = vunpack.c.h.b16 %v277
      %v522 = vunpack.c.l.b16 %v278
      %v523 = vunpack.c.l.b16 %v279
      %v524 = vunpack.c.h.b16 %v279
      %v525 = vunpack.c.l.b16 %v280
      %v526 = vunpack.c.h.b16 %v280
      %v527 = vunpack.c.l.b16 %v281
      %v528 = vunpack.c.l.b16 %v282
      %v529 = vunpack.c.h.b16 %v282
      %v530 = vunpack.c.l.b16 %v283
      %v531 = vunpack.c.h.b16 %v283
      %v532 = vunpack.c.l.b16 %v284
      %v533 = vunpack.c.l.b16 %v285
      %v534 = vunpack.c.h.b16 %v285
      %v535 = vunpack.c.l.b16 %v286
      %v536 = vunpack.c.h.b16 %v286
      %v537 = vunpack.c.l.b16 %v287
      %v538 = vunpack.c.l.b16 %v288
      %v539 = vunpack.c.h.b16 %v288
      %v540 = vunpack.c.l.b16 %v289
      %v541 = vunpack.c.h.b16 %v289
      %v542 = vunpack.c.l.b16 %v290
      %v543 = vunpack.c.l.b16 %v291
      %v544 = vunpack.c.h.b16 %v291
      %v545 = vunpack.c.l.b16 %v292
      %v546 = vunpack.c.h.b16 %v292
      %v547 = vunpack.c.l.b16 %v293
      %v548 = vunpack.c.l.b16 %v294
      %v549 = vunpack.c.h.b16 %v294
      %v550 = vunpack.c.l.b16 %v295
      %v551 = vunpack.c.h.b16 %v295
      %v552 = vunpack.c.l.b16 %v296
      %v553 = vpack.c.b16 %v518, %v513
      %v554 = vpack.c.b16 %v519, %v514
      %v555 = vpack.c.b16 %v520, %v515
      %v556 = vpack.c.b16 %v521, %v516
      %v557 = vpack.c.b16 %v522, %v517
      %v558 = vpack.c.b16 %v528, %v523
      %v559 = vpack.c.b16 %v529, %v524
      %v560 = vpack.c.b16 %v530, %v525
      %v561 = vpack.c.b16 %v531, %v526
      %v562 = vpack.c.b16 %v532, %v527
      %v563 = vpack.c.b16 %v538, %v533
      %v564 = vpack.c.b16 %v539, %v534
      %v565 = vpack.c.b16 %v540, %v535
      %v566 = vpack.c.b16 %v541, %v536
      %v567 = vpack.c.b16 %v542, %v537
      %v568 = vpack.c.b16 %v548, %v543
      %v569 = vpack.c.b16 %v549, %v544
      %v570 = vpack.c.b16 %v550, %v545
      %v571 = vpack.c.b16 %v551, %v546
      %v572 = vpack.c.b16 %v552, %v547
      %v733 = vunpack.c.l.b16 %v297
      %v734 = vunpack.c.h.b16 %v297
      %v735 = vunpack.c.l.b16 %v298
      %v736 = vunpack.c.l.b16 %v299
      %v737 = vunpack.c.h.b16 %v299
      %v738 = vunpack.c.l.b16 %v300
      %v739 = vunpack.c.l.b16 %v301
      %v740 = vunpack.c.h.b16 %v301
      %v741 = vunpack.c.l.b16 %v302
      %v742 = vunpack.c.l.b16 %v303
      %v743 = vunpack.c.h.b16 %v303
      %v744 = vunpack.c.l.b16 %v304
      %v745 = vunpack.c.l.b16 %v305
      %v746 = vunpack.c.h.b16 %v305
      %v747 = vunpack.c.l.b16 %v306
      %v748 = vunpack.c.l.b16 %v307
      %v749 = vunpack.c.h.b16 %v307
      %v750 = vunpack.c.l.b16 %v308
      %v751 = vunpack.c.l.b16 %v309
      %v752 = vunpack.c.h.b16 %v309
      %v753 = vunpack.c.l.b16 %v310
      %v754 = vunpack.c.l.b16 %v311
      %v755 = vunpack.c.h.b16 %v311
      %v756 = vunpack.c.l.b16 %v312
      %v757 = vunpack.c.l.b16 %v313
      %v758 = vunpack.c.h.b16 %v313
      %v759 = vunpack.c.l.b16 %v314
      %v760 = vunpack.c.l.b16 %v315
      %v761 = vunpack.c.h.b16 %v315
      %v762 = vunpack.c.l.b16 %v316
      %v763 = vunpack.c.l.b16 %v317
      %v764 = vunpack.c.h.b16 %v317
      %v765 = vunpack.c.l.b16 %v318
      %v766 = vunpack.c.l.b16 %v319
      %v767 = vunpack.c.h.b16 %v319
      %v768 = vunpack.c.l.b16 %v320
      %v769 = vunpack.c.l.b16 %v321
      %v770 = vunpack.c.h.b16 %v321
      %v771 = vunpack.c.l.b16 %v322
      %v772 = vunpack.c.l.b16 %v323
      %v773 = vunpack.c.h.b16 %v323
      %v774 = vunpack.c.l.b16 %v324
      %v775 = vunpack.c.l.b16 %v325
      %v776 = vunpack.c.h.b16 %v325
      %v777 = vunpack.c.l.b16 %v326
      %v778 = vunpack.c.l.b16 %v327
      %v779 = vunpack.c.h.b16 %v327
      %v780 = vunpack.c.l.b16 %v328
      %v781 = vunpack.c.l.b16 %v329
      %v782 = vunpack.c.h.b16 %v329
      %v783 = vunpack.c.l.b16 %v330
      %v784 = vunpack.c.l.b16 %v331
      %v785 = vunpack.c.h.b16 %v331
      %v786 = vunpack.c.l.b16 %v332
      %v787 = vunpack.c.l.b16 %v333
      %v788 = vunpack.c.h.b16 %v333
      %v789 = vunpack.c.l.b16 %v334
      %v790 = vunpack.c.l.b16 %v335
      %v791 = vunpack.c.h.b16 %v335
      %v792 = vunpack.c.l.b16 %v336
      %v793 = vunpack.c.l.b16 %v337
      %v794 = vunpack.c.h.b16 %v337
      %v795 = vunpack.c.l.b16 %v338
      %v796 = vunpack.c.l.b16 %v339
      %v797 = vunpack.c.h.b16 %v339
      %v798 = vunpack.c.l.b16 %v340
      %v799 = vunpack.c.l.b16 %v341
      %v800 = vunpack.c.h.b16 %v341
      %v801 = vunpack.c.l.b16 %v342
      %v802 = vunpack.c.l.b16 %v343
      %v803 = vunpack.c.h.b16 %v343
      %v804 = vunpack.c.l.b16 %v344
      %v805 = vunpack.c.l.b16 %v345
      %v806 = vunpack.c.h.b16 %v345
      %v807 = vunpack.c.l.b16 %v346
      %v808 = vunpack.c.l.b16 %v347
      %v809 = vunpack.c.h.b16 %v347
      %v810 = vunpack.c.l.b16 %v348
      %v811 = vunpack.c.l.b16 %v349
      %v812 = vunpack.c.h.b16 %v349
      %v813 = vunpack.c.l.b16 %v350
      %v814 = vunpack.c.l.b16 %v351
      %v815 = vunpack.c.h.b16 %v351
      %v816 = vunpack.c.l.b16 %v352
      %v817 = vunpack.c.l.b16 %v353
      %v818 = vunpack.c.h.b16 %v353
      %v819 = vunpack.c.l.b16 %v354
      %v820 = vunpack.c.l.b16 %v355
      %v821 = vunpack.c.h.b16 %v355
      %v822 = vunpack.c.l.b16 %v356
      %v823 = vunpack.c.l.b16 %v357
      %v824 = vunpack.c.h.b16 %v357
      %v825 = vunpack.c.l.b16 %v358
      %v826 = vunpack.c.l.b16 %v359
      %v827 = vunpack.c.h.b16 %v359
      %v828 = vunpack.c.l.b16 %v360
      %v829 = vunpack.c.l.b16 %v361
      %v830 = vunpack.c.h.b16 %v361
      %v831 = vunpack.c.l.b16 %v362
      %v832 = vunpack.c.l.b16 %v363
      %v833 = vunpack.c.h.b16 %v363
      %v834 = vunpack.c.l.b16 %v364
      %v835 = vunpack.c.l.b16 %v365
      %v836 = vunpack.c.h.b16 %v365
      %v837 = vunpack.c.l.b16 %v366
      %v838 = vunpack.c.l.b16 %v367
      %v839 = vunpack.c.h.b16 %v367
      %v840 = vunpack.c.l.b16 %v368
      %v841 = vunpack.c.l.b16 %v369
      %v842 = vunpack.c.h.b16 %v369
      %v843 = vunpack.c.l.b16 %v370
      %v844 = vunpack.c.l.b16 %v371
      %v845 = vunpack.c.h.b16 %v371
      %v846 = vunpack.c.l.b16 %v372
      %v847 = vunpack.c.l.b16 %v373
      %v848 = vunpack.c.h.b16 %v373
      %v849 = vunpack.c.l.b16 %v374
      %v850 = vunpack.c.l.b16 %v375
      %v851 = vunpack.c.h.b16 %v375
      %v852 = vunpack.c.l.b16 %v376
      %v853 = vunpack.c.l.b16 %v377
      %v854 = vunpack.c.h.b16 %v377
      %v855 = vunpack.c.l.b16 %v378
      %v856 = vunpack.c.l.b16 %v379
      %v857 = vunpack.c.h.b16 %v379
      %v858 = vunpack.c.l.b16 %v380
      %v859 = vunpack.c.l.b16 %v381
      %v860 = vunpack.c.h.b16 %v381
      %v861 = vunpack.c.l.b16 %v382
      %v862 = vunpack.c.l.b16 %v383
      %v863 = vunpack.c.h.b16 %v383
      %v864 = vunpack.c.l.b16 %v384
      %v865 = vunpack.c.l.b16 %v385
      %v866 = vunpack.c.h.b16 %v385
      %v867 = vunpack.c.l.b16 %v386
      %v868 = vunpack.c.l.b16 %v387
      %v869 = vunpack.c.h.b16 %v387
      %v870 = vunpack.c.l.b16 %v388
      %v871 = vunpack.c.l.b16 %v389
      %v872 = vunpack.c.h.b16 %v389
      %v873 = vunpack.c.l.b16 %v390
      %v874 = vunpack.c.l.b16 %v391
      %v875 = vunpack.c.h.b16 %v391
      %v876 = vunpack.c.l.b16 %v392
      %v877 = vunpack.c.l.b16 %v393
      %v878 = vunpack.c.h.b16 %v393
      %v879 = vunpack.c.l.b16 %v394
      %v880 = vunpack.c.l.b16 %v395
      %v881 = vunpack.c.h.b16 %v395
      %v882 = vunpack.c.l.b16 %v396
      %v883 = vunpack.c.l.b16 %v397
      %v884 = vunpack.c.h.b16 %v397
      %v885 = vunpack.c.l.b16 %v398
      %v886 = vunpack.c.l.b16 %v399
      %v887 = vunpack.c.h.b16 %v399
      %v888 = vunpack.c.l.b16 %v400
      %v889 = vunpack.c.l.b16 %v401
      %v890 = vunpack.c.h.b16 %v401
      %v891 = vunpack.c.l.b16 %v402
      %v892 = vunpack.c.l.b16 %v403
      %v893 = vunpack.c.h.b16 %v403
      %v894 = vunpack.c.l.b16 %v404
      %v895 = vunpack.c.l.b16 %v405
      %v896 = vunpack.c.h.b16 %v405
      %v897 = vunpack.c.l.b16 %v406
      %v898 = vunpack.c.l.b16 %v407
      %v899 = vunpack.c.h.b16 %v407
      %v900 = vunpack.c.l.b16 %v408
      %v901 = vunpack.c.l.b16 %v409
      %v902 = vunpack.c.h.b16 %v409
      %v903 = vunpack.c.l.b16 %v410
      %v904 = vunpack.c.l.b16 %v411
      %v905 = vunpack.c.h.b16 %v411
      %v906 = vunpack.c.l.b16 %v412
      %v907 = vunpack.c.l.b16 %v413
      %v908 = vunpack.c.h.b16 %v413
      %v909 = vunpack.c.l.b16 %v414
      %v910 = vunpack.c.l.b16 %v415
      %v911 = vunpack.c.h.b16 %v415
      %v912 = vunpack.c.l.b16 %v416
      %v913 = vunpack.c.l.b16 %v417
      %v914 = vunpack.c.h.b16 %v417
      %v915 = vunpack.c.l.b16 %v418
      %v916 = vunpack.c.l.b16 %v419
      %v917 = vunpack.c.h.b16 %v419
      %v918 = vunpack.c.l.b16 %v420
      %v919 = vunpack.c.l.b16 %v421
      %v920 = vunpack.c.h.b16 %v421
      %v921 = vunpack.c.l.b16 %v422
      %v922 = vunpack.c.l.b16 %v423
      %v923 = vunpack.c.h.b16 %v423
      %v924 = vunpack.c.l.b16 %v424
      %v925 = vunpack.c.l.b16 %v425
      %v926 = vunpack.c.h.b16 %v425
      %v927 = vunpack.c.l.b16 %v426
      %v928 = vunpack.c.l.b16 %v427
      %v929 = vunpack.c.h.b16 %v427
      %v930 = vunpack.c.l.b16 %v428
      %v931 = vunpack.c.l.b16 %v429
      %v932 = vunpack.c.h.b16 %v429
      %v933 = vunpack.c.l.b16 %v430
      %v934 = vunpack.c.l.b16 %v431
      %v935 = vunpack.c.h.b16 %v431
      %v936 = vunpack.c.l.b16 %v432
      %v937 = vunpack.c.l.b16 %v433
      %v938 = vunpack.c.h.b16 %v433
      %v939 = vunpack.c.l.b16 %v434
      %v940 = vunpack.c.l.b16 %v435
      %v941 = vunpack.c.h.b16 %v435
      %v942 = vunpack.c.l.b16 %v436
      %v943 = vunpack.c.l.b16 %v437
      %v944 = vunpack.c.h.b16 %v437
      %v945 = vunpack.c.l.b16 %v438
      %v946 = vunpack.c.l.b16 %v439
      %v947 = vunpack.c.h.b16 %v439
      %v948 = vunpack.c.l.b16 %v440
      %v949 = vpack.c.b16 %v736, %v733
      %v950 = vpack.c.b16 %v737, %v734
      %v951 = vpack.c.b16 %v738, %v735
      %v952 = vpack.c.b16 %v742, %v739
      %v953 = vpack.c.b16 %v743, %v740
      %v954 = vpack.c.b16 %v744, %v741
      %v955 = vpack.c.b16 %v748, %v745
      %v956 = vpack.c.b16 %v749, %v746
      %v957 = vpack.c.b16 %v750, %v747
      %v958 = vpack.c.b16 %v754, %v751
      %v959 = vpack.c.b16 %v755, %v752
      %v960 = vpack.c.b16 %v756, %v753
      %v961 = vpack.c.b16 %v760, %v757
      %v962 = vpack.c.b16 %v761, %v758
      %v963 = vpack.c.b16 %v762, %v759
      %v964 = vpack.c.b16 %v766, %v763
      %v965 = vpack.c.b16 %v767, %v764
      %v966 = vpack.c.b16 %v768, %v765
      %v967 = vpack.c.b16 %v772, %v769
      %v968 = vpack.c.b16 %v773, %v770
      %v969 = vpack.c.b16 %v774, %v771
      %v970 = vpack.c.b16 %v778, %v775
      %v971 = vpack.c.b16 %v779, %v776
      %v972 = vpack.c.b16 %v780, %v777
      %v973 = vpack.c.b16 %v784, %v781
      %v974 = vpack.c.b16 %v785, %v782
      %v975 = vpack.c.b16 %v786, %v783
      %v976 = vpack.c.b16 %v790, %v787
      %v977 = vpack.c.b16 %v791, %v788
      %v978 = vpack.c.b16 %v792, %v789
      %v979 = vpack.c.b16 %v796, %v793
      %v980 = vpack.c.b16 %v797, %v794
      %v981 = vpack.c.b16 %v798, %v795
      %v982 = vpack.c.b16 %v802, %v799
      %v983 = vpack.c.b16 %v803, %v800
      %v984 = vpack.c.b16 %v804, %v801
      %v985 = vpack.c.b16 %v808, %v805
      %v986 = vpack.c.b16 %v809, %v806
      %v987 = vpack.c.b16 %v810, %v807
      %v988 = vpack.c.b16 %v814, %v811
      %v989 = vpack.c.b16 %v815, %v812
      %v990 = vpack.c.b16 %v816, %v813
      %v991 = vpack.c.b16 %v820, %v817
      %v992 = vpack.c.b16 %v821, %v818
      %v993 = vpack.c.b16 %v822, %v819
      %v994 = vpack.c.b16 %v826, %v823
      %v995 = vpack.c.b16 %v827, %v824
      %v996 = vpack.c.b16 %v828, %v825
      %v997 = vpack.c.b16 %v832, %v829
      %v998 = vpack.c.b16 %v833, %v830
      %v999 = vpack.c.b16 %v834, %v831
      %v1000 = vpack.c.b16 %v838, %v835
      %v1001 = vpack.c.b16 %v839, %v836
      %v1002 = vpack.c.b16 %v840, %v837
      %v1003 = vpack.c.b16 %v844, %v841
      %v1004 = vpack.c.b16 %v845, %v842
      %v1005 = vpack.c.b16 %v846, %v843
      %v1006 = vpack.c.b16 %v850, %v847
      %v1007 = vpack.c.b16 %v851, %v848
      %v1008 = vpack.c.b16 %v852, %v849
      %v1009 = vpack.c.b16 %v856, %v853
      %v1010 = vpack.c.b16 %v857, %v854
      %v1011 = vpack.c.b16 %v858, %v855
      %v1012 = vpack.c.b16 %v862, %v859
      %v1013 = vpack.c.b16 %v863, %v860
      %v1014 = vpack.c.b16 %v864, %v861
      %v1015 = vpack.c.b16 %v868, %v865
      %v1016 = vpack.c.b16 %v869, %v866
      %v1017 = vpack.c.b16 %v870, %v867
      %v1018 = vpack.c.b16 %v874, %v871
      %v1019 = vpack.c.b16 %v875, %v872
      %v1020 = vpack.c.b16 %v876, %v873
      %v1021 = vpack.c.b16 %v880, %v877
      %v1022 = vpack.c.b16 %v881, %v878
      %v1023 = vpack.c.b16 %v882, %v879
      %v1024 = vpack.c.b16 %v886, %v883
      %v1025 = vpack.c.b16 %v887, %v884
      %v1026 = vpack.c.b16 %v888, %v885
      %v1027 = vpack.c.b16 %v892, %v889
      %v1028 = vpack.c.b16 %v893, %v890
      %v1029 = vpack.c.b16 %v894, %v891
      %v1030 = vpack.c.b16 %v898, %v895
      %v1031 = vpack.c.b16 %v899, %v896
      %v1032 = vpack.c.b16 %v900, %v897
      %v1033 = vpack.c.b16 %v904, %v901
      %v1034 = vpack.c.b16 %v905, %v902
      %v1035 = vpack.c.b16 %v906, %v903
      %v1036 = vpack.c.b16 %v910, %v907
      %v1037 = vpack.c.b16 %v911, %v908
      %v1038 = vpack.c.b16 %v912, %v909
      %v1039 = vpack.c.b16 %v916, %v913
      %v1040 = vpack.c.b16 %v917, %v914
      %v1041 = vpack.c.b16 %v918, %v915
      %v1042 = vpack.c.b16 %v922, %v919
      %v1043 = vpack.c.b16 %v923, %v920
      %v1044 = vpack.c.b16 %v924, %v921
      %v1045 = vpack.c.b16 %v928, %v925
      %v1046 = vpack.c.b16 %v929, %v926
      %v1047 = vpack.c.b16 %v930, %v927
      %v1048 = vpack.c.b16 %v934, %v931
      %v1049 = vpack.c.b16 %v935, %v932
      %v1050 = vpack.c.b16 %v936, %v933
      %v1051 = vpack.c.b16 %v940, %v937
      %v1052 = vpack.c.b16 %v941, %v938
      %v1053 = vpack.c.b16 %v942, %v939
      %v1054 = vpack.c.b16 %v946, %v943
      %v1055 = vpack.c.b16 %v947, %v944
      %v1056 = vpack.c.b16 %v948, %v945
      %vm1165 = vcmask 523264
      %v1167 = vsel %vm1165, %v557, 0
      %v1170 = vsel %vm1165, %v562, 0
      %v1173 = vsel %vm1165, %v567, 0
      %v1176 = vsel %vm1165, %v572, 0
      %1178 = vmatpush.bf16.msra.mxu0 %v970
      %1179 = vmatpush.bf16.msra.mxu0 %v967
      %1180 = vmatpush.bf16.msra.mxu0 %v964
      %1181 = vmatpush.bf16.msra.mxu0 %v961
      %1182 = vmatpush.bf16.msra.mxu0 %v958
      %1183 = vmatpush.bf16.msra.mxu0 %v955
      %1184 = vmatpush.bf16.msra.mxu0 %v952
      %1185 = vmatpush.bf16.msra.mxu0 %v949
      %1186 = vmatmul.bf16.gmra.mxu0 %v553
      %v1187 = vpop.f32.mrf.mxu0
      %v1188 = vadd.f32 %v452, %v1187
      %v1189 = vpop.f32.mrf.mxu0
      %v1190 = vadd.f32 %v457, %v1189
      %1191 = vmatmul.bf16.gmra.mxu0 %v558
      %v1192 = vpop.f32.mrf.mxu0
      %v1193 = vadd.f32 %v462, %v1192
      %v1194 = vpop.f32.mrf.mxu0
      %v1195 = vadd.f32 %v467, %v1194
      %1196 = vmatmul.bf16.gmra.mxu0 %v563
      %v1197 = vpop.f32.mrf.mxu0
      %v1198 = vadd.f32 %v472, %v1197
      %v1199 = vpop.f32.mrf.mxu0
      %v1200 = vadd.f32 %v477, %v1199
      %1201 = vmatmul.bf16.gmra.mxu0 %v568
      %v1202 = vpop.f32.mrf.mxu0
      %v1203 = vadd.f32 %v482, %v1202
      %v1204 = vpop.f32.mrf.mxu0
      %v1205 = vadd.f32 %v487, %v1204
      %1206 = vdwg.mxu0
      %1207 = vmatpush.bf16.msra.mxu0 %v994
      %1208 = vmatpush.bf16.msra.mxu0 %v991
      %1209 = vmatpush.bf16.msra.mxu0 %v988
      %1210 = vmatpush.bf16.msra.mxu0 %v985
      %1211 = vmatpush.bf16.msra.mxu0 %v982
      %1212 = vmatpush.bf16.msra.mxu0 %v979
      %1213 = vmatpush.bf16.msra.mxu0 %v976
      %1214 = vmatpush.bf16.msra.mxu0 %v973
      %1215 = vmatmul.bf16.gmra.mxu0 %v554
      %v1216 = vpop.f32.mrf.mxu0
      %v1217 = vadd.f32 %v1188, %v1216
      %v1218 = vpop.f32.mrf.mxu0
      %v1219 = vadd.f32 %v1190, %v1218
      %1220 = vmatmul.bf16.gmra.mxu0 %v559
      %v1221 = vpop.f32.mrf.mxu0
      %v1222 = vadd.f32 %v1193, %v1221
      %v1223 = vpop.f32.mrf.mxu0
      %v1224 = vadd.f32 %v1195, %v1223
      %1225 = vmatmul.bf16.gmra.mxu0 %v564
      %v1226 = vpop.f32.mrf.mxu0
      %v1227 = vadd.f32 %v1198, %v1226
      %v1228 = vpop.f32.mrf.mxu0
      %v1229 = vadd.f32 %v1200, %v1228
      %1230 = vmatmul.bf16.gmra.mxu0 %v569
      %v1231 = vpop.f32.mrf.mxu0
      %v1232 = vadd.f32 %v1203, %v1231
      %v1233 = vpop.f32.mrf.mxu0
      %v1234 = vadd.f32 %v1205, %v1233
      %1235 = vdwg.mxu0
      %1236 = vmatpush.bf16.msra.mxu0 %v1018
      %1237 = vmatpush.bf16.msra.mxu0 %v1015
      %1238 = vmatpush.bf16.msra.mxu0 %v1012
      %1239 = vmatpush.bf16.msra.mxu0 %v1009
      %1240 = vmatpush.bf16.msra.mxu0 %v1006
      %1241 = vmatpush.bf16.msra.mxu0 %v1003
      %1242 = vmatpush.bf16.msra.mxu0 %v1000
      %1243 = vmatpush.bf16.msra.mxu0 %v997
      %1244 = vmatmul.bf16.gmra.mxu0 %v555
      %v1245 = vpop.f32.mrf.mxu0
      %v1246 = vadd.f32 %v1217, %v1245
      %v1247 = vpop.f32.mrf.mxu0
      %v1248 = vadd.f32 %v1219, %v1247
      %1249 = vmatmul.bf16.gmra.mxu0 %v560
      %v1250 = vpop.f32.mrf.mxu0
      %v1251 = vadd.f32 %v1222, %v1250
      %v1252 = vpop.f32.mrf.mxu0
      %v1253 = vadd.f32 %v1224, %v1252
      %1254 = vmatmul.bf16.gmra.mxu0 %v565
      %v1255 = vpop.f32.mrf.mxu0
      %v1256 = vadd.f32 %v1227, %v1255
      %v1257 = vpop.f32.mrf.mxu0
      %v1258 = vadd.f32 %v1229, %v1257
      %1259 = vmatmul.bf16.gmra.mxu0 %v570
      %v1260 = vpop.f32.mrf.mxu0
      %v1261 = vadd.f32 %v1232, %v1260
      %v1262 = vpop.f32.mrf.mxu0
      %v1263 = vadd.f32 %v1234, %v1262
      %1264 = vdwg.mxu0
      %1265 = vmatpush.bf16.msra.mxu0 %v1042
      %1266 = vmatpush.bf16.msra.mxu0 %v1039
      %1267 = vmatpush.bf16.msra.mxu0 %v1036
      %1268 = vmatpush.bf16.msra.mxu0 %v1033
      %1269 = vmatpush.bf16.msra.mxu0 %v1030
      %1270 = vmatpush.bf16.msra.mxu0 %v1027
      %1271 = vmatpush.bf16.msra.mxu0 %v1024
      %1272 = vmatpush.bf16.msra.mxu0 %v1021
      %1273 = vmatmul.bf16.gmra.mxu0 %v556
      %v1274 = vpop.f32.mrf.mxu0
      %v1275 = vadd.f32 %v1246, %v1274
      %v1276 = vpop.f32.mrf.mxu0
      %v1277 = vadd.f32 %v1248, %v1276
      %1278 = vmatmul.bf16.gmra.mxu0 %v561
      %v1279 = vpop.f32.mrf.mxu0
      %v1280 = vadd.f32 %v1251, %v1279
      %v1281 = vpop.f32.mrf.mxu0
      %v1282 = vadd.f32 %v1253, %v1281
      %1283 = vmatmul.bf16.gmra.mxu0 %v566
      %v1284 = vpop.f32.mrf.mxu0
      %v1285 = vadd.f32 %v1256, %v1284
      %v1286 = vpop.f32.mrf.mxu0
      %v1287 = vadd.f32 %v1258, %v1286
      %1288 = vmatmul.bf16.gmra.mxu0 %v571
      %v1289 = vpop.f32.mrf.mxu0
      %v1290 = vadd.f32 %v1261, %v1289
      %v1291 = vpop.f32.mrf.mxu0
      %v1292 = vadd.f32 %v1263, %v1291
      %1293 = vdwg.mxu0
      %1294 = vmatpush.bf16.msra.mxu0 0
      %1295 = vmatpush.bf16.msra.mxu0 0
      %1296 = vmatpush.bf16.msra.mxu0 0
      %1297 = vmatpush.bf16.msra.mxu0 0
      %1298 = vmatpush.bf16.msra.mxu0 %v1054
      %1299 = vmatpush.bf16.msra.mxu0 %v1051
      %1300 = vmatpush.bf16.msra.mxu0 %v1048
      %1301 = vmatpush.bf16.msra.mxu0 %v1045
      %1302 = vmatmul.bf16.gmra.mxu0 %v1167
      %v1303 = vpop.f32.mrf.mxu0
      %v1304 = vadd.f32 %v1275, %v1303
      %v1305 = vpop.f32.mrf.mxu0
      %v1306 = vadd.f32 %v1277, %v1305
      %1307 = vmatmul.bf16.gmra.mxu0 %v1170
      %v1308 = vpop.f32.mrf.mxu0
      %v1309 = vadd.f32 %v1280, %v1308
      %v1310 = vpop.f32.mrf.mxu0
      %v1311 = vadd.f32 %v1282, %v1310
      %1312 = vmatmul.bf16.gmra.mxu0 %v1173
      %v1313 = vpop.f32.mrf.mxu0
      %v1314 = vadd.f32 %v1285, %v1313
      %v1315 = vpop.f32.mrf.mxu0
      %v1316 = vadd.f32 %v1287, %v1315
      %1317 = vmatmul.bf16.gmra.mxu0 %v1176
      %v1318 = vpop.f32.mrf.mxu0
      %v1319 = vadd.f32 %v1290, %v1318
      %v1320 = vpop.f32.mrf.mxu0
      %v1321 = vadd.f32 %v1292, %v1320
      %1322 = vdwg.mxu0
      %1323 = vmatpush.bf16.msra.mxu0 %v971
      %1324 = vmatpush.bf16.msra.mxu0 %v968
      %1325 = vmatpush.bf16.msra.mxu0 %v965
      %1326 = vmatpush.bf16.msra.mxu0 %v962
      %1327 = vmatpush.bf16.msra.mxu0 %v959
      %1328 = vmatpush.bf16.msra.mxu0 %v956
      %1329 = vmatpush.bf16.msra.mxu0 %v953
      %1330 = vmatpush.bf16.msra.mxu0 %v950
      %1331 = vmatmul.bf16.gmra.mxu0 %v553
      %v1332 = vpop.f32.mrf.mxu0
      %v1333 = vadd.f32 %v452, %v1332
      %v1334 = vpop.f32.mrf.mxu0
      %v1335 = vadd.f32 %v457, %v1334
      %1336 = vmatmul.bf16.gmra.mxu0 %v558
      %v1337 = vpop.f32.mrf.mxu0
      %v1338 = vadd.f32 %v462, %v1337
      %v1339 = vpop.f32.mrf.mxu0
      %v1340 = vadd.f32 %v467, %v1339
      %1341 = vmatmul.bf16.gmra.mxu0 %v563
      %v1342 = vpop.f32.mrf.mxu0
      %v1343 = vadd.f32 %v472, %v1342
      %v1344 = vpop.f32.mrf.mxu0
      %v1345 = vadd.f32 %v477, %v1344
      %1346 = vmatmul.bf16.gmra.mxu0 %v568
      %v1347 = vpop.f32.mrf.mxu0
      %v1348 = vadd.f32 %v482, %v1347
      %v1349 = vpop.f32.mrf.mxu0
      %v1350 = vadd.f32 %v487, %v1349
      %1351 = vdwg.mxu0
      %1352 = vmatpush.bf16.msra.mxu0 %v995
      %1353 = vmatpush.bf16.msra.mxu0 %v992
      %1354 = vmatpush.bf16.msra.mxu0 %v989
      %1355 = vmatpush.bf16.msra.mxu0 %v986
      %1356 = vmatpush.bf16.msra.mxu0 %v983
      %1357 = vmatpush.bf16.msra.mxu0 %v980
      %1358 = vmatpush.bf16.msra.mxu0 %v977
      %1359 = vmatpush.bf16.msra.mxu0 %v974
      %1360 = vmatmul.bf16.gmra.mxu0 %v554
      %v1361 = vpop.f32.mrf.mxu0
      %v1362 = vadd.f32 %v1333, %v1361
      %v1363 = vpop.f32.mrf.mxu0
      %v1364 = vadd.f32 %v1335, %v1363
      %1365 = vmatmul.bf16.gmra.mxu0 %v559
      %v1366 = vpop.f32.mrf.mxu0
      %v1367 = vadd.f32 %v1338, %v1366
      %v1368 = vpop.f32.mrf.mxu0
      %v1369 = vadd.f32 %v1340, %v1368
      %1370 = vmatmul.bf16.gmra.mxu0 %v564
      %v1371 = vpop.f32.mrf.mxu0
      %v1372 = vadd.f32 %v1343, %v1371
      %v1373 = vpop.f32.mrf.mxu0
      %v1374 = vadd.f32 %v1345, %v1373
      %1375 = vmatmul.bf16.gmra.mxu0 %v569
      %v1376 = vpop.f32.mrf.mxu0
      %v1377 = vadd.f32 %v1348, %v1376
      %v1378 = vpop.f32.mrf.mxu0
      %v1379 = vadd.f32 %v1350, %v1378
      %1380 = vdwg.mxu0
      %1381 = vmatpush.bf16.msra.mxu0 %v1019
      %1382 = vmatpush.bf16.msra.mxu0 %v1016
      %1383 = vmatpush.bf16.msra.mxu0 %v1013
      %1384 = vmatpush.bf16.msra.mxu0 %v1010
      %1385 = vmatpush.bf16.msra.mxu0 %v1007
      %1386 = vmatpush.bf16.msra.mxu0 %v1004
      %1387 = vmatpush.bf16.msra.mxu0 %v1001
      %1388 = vmatpush.bf16.msra.mxu0 %v998
      %1389 = vmatmul.bf16.gmra.mxu0 %v555
      %v1390 = vpop.f32.mrf.mxu0
      %v1391 = vadd.f32 %v1362, %v1390
      %v1392 = vpop.f32.mrf.mxu0
      %v1393 = vadd.f32 %v1364, %v1392
      %1394 = vmatmul.bf16.gmra.mxu0 %v560
      %v1395 = vpop.f32.mrf.mxu0
      %v1396 = vadd.f32 %v1367, %v1395
      %v1397 = vpop.f32.mrf.mxu0
      %v1398 = vadd.f32 %v1369, %v1397
      %1399 = vmatmul.bf16.gmra.mxu0 %v565
      %v1400 = vpop.f32.mrf.mxu0
      %v1401 = vadd.f32 %v1372, %v1400
      %v1402 = vpop.f32.mrf.mxu0
      %v1403 = vadd.f32 %v1374, %v1402
      %1404 = vmatmul.bf16.gmra.mxu0 %v570
      %v1405 = vpop.f32.mrf.mxu0
      %v1406 = vadd.f32 %v1377, %v1405
      %v1407 = vpop.f32.mrf.mxu0
      %v1408 = vadd.f32 %v1379, %v1407
      %1409 = vdwg.mxu0
      %1410 = vmatpush.bf16.msra.mxu0 %v1043
      %1411 = vmatpush.bf16.msra.mxu0 %v1040
      %1412 = vmatpush.bf16.msra.mxu0 %v1037
      %1413 = vmatpush.bf16.msra.mxu0 %v1034
      %1414 = vmatpush.bf16.msra.mxu0 %v1031
      %1415 = vmatpush.bf16.msra.mxu0 %v1028
      %1416 = vmatpush.bf16.msra.mxu0 %v1025
      %1417 = vmatpush.bf16.msra.mxu0 %v1022
      %1418 = vmatmul.bf16.gmra.mxu0 %v556
      %v1419 = vpop.f32.mrf.mxu0
      %v1420 = vadd.f32 %v1391, %v1419
      %v1421 = vpop.f32.mrf.mxu0
      %v1422 = vadd.f32 %v1393, %v1421
      %1423 = vmatmul.bf16.gmra.mxu0 %v561
      %v1424 = vpop.f32.mrf.mxu0
      %v1425 = vadd.f32 %v1396, %v1424
      %v1426 = vpop.f32.mrf.mxu0
      %v1427 = vadd.f32 %v1398, %v1426
      %1428 = vmatmul.bf16.gmra.mxu0 %v566
      %v1429 = vpop.f32.mrf.mxu0
      %v1430 = vadd.f32 %v1401, %v1429
      %v1431 = vpop.f32.mrf.mxu0
      %v1432 = vadd.f32 %v1403, %v1431
      %1433 = vmatmul.bf16.gmra.mxu0 %v571
      %v1434 = vpop.f32.mrf.mxu0
      %v1435 = vadd.f32 %v1406, %v1434
      %v1436 = vpop.f32.mrf.mxu0
      %v1437 = vadd.f32 %v1408, %v1436
      %1438 = vdwg.mxu0
      %1439 = vmatpush.bf16.msra.mxu0 0
      %1440 = vmatpush.bf16.msra.mxu0 0
      %1441 = vmatpush.bf16.msra.mxu0 0
      %1442 = vmatpush.bf16.msra.mxu0 0
      %1443 = vmatpush.bf16.msra.mxu0 %v1055
      %1444 = vmatpush.bf16.msra.mxu0 %v1052
      %1445 = vmatpush.bf16.msra.mxu0 %v1049
      %1446 = vmatpush.bf16.msra.mxu0 %v1046
      %1447 = vmatmul.bf16.gmra.mxu0 %v1167
      %v1448 = vpop.f32.mrf.mxu0
      %v1449 = vadd.f32 %v1420, %v1448
      %v1450 = vpop.f32.mrf.mxu0
      %v1451 = vadd.f32 %v1422, %v1450
      %1452 = vmatmul.bf16.gmra.mxu0 %v1170
      %v1453 = vpop.f32.mrf.mxu0
      %v1454 = vadd.f32 %v1425, %v1453
      %v1455 = vpop.f32.mrf.mxu0
      %v1456 = vadd.f32 %v1427, %v1455
      %1457 = vmatmul.bf16.gmra.mxu0 %v1173
      %v1458 = vpop.f32.mrf.mxu0
      %v1459 = vadd.f32 %v1430, %v1458
      %v1460 = vpop.f32.mrf.mxu0
      %v1461 = vadd.f32 %v1432, %v1460
      %1462 = vmatmul.bf16.gmra.mxu0 %v1176
      %v1463 = vpop.f32.mrf.mxu0
      %v1464 = vadd.f32 %v1435, %v1463
      %v1465 = vpop.f32.mrf.mxu0
      %v1466 = vadd.f32 %v1437, %v1465
      %1467 = vdwg.mxu0
      %1468 = vmatpush.bf16.msra.mxu0 %v972
      %1469 = vmatpush.bf16.msra.mxu0 %v969
      %1470 = vmatpush.bf16.msra.mxu0 %v966
      %1471 = vmatpush.bf16.msra.mxu0 %v963
      %1472 = vmatpush.bf16.msra.mxu0 %v960
      %1473 = vmatpush.bf16.msra.mxu0 %v957
      %1474 = vmatpush.bf16.msra.mxu0 %v954
      %1475 = vmatpush.bf16.msra.mxu0 %v951
      %1476 = vmatmul.bf16.gmra.mxu0 %v553
      %v1477 = vpop.f32.mrf.mxu0
      %v1478 = vadd.f32 %v452, %v1477
      %v1479 = vpop.f32.mrf.mxu0
      %v1480 = vadd.f32 %v457, %v1479
      %1481 = vmatmul.bf16.gmra.mxu0 %v558
      %v1482 = vpop.f32.mrf.mxu0
      %v1483 = vadd.f32 %v462, %v1482
      %v1484 = vpop.f32.mrf.mxu0
      %v1485 = vadd.f32 %v467, %v1484
      %1486 = vmatmul.bf16.gmra.mxu0 %v563
      %v1487 = vpop.f32.mrf.mxu0
      %v1488 = vadd.f32 %v472, %v1487
      %v1489 = vpop.f32.mrf.mxu0
      %v1490 = vadd.f32 %v477, %v1489
      %1491 = vmatmul.bf16.gmra.mxu0 %v568
      %v1492 = vpop.f32.mrf.mxu0
      %v1493 = vadd.f32 %v482, %v1492
      %v1494 = vpop.f32.mrf.mxu0
      %v1495 = vadd.f32 %v487, %v1494
      %1496 = vdwg.mxu0
      %1497 = vmatpush.bf16.msra.mxu0 %v996
      %1498 = vmatpush.bf16.msra.mxu0 %v993
      %1499 = vmatpush.bf16.msra.mxu0 %v990
      %1500 = vmatpush.bf16.msra.mxu0 %v987
      %1501 = vmatpush.bf16.msra.mxu0 %v984
      %1502 = vmatpush.bf16.msra.mxu0 %v981
      %1503 = vmatpush.bf16.msra.mxu0 %v978
      %1504 = vmatpush.bf16.msra.mxu0 %v975
      %1505 = vmatmul.bf16.gmra.mxu0 %v554
      %v1506 = vpop.f32.mrf.mxu0
      %v1507 = vadd.f32 %v1478, %v1506
      %v1508 = vpop.f32.mrf.mxu0
      %v1509 = vadd.f32 %v1480, %v1508
      %1510 = vmatmul.bf16.gmra.mxu0 %v559
      %v1511 = vpop.f32.mrf.mxu0
      %v1512 = vadd.f32 %v1483, %v1511
      %v1513 = vpop.f32.mrf.mxu0
      %v1514 = vadd.f32 %v1485, %v1513
      %1515 = vmatmul.bf16.gmra.mxu0 %v564
      %v1516 = vpop.f32.mrf.mxu0
      %v1517 = vadd.f32 %v1488, %v1516
      %v1518 = vpop.f32.mrf.mxu0
      %v1519 = vadd.f32 %v1490, %v1518
      %1520 = vmatmul.bf16.gmra.mxu0 %v569
      %v1521 = vpop.f32.mrf.mxu0
      %v1522 = vadd.f32 %v1493, %v1521
      %v1523 = vpop.f32.mrf.mxu0
      %v1524 = vadd.f32 %v1495, %v1523
      %1525 = vdwg.mxu0
      %1526 = vmatpush.bf16.msra.mxu0 %v1020
      %1527 = vmatpush.bf16.msra.mxu0 %v1017
      %1528 = vmatpush.bf16.msra.mxu0 %v1014
      %1529 = vmatpush.bf16.msra.mxu0 %v1011
      %1530 = vmatpush.bf16.msra.mxu0 %v1008
      %1531 = vmatpush.bf16.msra.mxu0 %v1005
      %1532 = vmatpush.bf16.msra.mxu0 %v1002
      %1533 = vmatpush.bf16.msra.mxu0 %v999
      %1534 = vmatmul.bf16.gmra.mxu0 %v555
      %v1535 = vpop.f32.mrf.mxu0
      %v1536 = vadd.f32 %v1507, %v1535
      %v1537 = vpop.f32.mrf.mxu0
      %v1538 = vadd.f32 %v1509, %v1537
      %1539 = vmatmul.bf16.gmra.mxu0 %v560
      %v1540 = vpop.f32.mrf.mxu0
      %v1541 = vadd.f32 %v1512, %v1540
      %v1542 = vpop.f32.mrf.mxu0
      %v1543 = vadd.f32 %v1514, %v1542
      %1544 = vmatmul.bf16.gmra.mxu0 %v565
      %v1545 = vpop.f32.mrf.mxu0
      %v1546 = vadd.f32 %v1517, %v1545
      %v1547 = vpop.f32.mrf.mxu0
      %v1548 = vadd.f32 %v1519, %v1547
      %1549 = vmatmul.bf16.gmra.mxu0 %v570
      %v1550 = vpop.f32.mrf.mxu0
      %v1551 = vadd.f32 %v1522, %v1550
      %v1552 = vpop.f32.mrf.mxu0
      %v1553 = vadd.f32 %v1524, %v1552
      %1554 = vdwg.mxu0
      %1555 = vmatpush.bf16.msra.mxu0 %v1044
      %1556 = vmatpush.bf16.msra.mxu0 %v1041
      %1557 = vmatpush.bf16.msra.mxu0 %v1038
      %1558 = vmatpush.bf16.msra.mxu0 %v1035
      %1559 = vmatpush.bf16.msra.mxu0 %v1032
      %1560 = vmatpush.bf16.msra.mxu0 %v1029
      %1561 = vmatpush.bf16.msra.mxu0 %v1026
      %1562 = vmatpush.bf16.msra.mxu0 %v1023
      %1563 = vmatmul.bf16.gmra.mxu0 %v556
      %v1564 = vpop.f32.mrf.mxu0
      %v1565 = vadd.f32 %v1536, %v1564
      %v1566 = vpop.f32.mrf.mxu0
      %v1567 = vadd.f32 %v1538, %v1566
      %1568 = vmatmul.bf16.gmra.mxu0 %v561
      %v1569 = vpop.f32.mrf.mxu0
      %v1570 = vadd.f32 %v1541, %v1569
      %v1571 = vpop.f32.mrf.mxu0
      %v1572 = vadd.f32 %v1543, %v1571
      %1573 = vmatmul.bf16.gmra.mxu0 %v566
      %v1574 = vpop.f32.mrf.mxu0
      %v1575 = vadd.f32 %v1546, %v1574
      %v1576 = vpop.f32.mrf.mxu0
      %v1577 = vadd.f32 %v1548, %v1576
      %1578 = vmatmul.bf16.gmra.mxu0 %v571
      %v1579 = vpop.f32.mrf.mxu0
      %v1580 = vadd.f32 %v1551, %v1579
      %v1581 = vpop.f32.mrf.mxu0
      %v1582 = vadd.f32 %v1553, %v1581
      %1583 = vdwg.mxu0
      %1584 = vmatpush.bf16.msra.mxu0 0
      %1585 = vmatpush.bf16.msra.mxu0 0
      %1586 = vmatpush.bf16.msra.mxu0 0
      %1587 = vmatpush.bf16.msra.mxu0 0
      %1588 = vmatpush.bf16.msra.mxu0 %v1056
      %1589 = vmatpush.bf16.msra.mxu0 %v1053
      %1590 = vmatpush.bf16.msra.mxu0 %v1050
      %1591 = vmatpush.bf16.msra.mxu0 %v1047
      %1592 = vmatmul.bf16.gmra.mxu0 %v1167
      %v1593 = vpop.f32.mrf.mxu0
      %v1594 = vadd.f32 %v1565, %v1593
      %v1595 = vpop.f32.mrf.mxu0
      %v1596 = vadd.f32 %v1567, %v1595
      %1597 = vmatmul.bf16.gmra.mxu0 %v1170
      %v1598 = vpop.f32.mrf.mxu0
      %v1599 = vadd.f32 %v1570, %v1598
      %v1600 = vpop.f32.mrf.mxu0
      %v1601 = vadd.f32 %v1572, %v1600
      %1602 = vmatmul.bf16.gmra.mxu0 %v1173
      %v1603 = vpop.f32.mrf.mxu0
      %v1604 = vadd.f32 %v1575, %v1603
      %v1605 = vpop.f32.mrf.mxu0
      %v1606 = vadd.f32 %v1577, %v1605
      %1607 = vmatmul.bf16.gmra.mxu0 %v1176
      %v1608 = vpop.f32.mrf.mxu0
      %v1609 = vadd.f32 %v1580, %v1608
      %v1610 = vpop.f32.mrf.mxu0
      %v1611 = vadd.f32 %v1582, %v1610
      %1612 = vdwg.mxu0
      %s1613 = scalar_lea.vmem %s4, 128
      %v1614 = vld [vmem:[%s1613] sm:$0xff]
      %v1615 = vld [vmem:[%s1613 + $0x8] sm:$0xff]
      %v1616 = vld [vmem:[%s1613 + $0x10] sm:$0xff]
      %v1617 = vld [vmem:[%s1613 + $0x18] sm:$0xff]
      %v1618 = vld [vmem:[%s1613 + $0x20] sm:$0xff]
      %v1619 = vld [vmem:[%s1613 + $0x28] sm:$0xff]
      %v1620 = vld [vmem:[%s1613 + $0x30] sm:$0xff]
      %v1621 = vld [vmem:[%s1613 + $0x38] sm:$0xff]
      %vm1622 = vcmp.ge.f32.partialorder %v1304, 0.0
      %vm1623 = vcmp.ge.f32.partialorder %v1449, 0.0
      %vm1624 = vcmp.ge.f32.partialorder %v1594, 0.0
      %vm1625 = vcmp.ge.f32.partialorder %v1306, 0.0
      %vm1626 = vcmp.ge.f32.partialorder %v1451, 0.0
      %vm1627 = vcmp.ge.f32.partialorder %v1596, 0.0
      %vm1628 = vcmp.ge.f32.partialorder %v1309, 0.0
      %vm1629 = vcmp.ge.f32.partialorder %v1454, 0.0
      %vm1630 = vcmp.ge.f32.partialorder %v1599, 0.0
      %vm1631 = vcmp.ge.f32.partialorder %v1311, 0.0
      %vm1632 = vcmp.ge.f32.partialorder %v1456, 0.0
      %vm1633 = vcmp.ge.f32.partialorder %v1601, 0.0
      %vm1634 = vcmp.ge.f32.partialorder %v1314, 0.0
      %vm1635 = vcmp.ge.f32.partialorder %v1459, 0.0
      %vm1636 = vcmp.ge.f32.partialorder %v1604, 0.0
      %vm1637 = vcmp.ge.f32.partialorder %v1316, 0.0
      %vm1638 = vcmp.ge.f32.partialorder %v1461, 0.0
      %vm1639 = vcmp.ge.f32.partialorder %v1606, 0.0
      %vm1640 = vcmp.ge.f32.partialorder %v1319, 0.0
      %vm1641 = vcmp.ge.f32.partialorder %v1464, 0.0
      %vm1642 = vcmp.ge.f32.partialorder %v1609, 0.0
      %vm1643 = vcmp.ge.f32.partialorder %v1321, 0.0
      %vm1644 = vcmp.ge.f32.partialorder %v1466, 0.0
      %vm1645 = vcmp.ge.f32.partialorder %v1611, 0.0
      %1647 = vset.pattern.permute.xlu0 0
      %1648 = vperm.xlu0 %1647, %v1614
      %v1649 = vpop.permute.xlu0 %1648
      %1652 = vset.pattern.permute.xlu0 0
      %1653 = vperm.xlu0 %1652, %v1615
      %v1654 = vpop.permute.xlu0 %1653
      %1657 = vset.pattern.permute.xlu0 0
      %1658 = vperm.xlu0 %1657, %v1616
      %v1659 = vpop.permute.xlu0 %1658
      %1662 = vset.pattern.permute.xlu0 0
      %1663 = vperm.xlu0 %1662, %v1617
      %v1664 = vpop.permute.xlu0 %1663
      %1667 = vset.pattern.permute.xlu0 0
      %1668 = vperm.xlu0 %1667, %v1618
      %v1669 = vpop.permute.xlu0 %1668
      %1672 = vset.pattern.permute.xlu0 0
      %1673 = vperm.xlu0 %1672, %v1619
      %v1674 = vpop.permute.xlu0 %1673
      %1677 = vset.pattern.permute.xlu0 0
      %1678 = vperm.xlu0 %1677, %v1620
      %v1679 = vpop.permute.xlu0 %1678
      %1682 = vset.pattern.permute.xlu0 0
      %1683 = vperm.xlu0 %1682, %v1621
      %v1684 = vpop.permute.xlu0 %1683
      %v1686 = vmul.f32 %v1649, %v1304
      %v1687 = vmul.f32 %v1649, %v1449
      %v1688 = vmul.f32 %v1649, %v1594
      %v1689 = vmul.f32 %v1654, %v1306
      %v1690 = vmul.f32 %v1654, %v1451
      %v1691 = vmul.f32 %v1654, %v1596
      %v1692 = vmul.f32 %v1659, %v1309
      %v1693 = vmul.f32 %v1659, %v1454
      %v1694 = vmul.f32 %v1659, %v1599
      %v1695 = vmul.f32 %v1664, %v1311
      %v1696 = vmul.f32 %v1664, %v1456
      %v1697 = vmul.f32 %v1664, %v1601
      %v1698 = vmul.f32 %v1669, %v1314
      %v1699 = vmul.f32 %v1669, %v1459
      %v1700 = vmul.f32 %v1669, %v1604
      %v1701 = vmul.f32 %v1674, %v1316
      %v1702 = vmul.f32 %v1674, %v1461
      %v1703 = vmul.f32 %v1674, %v1606
      %v1704 = vmul.f32 %v1679, %v1319
      %v1705 = vmul.f32 %v1679, %v1464
      %v1706 = vmul.f32 %v1679, %v1609
      %v1707 = vmul.f32 %v1684, %v1321
      %v1708 = vmul.f32 %v1684, %v1466
      %v1709 = vmul.f32 %v1684, %v1611
      %v1710 = vsel %vm1622, %v1304, %v1686
      %v1711 = vsel %vm1623, %v1449, %v1687
      %v1712 = vsel %vm1624, %v1594, %v1688
      %v1713 = vsel %vm1625, %v1306, %v1689
      %v1714 = vsel %vm1626, %v1451, %v1690
      %v1715 = vsel %vm1627, %v1596, %v1691
      %v1716 = vsel %vm1628, %v1309, %v1692
      %v1717 = vsel %vm1629, %v1454, %v1693
      %v1718 = vsel %vm1630, %v1599, %v1694
      %v1719 = vsel %vm1631, %v1311, %v1695
      %v1720 = vsel %vm1632, %v1456, %v1696
      %v1721 = vsel %vm1633, %v1601, %v1697
      %v1722 = vsel %vm1634, %v1314, %v1698
      %v1723 = vsel %vm1635, %v1459, %v1699
      %v1724 = vsel %vm1636, %v1604, %v1700
      %v1725 = vsel %vm1637, %v1316, %v1701
      %v1726 = vsel %vm1638, %v1461, %v1702
      %v1727 = vsel %vm1639, %v1606, %v1703
      %v1728 = vsel %vm1640, %v1319, %v1704
      %v1729 = vsel %vm1641, %v1464, %v1705
      %v1730 = vsel %vm1642, %v1609, %v1706
      %v1731 = vsel %vm1643, %v1321, %v1707
      %v1732 = vsel %vm1644, %v1466, %v1708
      %v1733 = vsel %vm1645, %v1611, %v1709
      %v1734 = vld [vmem:[%s5] sm:$0x7]
      %vm1735 = vcmp.gt.f32.partialorder %v1734, 0.5
      %v1736 = vsel %vm1735, 1, 0
      %v1737 = vperm.slane %v1736, 0
      %v1738 = vperm.slane %v1736, 1
      %v1739 = vperm.slane %v1736, 2
      %vm1740 = vcmp.eq.s32.totalorder %v1737, 1
      %vm1741 = vcmp.eq.s32.totalorder %v1738, 1
      %vm1742 = vcmp.eq.s32.totalorder %v1739, 1
      %v1743 = vsel %vm1740, %v1710, 0.0
      %v1744 = vsel %vm1741, %v1711, 0.0
      %v1745 = vsel %vm1742, %v1712, 0.0
      %v1746 = vsel %vm1740, %v1713, 0.0
      %v1747 = vsel %vm1741, %v1714, 0.0
      %v1748 = vsel %vm1742, %v1715, 0.0
      %v1749 = vsel %vm1740, %v1716, 0.0
      %v1750 = vsel %vm1741, %v1717, 0.0
      %v1751 = vsel %vm1742, %v1718, 0.0
      %v1752 = vsel %vm1740, %v1719, 0.0
      %v1753 = vsel %vm1741, %v1720, 0.0
      %v1754 = vsel %vm1742, %v1721, 0.0
      %v1755 = vsel %vm1740, %v1722, 0.0
      %v1756 = vsel %vm1741, %v1723, 0.0
      %v1757 = vsel %vm1742, %v1724, 0.0
      %v1758 = vsel %vm1740, %v1725, 0.0
      %v1759 = vsel %vm1741, %v1726, 0.0
      %v1760 = vsel %vm1742, %v1727, 0.0
      %v1761 = vsel %vm1740, %v1728, 0.0
      %v1762 = vsel %vm1741, %v1729, 0.0
      %v1763 = vsel %vm1742, %v1730, 0.0
      %v1764 = vsel %vm1740, %v1731, 0.0
      %v1765 = vsel %vm1741, %v1732, 0.0
      %v1766 = vsel %vm1742, %v1733, 0.0
      %1767 = vst [vmem:[#allocation2] sm:$0xf] 0
      %1768 = vst [vmem:[#allocation2 + $0x14] sm:$0xf] 0
      %1769 = vst [vmem:[#allocation2 + $0x28] sm:$0xf] 0
      %1770 = vst [vmem:[#allocation2 + $0x3c] sm:$0xf] 0
      %1771 = vst [vmem:[#allocation2 + $0x50] sm:$0xf] 0
      %1772 = vst [vmem:[#allocation2 + $0x64] sm:$0xf] 0
      %1773 = vst [vmem:[#allocation2 + $0x78] sm:$0xf] 0
      %1774 = vst [vmem:[#allocation2 + $0x8c] sm:$0xf] 0
      %1775 = vst [vmem:[#allocation2 + $0x10] sm:$0xf] 0
      %1776 = vst [vmem:[#allocation2 + $0x24] sm:$0xf] 0
      %1777 = vst [vmem:[#allocation2 + $0x38] sm:$0xf] 0
      %1778 = vst [vmem:[#allocation2 + $0x4c] sm:$0xf] 0
      %1779 = vst [vmem:[#allocation2 + $0x60] sm:$0xf] 0
      %1780 = vst [vmem:[#allocation2 + $0x74] sm:$0xf] 0
      %1781 = vst [vmem:[#allocation2 + $0x88] sm:$0xf] 0
      %1782 = vst [vmem:[#allocation2 + $0x9c] sm:$0xf] 0
      %v1783 = vpack.c.bf16 %v1744, %v1743
      %v1784 = vpack.c.bf16 %v1745, %v1745
      %v1785 = vpack.c.bf16 %v1747, %v1746
      %v1786 = vpack.c.bf16 %v1748, %v1748
      %v1787 = vpack.c.bf16 %v1750, %v1749
      %v1788 = vpack.c.bf16 %v1751, %v1751
      %v1789 = vpack.c.bf16 %v1753, %v1752
      %v1790 = vpack.c.bf16 %v1754, %v1754
      %v1791 = vpack.c.bf16 %v1756, %v1755
      %v1792 = vpack.c.bf16 %v1757, %v1757
      %v1793 = vpack.c.bf16 %v1759, %v1758
      %v1794 = vpack.c.bf16 %v1760, %v1760
      %v1795 = vpack.c.bf16 %v1762, %v1761
      %v1796 = vpack.c.bf16 %v1763, %v1763
      %v1797 = vpack.c.bf16 %v1765, %v1764
      %v1798 = vpack.c.bf16 %v1766, %v1766
      %1799 = vst [vmem:[#allocation2 + $0x4] sm:$0xff] %v1783
      %1800 = vst [vmem:[#allocation2 + $0xc] sm:$0xf] %v1784
      %1801 = vst [vmem:[#allocation2 + $0x18] sm:$0xff] %v1785
      %1802 = vst [vmem:[#allocation2 + $0x20] sm:$0xf] %v1786
      %1803 = vst [vmem:[#allocation2 + $0x2c] sm:$0xff] %v1787
      %1804 = vst [vmem:[#allocation2 + $0x34] sm:$0xf] %v1788
      %1805 = vst [vmem:[#allocation2 + $0x40] sm:$0xff] %v1789
      %1806 = vst [vmem:[#allocation2 + $0x48] sm:$0xf] %v1790
      %1807 = vst [vmem:[#allocation2 + $0x54] sm:$0xff] %v1791
      %1808 = vst [vmem:[#allocation2 + $0x5c] sm:$0xf] %v1792
      %1809 = vst [vmem:[#allocation2 + $0x68] sm:$0xff] %v1793
      %1810 = vst [vmem:[#allocation2 + $0x70] sm:$0xf] %v1794
      %1811 = vst [vmem:[#allocation2 + $0x7c] sm:$0xff] %v1795
      %1812 = vst [vmem:[#allocation2 + $0x84] sm:$0xf] %v1796
      %1813 = vst [vmem:[#allocation2 + $0x90] sm:$0xff] %v1797
      %1814 = vst [vmem:[#allocation2 + $0x98] sm:$0xf] %v1798
      %v1815 = vld [vmem:[#allocation2] sm:$0xff]
      %v1816 = vld [vmem:[#allocation2 + $0x8] sm:$0xff]
      %v1817 = vld [vmem:[#allocation2 + $0x14] sm:$0xff]
      %v1818 = vld [vmem:[#allocation2 + $0x1c] sm:$0xff]
      %v1819 = vld [vmem:[#allocation2 + $0x28] sm:$0xff]
      %v1820 = vld [vmem:[#allocation2 + $0x30] sm:$0xff]
      %v1821 = vld [vmem:[#allocation2 + $0x3c] sm:$0xff]
      %v1822 = vld [vmem:[#allocation2 + $0x44] sm:$0xff]
      %v1823 = vld [vmem:[#allocation2 + $0x50] sm:$0xff]
      %v1824 = vld [vmem:[#allocation2 + $0x58] sm:$0xff]
      %v1825 = vld [vmem:[#allocation2 + $0x64] sm:$0xff]
      %v1826 = vld [vmem:[#allocation2 + $0x6c] sm:$0xff]
      %v1827 = vld [vmem:[#allocation2 + $0x78] sm:$0xff]
      %v1828 = vld [vmem:[#allocation2 + $0x80] sm:$0xff]
      %v1829 = vld [vmem:[#allocation2 + $0x8c] sm:$0xff]
      %v1830 = vld [vmem:[#allocation2 + $0x94] sm:$0xff]
      %v1831 = vld [vmem:[#allocation2 + $0x4] sm:$0xff]
      %v1832 = vld [vmem:[#allocation2 + $0xc] sm:$0xf]
      %v1833 = vld [vmem:[#allocation2 + $0x18] sm:$0xff]
      %v1834 = vld [vmem:[#allocation2 + $0x20] sm:$0xf]
      %v1835 = vld [vmem:[#allocation2 + $0x2c] sm:$0xff]
      %v1836 = vld [vmem:[#allocation2 + $0x34] sm:$0xf]
      %v1837 = vld [vmem:[#allocation2 + $0x40] sm:$0xff]
      %v1838 = vld [vmem:[#allocation2 + $0x48] sm:$0xf]
      %v1839 = vld [vmem:[#allocation2 + $0x54] sm:$0xff]
      %v1840 = vld [vmem:[#allocation2 + $0x5c] sm:$0xf]
      %v1841 = vld [vmem:[#allocation2 + $0x68] sm:$0xff]
      %v1842 = vld [vmem:[#allocation2 + $0x70] sm:$0xf]
      %v1843 = vld [vmem:[#allocation2 + $0x7c] sm:$0xff]
      %v1844 = vld [vmem:[#allocation2 + $0x84] sm:$0xf]
      %v1845 = vld [vmem:[#allocation2 + $0x90] sm:$0xff]
      %v1846 = vld [vmem:[#allocation2 + $0x98] sm:$0xf]
      %v1847 = vld [vmem:[#allocation2 + $0x4] sm:$0xff]
      %v1848 = vld [vmem:[#allocation2 + $0xc] sm:$0xff]
      %v1849 = vld [vmem:[#allocation2 + $0x18] sm:$0xff]
      %v1850 = vld [vmem:[#allocation2 + $0x20] sm:$0xff]
      %v1851 = vld [vmem:[#allocation2 + $0x2c] sm:$0xff]
      %v1852 = vld [vmem:[#allocation2 + $0x34] sm:$0xff]
      %v1853 = vld [vmem:[#allocation2 + $0x40] sm:$0xff]
      %v1854 = vld [vmem:[#allocation2 + $0x48] sm:$0xff]
      %v1855 = vld [vmem:[#allocation2 + $0x54] sm:$0xff]
      %v1856 = vld [vmem:[#allocation2 + $0x5c] sm:$0xff]
      %v1857 = vld [vmem:[#allocation2 + $0x68] sm:$0xff]
      %v1858 = vld [vmem:[#allocation2 + $0x70] sm:$0xff]
      %v1859 = vld [vmem:[#allocation2 + $0x7c] sm:$0xff]
      %v1860 = vld [vmem:[#allocation2 + $0x84] sm:$0xff]
      %v1861 = vld [vmem:[#allocation2 + $0x90] sm:$0xff]
      %v1862 = vld [vmem:[#allocation2 + $0x98] sm:$0xff]
      %v1879 = vunpack.c.l.b16 %v1815
      %v1880 = vunpack.c.h.b16 %v1815
      %v1881 = vunpack.c.l.b16 %v1816
      %v1882 = vunpack.c.h.b16 %v1816
      %v1883 = vunpack.c.l.b16 %v1817
      %v1884 = vunpack.c.h.b16 %v1817
      %v1885 = vunpack.c.l.b16 %v1818
      %v1886 = vunpack.c.h.b16 %v1818
      %v1887 = vunpack.c.l.b16 %v1819
      %v1888 = vunpack.c.h.b16 %v1819
      %v1889 = vunpack.c.l.b16 %v1820
      %v1890 = vunpack.c.h.b16 %v1820
      %v1891 = vunpack.c.l.b16 %v1821
      %v1892 = vunpack.c.h.b16 %v1821
      %v1893 = vunpack.c.l.b16 %v1822
      %v1894 = vunpack.c.h.b16 %v1822
      %v1895 = vunpack.c.l.b16 %v1823
      %v1896 = vunpack.c.h.b16 %v1823
      %v1897 = vunpack.c.l.b16 %v1824
      %v1898 = vunpack.c.h.b16 %v1824
      %v1899 = vunpack.c.l.b16 %v1825
      %v1900 = vunpack.c.h.b16 %v1825
      %v1901 = vunpack.c.l.b16 %v1826
      %v1902 = vunpack.c.h.b16 %v1826
      %v1903 = vunpack.c.l.b16 %v1827
      %v1904 = vunpack.c.h.b16 %v1827
      %v1905 = vunpack.c.l.b16 %v1828
      %v1906 = vunpack.c.h.b16 %v1828
      %v1907 = vunpack.c.l.b16 %v1829
      %v1908 = vunpack.c.h.b16 %v1829
      %v1909 = vunpack.c.l.b16 %v1830
      %v1910 = vunpack.c.h.b16 %v1830
      %v1911 = vpack.c.b16 %v1883, %v1879
      %v1912 = vpack.c.b16 %v1884, %v1880
      %v1913 = vpack.c.b16 %v1885, %v1881
      %v1914 = vpack.c.b16 %v1886, %v1882
      %v1915 = vpack.c.b16 %v1891, %v1887
      %v1916 = vpack.c.b16 %v1892, %v1888
      %v1917 = vpack.c.b16 %v1893, %v1889
      %v1918 = vpack.c.b16 %v1894, %v1890
      %v1919 = vpack.c.b16 %v1899, %v1895
      %v1920 = vpack.c.b16 %v1900, %v1896
      %v1921 = vpack.c.b16 %v1901, %v1897
      %v1922 = vpack.c.b16 %v1902, %v1898
      %v1923 = vpack.c.b16 %v1907, %v1903
      %v1924 = vpack.c.b16 %v1908, %v1904
      %v1925 = vpack.c.b16 %v1909, %v1905
      %v1926 = vpack.c.b16 %v1910, %v1906
      %1927 = vrot.lane.b32.xlu0 %v1911, 127
      %v1928 = vpop.permute.xlu0 %1927
      %1929 = vrot.lane.b32.xlu0 %v1912, 127
      %v1930 = vpop.permute.xlu0 %1929
      %1931 = vrot.lane.b32.xlu0 %v1913, 127
      %v1932 = vpop.permute.xlu0 %1931
      %1933 = vrot.lane.b32.xlu0 %v1914, 127
      %v1934 = vpop.permute.xlu0 %1933
      %1935 = vrot.lane.b32.xlu0 %v1915, 127
      %v1936 = vpop.permute.xlu0 %1935
      %1937 = vrot.lane.b32.xlu0 %v1916, 127
      %v1938 = vpop.permute.xlu0 %1937
      %1939 = vrot.lane.b32.xlu0 %v1917, 127
      %v1940 = vpop.permute.xlu0 %1939
      %1941 = vrot.lane.b32.xlu0 %v1918, 127
      %v1942 = vpop.permute.xlu0 %1941
      %1943 = vrot.lane.b32.xlu0 %v1919, 127
      %v1944 = vpop.permute.xlu0 %1943
      %1945 = vrot.lane.b32.xlu0 %v1920, 127
      %v1946 = vpop.permute.xlu0 %1945
      %1947 = vrot.lane.b32.xlu0 %v1921, 127
      %v1948 = vpop.permute.xlu0 %1947
      %1949 = vrot.lane.b32.xlu0 %v1922, 127
      %v1950 = vpop.permute.xlu0 %1949
      %1951 = vrot.lane.b32.xlu0 %v1923, 127
      %v1952 = vpop.permute.xlu0 %1951
      %1953 = vrot.lane.b32.xlu0 %v1924, 127
      %v1954 = vpop.permute.xlu0 %1953
      %1955 = vrot.lane.b32.xlu0 %v1925, 127
      %v1956 = vpop.permute.xlu0 %1955
      %1957 = vrot.lane.b32.xlu0 %v1926, 127
      %v1958 = vpop.permute.xlu0 %1957
      %vm1959 = vcmask 1039360
      %v1960 = vsel %vm1959, %v1928, %v1930
      %v1961 = vsel %vm1959, %v1930, %v1932
      %v1962 = vsel %vm1959, %v1932, %v1934
      %v1963 = vsel %vm1959, %v1936, %v1938
      %v1964 = vsel %vm1959, %v1938, %v1940
      %v1965 = vsel %vm1959, %v1940, %v1942
      %v1966 = vsel %vm1959, %v1944, %v1946
      %v1967 = vsel %vm1959, %v1946, %v1948
      %v1968 = vsel %vm1959, %v1948, %v1950
      %v1969 = vsel %vm1959, %v1952, %v1954
      %v1970 = vsel %vm1959, %v1954, %v1956
      %v1971 = vsel %vm1959, %v1956, %v1958
      %1972 = vrot.lane.b32.xlu0 %v1911, 126
      %v1973 = vpop.permute.xlu0 %1972
      %1974 = vrot.lane.b32.xlu0 %v1912, 126
      %v1975 = vpop.permute.xlu0 %1974
      %1976 = vrot.lane.b32.xlu0 %v1913, 126
      %v1977 = vpop.permute.xlu0 %1976
      %1978 = vrot.lane.b32.xlu0 %v1914, 126
      %v1979 = vpop.permute.xlu0 %1978
      %1980 = vrot.lane.b32.xlu0 %v1915, 126
      %v1981 = vpop.permute.xlu0 %1980
      %1982 = vrot.lane.b32.xlu0 %v1916, 126
      %v1983 = vpop.permute.xlu0 %1982
      %1984 = vrot.lane.b32.xlu0 %v1917, 126
      %v1985 = vpop.permute.xlu0 %1984
      %1986 = vrot.lane.b32.xlu0 %v1918, 126
      %v1987 = vpop.permute.xlu0 %1986
      %1988 = vrot.lane.b32.xlu0 %v1919, 126
      %v1989 = vpop.permute.xlu0 %1988
      %1990 = vrot.lane.b32.xlu0 %v1920, 126
      %v1991 = vpop.permute.xlu0 %1990
      %1992 = vrot.lane.b32.xlu0 %v1921, 126
      %v1993 = vpop.permute.xlu0 %1992
      %1994 = vrot.lane.b32.xlu0 %v1922, 126
      %v1995 = vpop.permute.xlu0 %1994
      %1996 = vrot.lane.b32.xlu0 %v1923, 126
      %v1997 = vpop.permute.xlu0 %1996
      %1998 = vrot.lane.b32.xlu0 %v1924, 126
      %v1999 = vpop.permute.xlu0 %1998
      %2000 = vrot.lane.b32.xlu0 %v1925, 126
      %v2001 = vpop.permute.xlu0 %2000
      %2002 = vrot.lane.b32.xlu0 %v1926, 126
      %v2003 = vpop.permute.xlu0 %2002
      %vm2004 = vcmask 1031168
      %v2005 = vsel %vm2004, %v1973, %v1975
      %v2006 = vsel %vm2004, %v1975, %v1977
      %v2007 = vsel %vm2004, %v1977, %v1979
      %v2008 = vsel %vm2004, %v1981, %v1983
      %v2009 = vsel %vm2004, %v1983, %v1985
      %v2010 = vsel %vm2004, %v1985, %v1987
      %v2011 = vsel %vm2004, %v1989, %v1991
      %v2012 = vsel %vm2004, %v1991, %v1993
      %v2013 = vsel %vm2004, %v1993, %v1995
      %v2014 = vsel %vm2004, %v1997, %v1999
      %v2015 = vsel %vm2004, %v1999, %v2001
      %v2016 = vsel %vm2004, %v2001, %v2003
      %2017 = vrot.lane.b32.xlu0 %v1911, 104
      %v2018 = vpop.permute.xlu0 %2017
      %2019 = vrot.lane.b32.xlu0 %v1912, 104
      %v2020 = vpop.permute.xlu0 %2019
      %2021 = vrot.lane.b32.xlu0 %v1913, 104
      %v2022 = vpop.permute.xlu0 %2021
      %2023 = vrot.lane.b32.xlu0 %v1914, 104
      %v2024 = vpop.permute.xlu0 %2023
      %2025 = vrot.lane.b32.xlu0 %v1915, 104
      %v2026 = vpop.permute.xlu0 %2025
      %2027 = vrot.lane.b32.xlu0 %v1916, 104
      %v2028 = vpop.permute.xlu0 %2027
      %2029 = vrot.lane.b32.xlu0 %v1917, 104
      %v2030 = vpop.permute.xlu0 %2029
      %2031 = vrot.lane.b32.xlu0 %v1918, 104
      %v2032 = vpop.permute.xlu0 %2031
      %2033 = vrot.lane.b32.xlu0 %v1919, 104
      %v2034 = vpop.permute.xlu0 %2033
      %2035 = vrot.lane.b32.xlu0 %v1920, 104
      %v2036 = vpop.permute.xlu0 %2035
      %2037 = vrot.lane.b32.xlu0 %v1921, 104
      %v2038 = vpop.permute.xlu0 %2037
      %2039 = vrot.lane.b32.xlu0 %v1922, 104
      %v2040 = vpop.permute.xlu0 %2039
      %2041 = vrot.lane.b32.xlu0 %v1923, 104
      %v2042 = vpop.permute.xlu0 %2041
      %2043 = vrot.lane.b32.xlu0 %v1924, 104
      %v2044 = vpop.permute.xlu0 %2043
      %2045 = vrot.lane.b32.xlu0 %v1925, 104
      %v2046 = vpop.permute.xlu0 %2045
      %2047 = vrot.lane.b32.xlu0 %v1926, 104
      %v2048 = vpop.permute.xlu0 %2047
      %vm2049 = vcmask 850944
      %v2050 = vsel %vm2049, %v2018, %v2020
      %v2051 = vsel %vm2049, %v2020, %v2022
      %v2052 = vsel %vm2049, %v2022, %v2024
      %v2053 = vsel %vm2049, %v2026, %v2028
      %v2054 = vsel %vm2049, %v2028, %v2030
      %v2055 = vsel %vm2049, %v2030, %v2032
      %v2056 = vsel %vm2049, %v2034, %v2036
      %v2057 = vsel %vm2049, %v2036, %v2038
      %v2058 = vsel %vm2049, %v2038, %v2040
      %v2059 = vsel %vm2049, %v2042, %v2044
      %v2060 = vsel %vm2049, %v2044, %v2046
      %v2061 = vsel %vm2049, %v2046, %v2048
      %v2078 = vunpack.c.l.b16 %v1831
      %v2079 = vunpack.c.h.b16 %v1831
      %v2080 = vunpack.c.l.b16 %v1832
      %v2081 = vunpack.c.l.b16 %v1833
      %v2082 = vunpack.c.h.b16 %v1833
      %v2083 = vunpack.c.l.b16 %v1834
      %v2084 = vunpack.c.l.b16 %v1835
      %v2085 = vunpack.c.h.b16 %v1835
      %v2086 = vunpack.c.l.b16 %v1836
      %v2087 = vunpack.c.l.b16 %v1837
      %v2088 = vunpack.c.h.b16 %v1837
      %v2089 = vunpack.c.l.b16 %v1838
      %v2090 = vunpack.c.l.b16 %v1839
      %v2091 = vunpack.c.h.b16 %v1839
      %v2092 = vunpack.c.l.b16 %v1840
      %v2093 = vunpack.c.l.b16 %v1841
      %v2094 = vunpack.c.h.b16 %v1841
      %v2095 = vunpack.c.l.b16 %v1842
      %v2096 = vunpack.c.l.b16 %v1843
      %v2097 = vunpack.c.h.b16 %v1843
      %v2098 = vunpack.c.l.b16 %v1844
      %v2099 = vunpack.c.l.b16 %v1845
      %v2100 = vunpack.c.h.b16 %v1845
      %v2101 = vunpack.c.l.b16 %v1846
      %v2102 = vpack.c.b16 %v2081, %v2078
      %v2103 = vpack.c.b16 %v2082, %v2079
      %v2104 = vpack.c.b16 %v2083, %v2080
      %v2105 = vpack.c.b16 %v2087, %v2084
      %v2106 = vpack.c.b16 %v2088, %v2085
      %v2107 = vpack.c.b16 %v2089, %v2086
      %v2108 = vpack.c.b16 %v2093, %v2090
      %v2109 = vpack.c.b16 %v2094, %v2091
      %v2110 = vpack.c.b16 %v2095, %v2092
      %v2111 = vpack.c.b16 %v2099, %v2096
      %v2112 = vpack.c.b16 %v2100, %v2097
      %v2113 = vpack.c.b16 %v2101, %v2098
      %2114 = vrot.lane.b32.xlu0 %v2102, 103
      %v2115 = vpop.permute.xlu0 %2114
      %2116 = vrot.lane.b32.xlu0 %v2103, 103
      %v2117 = vpop.permute.xlu0 %2116
      %2118 = vrot.lane.b32.xlu0 %v2104, 103
      %v2119 = vpop.permute.xlu0 %2118
      %2120 = vrot.lane.b32.xlu0 %v2105, 103
      %v2121 = vpop.permute.xlu0 %2120
      %2122 = vrot.lane.b32.xlu0 %v2106, 103
      %v2123 = vpop.permute.xlu0 %2122
      %2124 = vrot.lane.b32.xlu0 %v2107, 103
      %v2125 = vpop.permute.xlu0 %2124
      %2126 = vrot.lane.b32.xlu0 %v2108, 103
      %v2127 = vpop.permute.xlu0 %2126
      %2128 = vrot.lane.b32.xlu0 %v2109, 103
      %v2129 = vpop.permute.xlu0 %2128
      %2130 = vrot.lane.b32.xlu0 %v2110, 103
      %v2131 = vpop.permute.xlu0 %2130
      %2132 = vrot.lane.b32.xlu0 %v2111, 103
      %v2133 = vpop.permute.xlu0 %2132
      %2134 = vrot.lane.b32.xlu0 %v2112, 103
      %v2135 = vpop.permute.xlu0 %2134
      %2136 = vrot.lane.b32.xlu0 %v2113, 103
      %v2137 = vpop.permute.xlu0 %2136
      %vm2138 = vcmask 842752
      %v2139 = vsel %vm2138, %v2115, %v2117
      %v2140 = vsel %vm2138, %v2117, %v2119
      %v2141 = vsel %vm2138, %v2121, %v2123
      %v2142 = vsel %vm2138, %v2123, %v2125
      %v2143 = vsel %vm2138, %v2127, %v2129
      %v2144 = vsel %vm2138, %v2129, %v2131
      %v2145 = vsel %vm2138, %v2133, %v2135
      %v2146 = vsel %vm2138, %v2135, %v2137
      %v2163 = vunpack.c.l.b16 %v1847
      %v2164 = vunpack.c.h.b16 %v1847
      %v2165 = vunpack.c.l.b16 %v1848
      %v2166 = vunpack.c.h.b16 %v1848
      %v2167 = vunpack.c.l.b16 %v1849
      %v2168 = vunpack.c.h.b16 %v1849
      %v2169 = vunpack.c.l.b16 %v1850
      %v2170 = vunpack.c.h.b16 %v1850
      %v2171 = vunpack.c.l.b16 %v1851
      %v2172 = vunpack.c.h.b16 %v1851
      %v2173 = vunpack.c.l.b16 %v1852
      %v2174 = vunpack.c.h.b16 %v1852
      %v2175 = vunpack.c.l.b16 %v1853
      %v2176 = vunpack.c.h.b16 %v1853
      %v2177 = vunpack.c.l.b16 %v1854
      %v2178 = vunpack.c.h.b16 %v1854
      %v2179 = vunpack.c.l.b16 %v1855
      %v2180 = vunpack.c.h.b16 %v1855
      %v2181 = vunpack.c.l.b16 %v1856
      %v2182 = vunpack.c.h.b16 %v1856
      %v2183 = vunpack.c.l.b16 %v1857
      %v2184 = vunpack.c.h.b16 %v1857
      %v2185 = vunpack.c.l.b16 %v1858
      %v2186 = vunpack.c.h.b16 %v1858
      %v2187 = vunpack.c.l.b16 %v1859
      %v2188 = vunpack.c.h.b16 %v1859
      %v2189 = vunpack.c.l.b16 %v1860
      %v2190 = vunpack.c.h.b16 %v1860
      %v2191 = vunpack.c.l.b16 %v1861
      %v2192 = vunpack.c.h.b16 %v1861
      %v2193 = vunpack.c.l.b16 %v1862
      %v2194 = vunpack.c.h.b16 %v1862
      %v2195 = vpack.c.b16 %v2167, %v2163
      %v2196 = vpack.c.b16 %v2168, %v2164
      %v2197 = vpack.c.b16 %v2169, %v2165
      %v2198 = vpack.c.b16 %v2170, %v2166
      %v2199 = vpack.c.b16 %v2175, %v2171
      %v2200 = vpack.c.b16 %v2176, %v2172
      %v2201 = vpack.c.b16 %v2177, %v2173
      %v2202 = vpack.c.b16 %v2178, %v2174
      %v2203 = vpack.c.b16 %v2183, %v2179
      %v2204 = vpack.c.b16 %v2184, %v2180
      %v2205 = vpack.c.b16 %v2185, %v2181
      %v2206 = vpack.c.b16 %v2186, %v2182
      %v2207 = vpack.c.b16 %v2191, %v2187
      %v2208 = vpack.c.b16 %v2192, %v2188
      %v2209 = vpack.c.b16 %v2193, %v2189
      %v2210 = vpack.c.b16 %v2194, %v2190
      %2211 = vrot.lane.b32.xlu0 %v2195, 102
      %v2212 = vpop.permute.xlu0 %2211
      %2213 = vrot.lane.b32.xlu0 %v2196, 102
      %v2214 = vpop.permute.xlu0 %2213
      %2215 = vrot.lane.b32.xlu0 %v2197, 102
      %v2216 = vpop.permute.xlu0 %2215
      %2217 = vrot.lane.b32.xlu0 %v2198, 102
      %v2218 = vpop.permute.xlu0 %2217
      %2219 = vrot.lane.b32.xlu0 %v2199, 102
      %v2220 = vpop.permute.xlu0 %2219
      %2221 = vrot.lane.b32.xlu0 %v2200, 102
      %v2222 = vpop.permute.xlu0 %2221
      %2223 = vrot.lane.b32.xlu0 %v2201, 102
      %v2224 = vpop.permute.xlu0 %2223
      %2225 = vrot.lane.b32.xlu0 %v2202, 102
      %v2226 = vpop.permute.xlu0 %2225
      %2227 = vrot.lane.b32.xlu0 %v2203, 102
      %v2228 = vpop.permute.xlu0 %2227
      %2229 = vrot.lane.b32.xlu0 %v2204, 102
      %v2230 = vpop.permute.xlu0 %2229
      %2231 = vrot.lane.b32.xlu0 %v2205, 102
      %v2232 = vpop.permute.xlu0 %2231
      %2233 = vrot.lane.b32.xlu0 %v2206, 102
      %v2234 = vpop.permute.xlu0 %2233
      %2235 = vrot.lane.b32.xlu0 %v2207, 102
      %v2236 = vpop.permute.xlu0 %2235
      %2237 = vrot.lane.b32.xlu0 %v2208, 102
      %v2238 = vpop.permute.xlu0 %2237
      %2239 = vrot.lane.b32.xlu0 %v2209, 102
      %v2240 = vpop.permute.xlu0 %2239
      %2241 = vrot.lane.b32.xlu0 %v2210, 102
      %v2242 = vpop.permute.xlu0 %2241
      %vm2243 = vcmask 834560
      %v2244 = vsel %vm2243, %v2212, %v2214
      %v2245 = vsel %vm2243, %v2214, %v2216
      %v2246 = vsel %vm2243, %v2216, %v2218
      %v2247 = vsel %vm2243, %v2220, %v2222
      %v2248 = vsel %vm2243, %v2222, %v2224
      %v2249 = vsel %vm2243, %v2224, %v2226
      %v2250 = vsel %vm2243, %v2228, %v2230
      %v2251 = vsel %vm2243, %v2230, %v2232
      %v2252 = vsel %vm2243, %v2232, %v2234
      %v2253 = vsel %vm2243, %v2236, %v2238
      %v2254 = vsel %vm2243, %v2238, %v2240
      %v2255 = vsel %vm2243, %v2240, %v2242
      %2256 = vrot.lane.b32.xlu0 %v2195, 80
      %v2257 = vpop.permute.xlu0 %2256
      %2258 = vrot.lane.b32.xlu0 %v2196, 80
      %v2259 = vpop.permute.xlu0 %2258
      %2260 = vrot.lane.b32.xlu0 %v2197, 80
      %v2261 = vpop.permute.xlu0 %2260
      %2262 = vrot.lane.b32.xlu0 %v2198, 80
      %v2263 = vpop.permute.xlu0 %2262
      %2264 = vrot.lane.b32.xlu0 %v2199, 80
      %v2265 = vpop.permute.xlu0 %2264
      %2266 = vrot.lane.b32.xlu0 %v2200, 80
      %v2267 = vpop.permute.xlu0 %2266
      %2268 = vrot.lane.b32.xlu0 %v2201, 80
      %v2269 = vpop.permute.xlu0 %2268
      %2270 = vrot.lane.b32.xlu0 %v2202, 80
      %v2271 = vpop.permute.xlu0 %2270
      %2272 = vrot.lane.b32.xlu0 %v2203, 80
      %v2273 = vpop.permute.xlu0 %2272
      %2274 = vrot.lane.b32.xlu0 %v2204, 80
      %v2275 = vpop.permute.xlu0 %2274
      %2276 = vrot.lane.b32.xlu0 %v2205, 80
      %v2277 = vpop.permute.xlu0 %2276
      %2278 = vrot.lane.b32.xlu0 %v2206, 80
      %v2279 = vpop.permute.xlu0 %2278
      %2280 = vrot.lane.b32.xlu0 %v2207, 80
      %v2281 = vpop.permute.xlu0 %2280
      %2282 = vrot.lane.b32.xlu0 %v2208, 80
      %v2283 = vpop.permute.xlu0 %2282
      %2284 = vrot.lane.b32.xlu0 %v2209, 80
      %v2285 = vpop.permute.xlu0 %2284
      %2286 = vrot.lane.b32.xlu0 %v2210, 80
      %v2287 = vpop.permute.xlu0 %2286
      %vm2288 = vcmask 654336
      %v2289 = vsel %vm2288, %v2257, %v2259
      %v2290 = vsel %vm2288, %v2259, %v2261
      %v2291 = vsel %vm2288, %v2261, %v2263
      %v2292 = vsel %vm2288, %v2265, %v2267
      %v2293 = vsel %vm2288, %v2267, %v2269
      %v2294 = vsel %vm2288, %v2269, %v2271
      %v2295 = vsel %vm2288, %v2273, %v2275
      %v2296 = vsel %vm2288, %v2275, %v2277
      %v2297 = vsel %vm2288, %v2277, %v2279
      %v2298 = vsel %vm2288, %v2281, %v2283
      %v2299 = vsel %vm2288, %v2283, %v2285
      %v2300 = vsel %vm2288, %v2285, %v2287
      %2301 = vrot.lane.b32.xlu0 %v2195, 79
      %v2302 = vpop.permute.xlu0 %2301
      %2303 = vrot.lane.b32.xlu0 %v2196, 79
      %v2304 = vpop.permute.xlu0 %2303
      %2305 = vrot.lane.b32.xlu0 %v2197, 79
      %v2306 = vpop.permute.xlu0 %2305
      %2307 = vrot.lane.b32.xlu0 %v2198, 79
      %v2308 = vpop.permute.xlu0 %2307
      %2309 = vrot.lane.b32.xlu0 %v2199, 79
      %v2310 = vpop.permute.xlu0 %2309
      %2311 = vrot.lane.b32.xlu0 %v2200, 79
      %v2312 = vpop.permute.xlu0 %2311
      %2313 = vrot.lane.b32.xlu0 %v2201, 79
      %v2314 = vpop.permute.xlu0 %2313
      %2315 = vrot.lane.b32.xlu0 %v2202, 79
      %v2316 = vpop.permute.xlu0 %2315
      %2317 = vrot.lane.b32.xlu0 %v2203, 79
      %v2318 = vpop.permute.xlu0 %2317
      %2319 = vrot.lane.b32.xlu0 %v2204, 79
      %v2320 = vpop.permute.xlu0 %2319
      %2321 = vrot.lane.b32.xlu0 %v2205, 79
      %v2322 = vpop.permute.xlu0 %2321
      %2323 = vrot.lane.b32.xlu0 %v2206, 79
      %v2324 = vpop.permute.xlu0 %2323
      %2325 = vrot.lane.b32.xlu0 %v2207, 79
      %v2326 = vpop.permute.xlu0 %2325
      %2327 = vrot.lane.b32.xlu0 %v2208, 79
      %v2328 = vpop.permute.xlu0 %2327
      %2329 = vrot.lane.b32.xlu0 %v2209, 79
      %v2330 = vpop.permute.xlu0 %2329
      %2331 = vrot.lane.b32.xlu0 %v2210, 79
      %v2332 = vpop.permute.xlu0 %2331
      %vm2333 = vcmask 646144
      %v2334 = vsel %vm2333, %v2302, %v2304
      %v2335 = vsel %vm2333, %v2304, %v2306
      %v2336 = vsel %vm2333, %v2306, %v2308
      %v2337 = vsel %vm2333, %v2310, %v2312
      %v2338 = vsel %vm2333, %v2312, %v2314
      %v2339 = vsel %vm2333, %v2314, %v2316
      %v2340 = vsel %vm2333, %v2318, %v2320
      %v2341 = vsel %vm2333, %v2320, %v2322
      %v2342 = vsel %vm2333, %v2322, %v2324
      %v2343 = vsel %vm2333, %v2326, %v2328
      %v2344 = vsel %vm2333, %v2328, %v2330
      %v2345 = vsel %vm2333, %v2330, %v2332
      %2346 = vrot.lane.b32.xlu0 %v2195, 78
      %v2347 = vpop.permute.xlu0 %2346
      %2348 = vrot.lane.b32.xlu0 %v2196, 78
      %v2349 = vpop.permute.xlu0 %2348
      %2350 = vrot.lane.b32.xlu0 %v2197, 78
      %v2351 = vpop.permute.xlu0 %2350
      %2352 = vrot.lane.b32.xlu0 %v2198, 78
      %v2353 = vpop.permute.xlu0 %2352
      %2354 = vrot.lane.b32.xlu0 %v2199, 78
      %v2355 = vpop.permute.xlu0 %2354
      %2356 = vrot.lane.b32.xlu0 %v2200, 78
      %v2357 = vpop.permute.xlu0 %2356
      %2358 = vrot.lane.b32.xlu0 %v2201, 78
      %v2359 = vpop.permute.xlu0 %2358
      %2360 = vrot.lane.b32.xlu0 %v2202, 78
      %v2361 = vpop.permute.xlu0 %2360
      %2362 = vrot.lane.b32.xlu0 %v2203, 78
      %v2363 = vpop.permute.xlu0 %2362
      %2364 = vrot.lane.b32.xlu0 %v2204, 78
      %v2365 = vpop.permute.xlu0 %2364
      %2366 = vrot.lane.b32.xlu0 %v2205, 78
      %v2367 = vpop.permute.xlu0 %2366
      %2368 = vrot.lane.b32.xlu0 %v2206, 78
      %v2369 = vpop.permute.xlu0 %2368
      %2370 = vrot.lane.b32.xlu0 %v2207, 78
      %v2371 = vpop.permute.xlu0 %2370
      %2372 = vrot.lane.b32.xlu0 %v2208, 78
      %v2373 = vpop.permute.xlu0 %2372
      %2374 = vrot.lane.b32.xlu0 %v2209, 78
      %v2375 = vpop.permute.xlu0 %2374
      %2376 = vrot.lane.b32.xlu0 %v2210, 78
      %v2377 = vpop.permute.xlu0 %2376
      %vm2378 = vcmask 637952
      %v2379 = vsel %vm2378, %v2347, %v2349
      %v2380 = vsel %vm2378, %v2349, %v2351
      %v2381 = vsel %vm2378, %v2351, %v2353
      %v2382 = vsel %vm2378, %v2355, %v2357
      %v2383 = vsel %vm2378, %v2357, %v2359
      %v2384 = vsel %vm2378, %v2359, %v2361
      %v2385 = vsel %vm2378, %v2363, %v2365
      %v2386 = vsel %vm2378, %v2365, %v2367
      %v2387 = vsel %vm2378, %v2367, %v2369
      %v2388 = vsel %vm2378, %v2371, %v2373
      %v2389 = vsel %vm2378, %v2373, %v2375
      %v2390 = vsel %vm2378, %v2375, %v2377
      %v2391 = vld [vmem:[%s3] sm:$0xff]
      %v2392 = vld [vmem:[%s3 + $0x8] sm:$0xff]
      %v2393 = vld [vmem:[%s3 + $0x10] sm:$0xf]
      %v2394 = vld [vmem:[%s3 + $0x14] sm:$0xff]
      %v2395 = vld [vmem:[%s3 + $0x1c] sm:$0xff]
      %v2396 = vld [vmem:[%s3 + $0x24] sm:$0xf]
      %v2397 = vld [vmem:[%s3 + $0x28] sm:$0xff]
      %v2398 = vld [vmem:[%s3 + $0x30] sm:$0xff]
      %v2399 = vld [vmem:[%s3 + $0x38] sm:$0xf]
      %v2400 = vld [vmem:[%s3 + $0x3c] sm:$0xff]
      %v2401 = vld [vmem:[%s3 + $0x44] sm:$0xff]
      %v2402 = vld [vmem:[%s3 + $0x4c] sm:$0xf]
      %v2403 = vld [vmem:[%s3 + $0x50] sm:$0xff]
      %v2404 = vld [vmem:[%s3 + $0x58] sm:$0xff]
      %v2405 = vld [vmem:[%s3 + $0x60] sm:$0xf]
      %v2406 = vld [vmem:[%s3 + $0x64] sm:$0xff]
      %v2407 = vld [vmem:[%s3 + $0x6c] sm:$0xff]
      %v2408 = vld [vmem:[%s3 + $0x74] sm:$0xf]
      %v2409 = vld [vmem:[%s3 + $0x78] sm:$0xff]
      %v2410 = vld [vmem:[%s3 + $0x80] sm:$0xff]
      %v2411 = vld [vmem:[%s3 + $0x88] sm:$0xf]
      %v2412 = vld [vmem:[%s3 + $0x8c] sm:$0xff]
      %v2413 = vld [vmem:[%s3 + $0x94] sm:$0xff]
      %v2414 = vld [vmem:[%s3 + $0x9c] sm:$0xf]
      %s2415 = scalar_lea.vmem %s4, 64
      %v2416 = vld [vmem:[%s2415] sm:$0xff]
      %v2417 = vld [vmem:[%s2415 + $0x8] sm:$0xff]
      %v2418 = vld [vmem:[%s2415 + $0x10] sm:$0xff]
      %v2419 = vld [vmem:[%s2415 + $0x18] sm:$0xff]
      %v2420 = vld [vmem:[%s2415 + $0x20] sm:$0xff]
      %v2421 = vld [vmem:[%s2415 + $0x28] sm:$0xff]
      %v2422 = vld [vmem:[%s2415 + $0x30] sm:$0xff]
      %v2423 = vld [vmem:[%s2415 + $0x38] sm:$0xff]
      %2425 = vset.pattern.permute.xlu0 0
      %2426 = vperm.xlu0 %2425, %v2416
      %v2427 = vpop.permute.xlu0 %2426
      %2430 = vset.pattern.permute.xlu0 0
      %2431 = vperm.xlu0 %2430, %v2417
      %v2432 = vpop.permute.xlu0 %2431
      %2435 = vset.pattern.permute.xlu0 0
      %2436 = vperm.xlu0 %2435, %v2418
      %v2437 = vpop.permute.xlu0 %2436
      %2440 = vset.pattern.permute.xlu0 0
      %2441 = vperm.xlu0 %2440, %v2419
      %v2442 = vpop.permute.xlu0 %2441
      %2445 = vset.pattern.permute.xlu0 0
      %2446 = vperm.xlu0 %2445, %v2420
      %v2447 = vpop.permute.xlu0 %2446
      %2450 = vset.pattern.permute.xlu0 0
      %2451 = vperm.xlu0 %2450, %v2421
      %v2452 = vpop.permute.xlu0 %2451
      %2455 = vset.pattern.permute.xlu0 0
      %2456 = vperm.xlu0 %2455, %v2422
      %v2457 = vpop.permute.xlu0 %2456
      %2460 = vset.pattern.permute.xlu0 0
      %2461 = vperm.xlu0 %2460, %v2423
      %v2462 = vpop.permute.xlu0 %2461
      %v2488 = vunpack.c.l.b16 %v2391
      %v2489 = vunpack.c.h.b16 %v2391
      %v2490 = vunpack.c.l.b16 %v2392
      %v2491 = vunpack.c.h.b16 %v2392
      %v2492 = vunpack.c.l.b16 %v2393
      %v2493 = vunpack.c.l.b16 %v2394
      %v2494 = vunpack.c.h.b16 %v2394
      %v2495 = vunpack.c.l.b16 %v2395
      %v2496 = vunpack.c.h.b16 %v2395
      %v2497 = vunpack.c.l.b16 %v2396
      %v2498 = vunpack.c.l.b16 %v2397
      %v2499 = vunpack.c.h.b16 %v2397
      %v2500 = vunpack.c.l.b16 %v2398
      %v2501 = vunpack.c.h.b16 %v2398
      %v2502 = vunpack.c.l.b16 %v2399
      %v2503 = vunpack.c.l.b16 %v2400
      %v2504 = vunpack.c.h.b16 %v2400
      %v2505 = vunpack.c.l.b16 %v2401
      %v2506 = vunpack.c.h.b16 %v2401
      %v2507 = vunpack.c.l.b16 %v2402
      %v2508 = vunpack.c.l.b16 %v2403
      %v2509 = vunpack.c.h.b16 %v2403
      %v2510 = vunpack.c.l.b16 %v2404
      %v2511 = vunpack.c.h.b16 %v2404
      %v2512 = vunpack.c.l.b16 %v2405
      %v2513 = vunpack.c.l.b16 %v2406
      %v2514 = vunpack.c.h.b16 %v2406
      %v2515 = vunpack.c.l.b16 %v2407
      %v2516 = vunpack.c.h.b16 %v2407
      %v2517 = vunpack.c.l.b16 %v2408
      %v2518 = vunpack.c.l.b16 %v2409
      %v2519 = vunpack.c.h.b16 %v2409
      %v2520 = vunpack.c.l.b16 %v2410
      %v2521 = vunpack.c.h.b16 %v2410
      %v2522 = vunpack.c.l.b16 %v2411
      %v2523 = vunpack.c.l.b16 %v2412
      %v2524 = vunpack.c.h.b16 %v2412
      %v2525 = vunpack.c.l.b16 %v2413
      %v2526 = vunpack.c.h.b16 %v2413
      %v2527 = vunpack.c.l.b16 %v2414
      %v2528 = vpack.c.b16 %v2493, %v2488
      %v2529 = vpack.c.b16 %v2494, %v2489
      %v2530 = vpack.c.b16 %v2495, %v2490
      %v2531 = vpack.c.b16 %v2496, %v2491
      %v2532 = vpack.c.b16 %v2497, %v2492
      %v2533 = vpack.c.b16 %v2503, %v2498
      %v2534 = vpack.c.b16 %v2504, %v2499
      %v2535 = vpack.c.b16 %v2505, %v2500
      %v2536 = vpack.c.b16 %v2506, %v2501
      %v2537 = vpack.c.b16 %v2507, %v2502
      %v2538 = vpack.c.b16 %v2513, %v2508
      %v2539 = vpack.c.b16 %v2514, %v2509
      %v2540 = vpack.c.b16 %v2515, %v2510
      %v2541 = vpack.c.b16 %v2516, %v2511
      %v2542 = vpack.c.b16 %v2517, %v2512
      %v2543 = vpack.c.b16 %v2523, %v2518
      %v2544 = vpack.c.b16 %v2524, %v2519
      %v2545 = vpack.c.b16 %v2525, %v2520
      %v2546 = vpack.c.b16 %v2526, %v2521
      %v2547 = vpack.c.b16 %v2527, %v2522
      %2564 = vrot.lane.b32.xlu0 %v1911, 25
      %v2565 = vpop.permute.xlu0 %2564
      %2566 = vrot.lane.b32.xlu0 %v1912, 25
      %v2567 = vpop.permute.xlu0 %2566
      %2568 = vrot.lane.b32.xlu0 %v1913, 25
      %v2569 = vpop.permute.xlu0 %2568
      %2570 = vrot.lane.b32.xlu0 %v1914, 25
      %v2571 = vpop.permute.xlu0 %2570
      %2572 = vrot.lane.b32.xlu0 %v1915, 25
      %v2573 = vpop.permute.xlu0 %2572
      %2574 = vrot.lane.b32.xlu0 %v1916, 25
      %v2575 = vpop.permute.xlu0 %2574
      %2576 = vrot.lane.b32.xlu0 %v1917, 25
      %v2577 = vpop.permute.xlu0 %2576
      %2578 = vrot.lane.b32.xlu0 %v1918, 25
      %v2579 = vpop.permute.xlu0 %2578
      %2580 = vrot.lane.b32.xlu0 %v1919, 25
      %v2581 = vpop.permute.xlu0 %2580
      %2582 = vrot.lane.b32.xlu0 %v1920, 25
      %v2583 = vpop.permute.xlu0 %2582
      %2584 = vrot.lane.b32.xlu0 %v1921, 25
      %v2585 = vpop.permute.xlu0 %2584
      %2586 = vrot.lane.b32.xlu0 %v1922, 25
      %v2587 = vpop.permute.xlu0 %2586
      %2588 = vrot.lane.b32.xlu0 %v1923, 25
      %v2589 = vpop.permute.xlu0 %2588
      %2590 = vrot.lane.b32.xlu0 %v1924, 25
      %v2591 = vpop.permute.xlu0 %2590
      %2592 = vrot.lane.b32.xlu0 %v1925, 25
      %v2593 = vpop.permute.xlu0 %2592
      %2594 = vrot.lane.b32.xlu0 %v1926, 25
      %v2595 = vpop.permute.xlu0 %2594
      %2596 = vrot.lane.b32.xlu0 %v1960, 25
      %v2597 = vpop.permute.xlu0 %2596
      %2598 = vrot.lane.b32.xlu0 %v1961, 25
      %v2599 = vpop.permute.xlu0 %2598
      %2600 = vrot.lane.b32.xlu0 %v1962, 25
      %v2601 = vpop.permute.xlu0 %2600
      %2602 = vrot.lane.b32.xlu0 %v1934, 25
      %v2603 = vpop.permute.xlu0 %2602
      %2604 = vrot.lane.b32.xlu0 %v1963, 25
      %v2605 = vpop.permute.xlu0 %2604
      %2606 = vrot.lane.b32.xlu0 %v1964, 25
      %v2607 = vpop.permute.xlu0 %2606
      %2608 = vrot.lane.b32.xlu0 %v1965, 25
      %v2609 = vpop.permute.xlu0 %2608
      %2610 = vrot.lane.b32.xlu0 %v1942, 25
      %v2611 = vpop.permute.xlu0 %2610
      %2612 = vrot.lane.b32.xlu0 %v1966, 25
      %v2613 = vpop.permute.xlu0 %2612
      %2614 = vrot.lane.b32.xlu0 %v1967, 25
      %v2615 = vpop.permute.xlu0 %2614
      %2616 = vrot.lane.b32.xlu0 %v1968, 25
      %v2617 = vpop.permute.xlu0 %2616
      %2618 = vrot.lane.b32.xlu0 %v1950, 25
      %v2619 = vpop.permute.xlu0 %2618
      %2620 = vrot.lane.b32.xlu0 %v1969, 25
      %v2621 = vpop.permute.xlu0 %2620
      %2622 = vrot.lane.b32.xlu0 %v1970, 25
      %v2623 = vpop.permute.xlu0 %2622
      %2624 = vrot.lane.b32.xlu0 %v1971, 25
      %v2625 = vpop.permute.xlu0 %2624
      %2626 = vrot.lane.b32.xlu0 %v1958, 25
      %v2627 = vpop.permute.xlu0 %2626
      %2628 = vrot.lane.b32.xlu0 %v2005, 25
      %v2629 = vpop.permute.xlu0 %2628
      %2630 = vrot.lane.b32.xlu0 %v2006, 25
      %v2631 = vpop.permute.xlu0 %2630
      %2632 = vrot.lane.b32.xlu0 %v2007, 25
      %v2633 = vpop.permute.xlu0 %2632
      %2634 = vrot.lane.b32.xlu0 %v1979, 25
      %v2635 = vpop.permute.xlu0 %2634
      %2636 = vrot.lane.b32.xlu0 %v2008, 25
      %v2637 = vpop.permute.xlu0 %2636
      %2638 = vrot.lane.b32.xlu0 %v2009, 25
      %v2639 = vpop.permute.xlu0 %2638
      %2640 = vrot.lane.b32.xlu0 %v2010, 25
      %v2641 = vpop.permute.xlu0 %2640
      %2642 = vrot.lane.b32.xlu0 %v1987, 25
      %v2643 = vpop.permute.xlu0 %2642
      %2644 = vrot.lane.b32.xlu0 %v2011, 25
      %v2645 = vpop.permute.xlu0 %2644
      %2646 = vrot.lane.b32.xlu0 %v2012, 25
      %v2647 = vpop.permute.xlu0 %2646
      %2648 = vrot.lane.b32.xlu0 %v2013, 25
      %v2649 = vpop.permute.xlu0 %2648
      %2650 = vrot.lane.b32.xlu0 %v1995, 25
      %v2651 = vpop.permute.xlu0 %2650
      %2652 = vrot.lane.b32.xlu0 %v2014, 25
      %v2653 = vpop.permute.xlu0 %2652
      %2654 = vrot.lane.b32.xlu0 %v2015, 25
      %v2655 = vpop.permute.xlu0 %2654
      %2656 = vrot.lane.b32.xlu0 %v2016, 25
      %v2657 = vpop.permute.xlu0 %2656
      %2658 = vrot.lane.b32.xlu0 %v2003, 25
      %v2659 = vpop.permute.xlu0 %2658
      %2660 = vrot.lane.b32.xlu0 %v2050, 25
      %v2661 = vpop.permute.xlu0 %2660
      %2662 = vrot.lane.b32.xlu0 %v2051, 25
      %v2663 = vpop.permute.xlu0 %2662
      %2664 = vrot.lane.b32.xlu0 %v2052, 25
      %v2665 = vpop.permute.xlu0 %2664
      %2666 = vrot.lane.b32.xlu0 %v2024, 25
      %v2667 = vpop.permute.xlu0 %2666
      %2668 = vrot.lane.b32.xlu0 %v2053, 25
      %v2669 = vpop.permute.xlu0 %2668
      %2670 = vrot.lane.b32.xlu0 %v2054, 25
      %v2671 = vpop.permute.xlu0 %2670
      %2672 = vrot.lane.b32.xlu0 %v2055, 25
      %v2673 = vpop.permute.xlu0 %2672
      %2674 = vrot.lane.b32.xlu0 %v2032, 25
      %v2675 = vpop.permute.xlu0 %2674
      %2676 = vrot.lane.b32.xlu0 %v2056, 25
      %v2677 = vpop.permute.xlu0 %2676
      %2678 = vrot.lane.b32.xlu0 %v2057, 25
      %v2679 = vpop.permute.xlu0 %2678
      %2680 = vrot.lane.b32.xlu0 %v2058, 25
      %v2681 = vpop.permute.xlu0 %2680
      %2682 = vrot.lane.b32.xlu0 %v2040, 25
      %v2683 = vpop.permute.xlu0 %2682
      %2684 = vrot.lane.b32.xlu0 %v2059, 25
      %v2685 = vpop.permute.xlu0 %2684
      %2686 = vrot.lane.b32.xlu0 %v2060, 25
      %v2687 = vpop.permute.xlu0 %2686
      %2688 = vrot.lane.b32.xlu0 %v2061, 25
      %v2689 = vpop.permute.xlu0 %2688
      %2690 = vrot.lane.b32.xlu0 %v2048, 25
      %v2691 = vpop.permute.xlu0 %2690
      %2692 = vrot.lane.b32.xlu0 %v2115, 25
      %v2693 = vpop.permute.xlu0 %2692
      %2694 = vrot.lane.b32.xlu0 %v2139, 25
      %v2695 = vpop.permute.xlu0 %2694
      %2696 = vrot.lane.b32.xlu0 %v2140, 25
      %v2697 = vpop.permute.xlu0 %2696
      %2698 = vrot.lane.b32.xlu0 %v2119, 25
      %v2699 = vpop.permute.xlu0 %2698
      %2700 = vrot.lane.b32.xlu0 %v2121, 25
      %v2701 = vpop.permute.xlu0 %2700
      %2702 = vrot.lane.b32.xlu0 %v2141, 25
      %v2703 = vpop.permute.xlu0 %2702
      %2704 = vrot.lane.b32.xlu0 %v2142, 25
      %v2705 = vpop.permute.xlu0 %2704
      %2706 = vrot.lane.b32.xlu0 %v2125, 25
      %v2707 = vpop.permute.xlu0 %2706
      %2708 = vrot.lane.b32.xlu0 %v2127, 25
      %v2709 = vpop.permute.xlu0 %2708
      %2710 = vrot.lane.b32.xlu0 %v2143, 25
      %v2711 = vpop.permute.xlu0 %2710
      %2712 = vrot.lane.b32.xlu0 %v2144, 25
      %v2713 = vpop.permute.xlu0 %2712
      %2714 = vrot.lane.b32.xlu0 %v2131, 25
      %v2715 = vpop.permute.xlu0 %2714
      %2716 = vrot.lane.b32.xlu0 %v2133, 25
      %v2717 = vpop.permute.xlu0 %2716
      %2718 = vrot.lane.b32.xlu0 %v2145, 25
      %v2719 = vpop.permute.xlu0 %2718
      %2720 = vrot.lane.b32.xlu0 %v2146, 25
      %v2721 = vpop.permute.xlu0 %2720
      %2722 = vrot.lane.b32.xlu0 %v2137, 25
      %v2723 = vpop.permute.xlu0 %2722
      %2724 = vrot.lane.b32.xlu0 %v2212, 25
      %v2725 = vpop.permute.xlu0 %2724
      %2726 = vrot.lane.b32.xlu0 %v2244, 25
      %v2727 = vpop.permute.xlu0 %2726
      %2728 = vrot.lane.b32.xlu0 %v2245, 25
      %v2729 = vpop.permute.xlu0 %2728
      %2730 = vrot.lane.b32.xlu0 %v2246, 25
      %v2731 = vpop.permute.xlu0 %2730
      %2732 = vrot.lane.b32.xlu0 %v2220, 25
      %v2733 = vpop.permute.xlu0 %2732
      %2734 = vrot.lane.b32.xlu0 %v2247, 25
      %v2735 = vpop.permute.xlu0 %2734
      %2736 = vrot.lane.b32.xlu0 %v2248, 25
      %v2737 = vpop.permute.xlu0 %2736
      %2738 = vrot.lane.b32.xlu0 %v2249, 25
      %v2739 = vpop.permute.xlu0 %2738
      %2740 = vrot.lane.b32.xlu0 %v2228, 25
      %v2741 = vpop.permute.xlu0 %2740
      %2742 = vrot.lane.b32.xlu0 %v2250, 25
      %v2743 = vpop.permute.xlu0 %2742
      %2744 = vrot.lane.b32.xlu0 %v2251, 25
      %v2745 = vpop.permute.xlu0 %2744
      %2746 = vrot.lane.b32.xlu0 %v2252, 25
      %v2747 = vpop.permute.xlu0 %2746
      %2748 = vrot.lane.b32.xlu0 %v2236, 25
      %v2749 = vpop.permute.xlu0 %2748
      %2750 = vrot.lane.b32.xlu0 %v2253, 25
      %v2751 = vpop.permute.xlu0 %2750
      %2752 = vrot.lane.b32.xlu0 %v2254, 25
      %v2753 = vpop.permute.xlu0 %2752
      %2754 = vrot.lane.b32.xlu0 %v2255, 25
      %v2755 = vpop.permute.xlu0 %2754
      %2756 = vrot.lane.b32.xlu0 %v2257, 25
      %v2757 = vpop.permute.xlu0 %2756
      %2758 = vrot.lane.b32.xlu0 %v2289, 25
      %v2759 = vpop.permute.xlu0 %2758
      %2760 = vrot.lane.b32.xlu0 %v2290, 25
      %v2761 = vpop.permute.xlu0 %2760
      %2762 = vrot.lane.b32.xlu0 %v2291, 25
      %v2763 = vpop.permute.xlu0 %2762
      %2764 = vrot.lane.b32.xlu0 %v2265, 25
      %v2765 = vpop.permute.xlu0 %2764
      %2766 = vrot.lane.b32.xlu0 %v2292, 25
      %v2767 = vpop.permute.xlu0 %2766
      %2768 = vrot.lane.b32.xlu0 %v2293, 25
      %v2769 = vpop.permute.xlu0 %2768
      %2770 = vrot.lane.b32.xlu0 %v2294, 25
      %v2771 = vpop.permute.xlu0 %2770
      %2772 = vrot.lane.b32.xlu0 %v2273, 25
      %v2773 = vpop.permute.xlu0 %2772
      %2774 = vrot.lane.b32.xlu0 %v2295, 25
      %v2775 = vpop.permute.xlu0 %2774
      %2776 = vrot.lane.b32.xlu0 %v2296, 25
      %v2777 = vpop.permute.xlu0 %2776
      %2778 = vrot.lane.b32.xlu0 %v2297, 25
      %v2779 = vpop.permute.xlu0 %2778
      %2780 = vrot.lane.b32.xlu0 %v2281, 25
      %v2781 = vpop.permute.xlu0 %2780
      %2782 = vrot.lane.b32.xlu0 %v2298, 25
      %v2783 = vpop.permute.xlu0 %2782
      %2784 = vrot.lane.b32.xlu0 %v2299, 25
      %v2785 = vpop.permute.xlu0 %2784
      %2786 = vrot.lane.b32.xlu0 %v2300, 25
      %v2787 = vpop.permute.xlu0 %2786
      %2788 = vrot.lane.b32.xlu0 %v2302, 25
      %v2789 = vpop.permute.xlu0 %2788
      %2790 = vrot.lane.b32.xlu0 %v2334, 25
      %v2791 = vpop.permute.xlu0 %2790
      %2792 = vrot.lane.b32.xlu0 %v2335, 25
      %v2793 = vpop.permute.xlu0 %2792
      %2794 = vrot.lane.b32.xlu0 %v2336, 25
      %v2795 = vpop.permute.xlu0 %2794
      %2796 = vrot.lane.b32.xlu0 %v2310, 25
      %v2797 = vpop.permute.xlu0 %2796
      %2798 = vrot.lane.b32.xlu0 %v2337, 25
      %v2799 = vpop.permute.xlu0 %2798
      %2800 = vrot.lane.b32.xlu0 %v2338, 25
      %v2801 = vpop.permute.xlu0 %2800
      %2802 = vrot.lane.b32.xlu0 %v2339, 25
      %v2803 = vpop.permute.xlu0 %2802
      %2804 = vrot.lane.b32.xlu0 %v2318, 25
      %v2805 = vpop.permute.xlu0 %2804
      %2806 = vrot.lane.b32.xlu0 %v2340, 25
      %v2807 = vpop.permute.xlu0 %2806
      %2808 = vrot.lane.b32.xlu0 %v2341, 25
      %v2809 = vpop.permute.xlu0 %2808
      %2810 = vrot.lane.b32.xlu0 %v2342, 25
      %v2811 = vpop.permute.xlu0 %2810
      %2812 = vrot.lane.b32.xlu0 %v2326, 25
      %v2813 = vpop.permute.xlu0 %2812
      %2814 = vrot.lane.b32.xlu0 %v2343, 25
      %v2815 = vpop.permute.xlu0 %2814
      %2816 = vrot.lane.b32.xlu0 %v2344, 25
      %v2817 = vpop.permute.xlu0 %2816
      %2818 = vrot.lane.b32.xlu0 %v2345, 25
      %v2819 = vpop.permute.xlu0 %2818
      %2820 = vrot.lane.b32.xlu0 %v2347, 25
      %v2821 = vpop.permute.xlu0 %2820
      %2822 = vrot.lane.b32.xlu0 %v2379, 25
      %v2823 = vpop.permute.xlu0 %2822
      %2824 = vrot.lane.b32.xlu0 %v2380, 25
      %v2825 = vpop.permute.xlu0 %2824
      %2826 = vrot.lane.b32.xlu0 %v2381, 25
      %v2827 = vpop.permute.xlu0 %2826
      %2828 = vrot.lane.b32.xlu0 %v2355, 25
      %v2829 = vpop.permute.xlu0 %2828
      %2830 = vrot.lane.b32.xlu0 %v2382, 25
      %v2831 = vpop.permute.xlu0 %2830
      %2832 = vrot.lane.b32.xlu0 %v2383, 25
      %v2833 = vpop.permute.xlu0 %2832
      %2834 = vrot.lane.b32.xlu0 %v2384, 25
      %v2835 = vpop.permute.xlu0 %2834
      %2836 = vrot.lane.b32.xlu0 %v2363, 25
      %v2837 = vpop.permute.xlu0 %2836
      %2838 = vrot.lane.b32.xlu0 %v2385, 25
      %v2839 = vpop.permute.xlu0 %2838
      %2840 = vrot.lane.b32.xlu0 %v2386, 25
      %v2841 = vpop.permute.xlu0 %2840
      %2842 = vrot.lane.b32.xlu0 %v2387, 25
      %v2843 = vpop.permute.xlu0 %2842
      %2844 = vrot.lane.b32.xlu0 %v2371, 25
      %v2845 = vpop.permute.xlu0 %2844
      %2846 = vrot.lane.b32.xlu0 %v2388, 25
      %v2847 = vpop.permute.xlu0 %2846
      %2848 = vrot.lane.b32.xlu0 %v2389, 25
      %v2849 = vpop.permute.xlu0 %2848
      %2850 = vrot.lane.b32.xlu0 %v2390, 25
      %v2851 = vpop.permute.xlu0 %2850
      %vm2852 = vcmask 203776
      %v2853 = vsel %vm2852, %v2565, %v2567
      %v2854 = vsel %vm2852, %v2567, %v2569
      %v2855 = vsel %vm2852, %v2569, %v2571
      %v2856 = vsel %vm2852, %v2573, %v2575
      %v2857 = vsel %vm2852, %v2575, %v2577
      %v2858 = vsel %vm2852, %v2577, %v2579
      %v2859 = vsel %vm2852, %v2581, %v2583
      %v2860 = vsel %vm2852, %v2583, %v2585
      %v2861 = vsel %vm2852, %v2585, %v2587
      %v2862 = vsel %vm2852, %v2589, %v2591
      %v2863 = vsel %vm2852, %v2591, %v2593
      %v2864 = vsel %vm2852, %v2593, %v2595
      %v2865 = vsel %vm2852, %v2597, %v2599
      %v2866 = vsel %vm2852, %v2599, %v2601
      %v2867 = vsel %vm2852, %v2601, %v2603
      %v2868 = vsel %vm2852, %v2605, %v2607
      %v2869 = vsel %vm2852, %v2607, %v2609
      %v2870 = vsel %vm2852, %v2609, %v2611
      %v2871 = vsel %vm2852, %v2613, %v2615
      %v2872 = vsel %vm2852, %v2615, %v2617
      %v2873 = vsel %vm2852, %v2617, %v2619
      %v2874 = vsel %vm2852, %v2621, %v2623
      %v2875 = vsel %vm2852, %v2623, %v2625
      %v2876 = vsel %vm2852, %v2625, %v2627
      %v2877 = vsel %vm2852, %v2629, %v2631
      %v2878 = vsel %vm2852, %v2631, %v2633
      %v2879 = vsel %vm2852, %v2633, %v2635
      %v2880 = vsel %vm2852, %v2637, %v2639
      %v2881 = vsel %vm2852, %v2639, %v2641
      %v2882 = vsel %vm2852, %v2641, %v2643
      %v2883 = vsel %vm2852, %v2645, %v2647
      %v2884 = vsel %vm2852, %v2647, %v2649
      %v2885 = vsel %vm2852, %v2649, %v2651
      %v2886 = vsel %vm2852, %v2653, %v2655
      %v2887 = vsel %vm2852, %v2655, %v2657
      %v2888 = vsel %vm2852, %v2657, %v2659
      %v2889 = vsel %vm2852, %v2661, %v2663
      %v2890 = vsel %vm2852, %v2663, %v2665
      %v2891 = vsel %vm2852, %v2665, %v2667
      %v2892 = vsel %vm2852, %v2669, %v2671
      %v2893 = vsel %vm2852, %v2671, %v2673
      %v2894 = vsel %vm2852, %v2673, %v2675
      %v2895 = vsel %vm2852, %v2677, %v2679
      %v2896 = vsel %vm2852, %v2679, %v2681
      %v2897 = vsel %vm2852, %v2681, %v2683
      %v2898 = vsel %vm2852, %v2685, %v2687
      %v2899 = vsel %vm2852, %v2687, %v2689
      %v2900 = vsel %vm2852, %v2689, %v2691
      %v2901 = vsel %vm2852, %v2693, %v2695
      %v2902 = vsel %vm2852, %v2695, %v2697
      %v2903 = vsel %vm2852, %v2697, %v2699
      %v2904 = vsel %vm2852, %v2701, %v2703
      %v2905 = vsel %vm2852, %v2703, %v2705
      %v2906 = vsel %vm2852, %v2705, %v2707
      %v2907 = vsel %vm2852, %v2709, %v2711
      %v2908 = vsel %vm2852, %v2711, %v2713
      %v2909 = vsel %vm2852, %v2713, %v2715
      %v2910 = vsel %vm2852, %v2717, %v2719
      %v2911 = vsel %vm2852, %v2719, %v2721
      %v2912 = vsel %vm2852, %v2721, %v2723
      %v2913 = vsel %vm2852, %v2725, %v2727
      %v2914 = vsel %vm2852, %v2727, %v2729
      %v2915 = vsel %vm2852, %v2729, %v2731
      %v2916 = vsel %vm2852, %v2733, %v2735
      %v2917 = vsel %vm2852, %v2735, %v2737
      %v2918 = vsel %vm2852, %v2737, %v2739
      %v2919 = vsel %vm2852, %v2741, %v2743
      %v2920 = vsel %vm2852, %v2743, %v2745
      %v2921 = vsel %vm2852, %v2745, %v2747
      %v2922 = vsel %vm2852, %v2749, %v2751
      %v2923 = vsel %vm2852, %v2751, %v2753
      %v2924 = vsel %vm2852, %v2753, %v2755
      %v2925 = vsel %vm2852, %v2757, %v2759
      %v2926 = vsel %vm2852, %v2759, %v2761
      %v2927 = vsel %vm2852, %v2761, %v2763
      %v2928 = vsel %vm2852, %v2765, %v2767
      %v2929 = vsel %vm2852, %v2767, %v2769
      %v2930 = vsel %vm2852, %v2769, %v2771
      %v2931 = vsel %vm2852, %v2773, %v2775
      %v2932 = vsel %vm2852, %v2775, %v2777
      %v2933 = vsel %vm2852, %v2777, %v2779
      %v2934 = vsel %vm2852, %v2781, %v2783
      %v2935 = vsel %vm2852, %v2783, %v2785
      %v2936 = vsel %vm2852, %v2785, %v2787
      %v2937 = vsel %vm2852, %v2789, %v2791
      %v2938 = vsel %vm2852, %v2791, %v2793
      %v2939 = vsel %vm2852, %v2793, %v2795
      %v2940 = vsel %vm2852, %v2797, %v2799
      %v2941 = vsel %vm2852, %v2799, %v2801
      %v2942 = vsel %vm2852, %v2801, %v2803
      %v2943 = vsel %vm2852, %v2805, %v2807
      %v2944 = vsel %vm2852, %v2807, %v2809
      %v2945 = vsel %vm2852, %v2809, %v2811
      %v2946 = vsel %vm2852, %v2813, %v2815
      %v2947 = vsel %vm2852, %v2815, %v2817
      %v2948 = vsel %vm2852, %v2817, %v2819
      %v2949 = vsel %vm2852, %v2821, %v2823
      %v2950 = vsel %vm2852, %v2823, %v2825
      %v2951 = vsel %vm2852, %v2825, %v2827
      %v2952 = vsel %vm2852, %v2829, %v2831
      %v2953 = vsel %vm2852, %v2831, %v2833
      %v2954 = vsel %vm2852, %v2833, %v2835
      %v2955 = vsel %vm2852, %v2837, %v2839
      %v2956 = vsel %vm2852, %v2839, %v2841
      %v2957 = vsel %vm2852, %v2841, %v2843
      %v2958 = vsel %vm2852, %v2845, %v2847
      %v2959 = vsel %vm2852, %v2847, %v2849
      %v2960 = vsel %vm2852, %v2849, %v2851
      %v3070 = vsel %vm1165, %v2532, 0
      %v3073 = vsel %vm1165, %v2537, 0
      %v3076 = vsel %vm1165, %v2542, 0
      %v3079 = vsel %vm1165, %v2547, 0
      %3081 = vmatpush.bf16.msra.mxu0 %v2874
      %3082 = vmatpush.bf16.msra.mxu0 %v2871
      %3083 = vmatpush.bf16.msra.mxu0 %v2868
      %3084 = vmatpush.bf16.msra.mxu0 %v2865
      %3085 = vmatpush.bf16.msra.mxu0 %v2862
      %3086 = vmatpush.bf16.msra.mxu0 %v2859
      %3087 = vmatpush.bf16.msra.mxu0 %v2856
      %3088 = vmatpush.bf16.msra.mxu0 %v2853
      %3089 = vmatmul.bf16.gmra.mxu0 %v2528
      %v3090 = vpop.f32.mrf.mxu0
      %v3091 = vadd.f32 %v2427, %v3090
      %v3092 = vpop.f32.mrf.mxu0
      %v3093 = vadd.f32 %v2432, %v3092
      %3094 = vmatmul.bf16.gmra.mxu0 %v2533
      %v3095 = vpop.f32.mrf.mxu0
      %v3096 = vadd.f32 %v2437, %v3095
      %v3097 = vpop.f32.mrf.mxu0
      %v3098 = vadd.f32 %v2442, %v3097
      %3099 = vmatmul.bf16.gmra.mxu0 %v2538
      %v3100 = vpop.f32.mrf.mxu0
      %v3101 = vadd.f32 %v2447, %v3100
      %v3102 = vpop.f32.mrf.mxu0
      %v3103 = vadd.f32 %v2452, %v3102
      %3104 = vmatmul.bf16.gmra.mxu0 %v2543
      %v3105 = vpop.f32.mrf.mxu0
      %v3106 = vadd.f32 %v2457, %v3105
      %v3107 = vpop.f32.mrf.mxu0
      %v3108 = vadd.f32 %v2462, %v3107
      %3109 = vdwg.mxu0
      %3110 = vmatpush.bf16.msra.mxu0 %v2898
      %3111 = vmatpush.bf16.msra.mxu0 %v2895
      %3112 = vmatpush.bf16.msra.mxu0 %v2892
      %3113 = vmatpush.bf16.msra.mxu0 %v2889
      %3114 = vmatpush.bf16.msra.mxu0 %v2886
      %3115 = vmatpush.bf16.msra.mxu0 %v2883
      %3116 = vmatpush.bf16.msra.mxu0 %v2880
      %3117 = vmatpush.bf16.msra.mxu0 %v2877
      %3118 = vmatmul.bf16.gmra.mxu0 %v2529
      %v3119 = vpop.f32.mrf.mxu0
      %v3120 = vadd.f32 %v3091, %v3119
      %v3121 = vpop.f32.mrf.mxu0
      %v3122 = vadd.f32 %v3093, %v3121
      %3123 = vmatmul.bf16.gmra.mxu0 %v2534
      %v3124 = vpop.f32.mrf.mxu0
      %v3125 = vadd.f32 %v3096, %v3124
      %v3126 = vpop.f32.mrf.mxu0
      %v3127 = vadd.f32 %v3098, %v3126
      %3128 = vmatmul.bf16.gmra.mxu0 %v2539
      %v3129 = vpop.f32.mrf.mxu0
      %v3130 = vadd.f32 %v3101, %v3129
      %v3131 = vpop.f32.mrf.mxu0
      %v3132 = vadd.f32 %v3103, %v3131
      %3133 = vmatmul.bf16.gmra.mxu0 %v2544
      %v3134 = vpop.f32.mrf.mxu0
      %v3135 = vadd.f32 %v3106, %v3134
      %v3136 = vpop.f32.mrf.mxu0
      %v3137 = vadd.f32 %v3108, %v3136
      %3138 = vdwg.mxu0
      %3139 = vmatpush.bf16.msra.mxu0 %v2922
      %3140 = vmatpush.bf16.msra.mxu0 %v2919
      %3141 = vmatpush.bf16.msra.mxu0 %v2916
      %3142 = vmatpush.bf16.msra.mxu0 %v2913
      %3143 = vmatpush.bf16.msra.mxu0 %v2910
      %3144 = vmatpush.bf16.msra.mxu0 %v2907
      %3145 = vmatpush.bf16.msra.mxu0 %v2904
      %3146 = vmatpush.bf16.msra.mxu0 %v2901
      %3147 = vmatmul.bf16.gmra.mxu0 %v2530
      %v3148 = vpop.f32.mrf.mxu0
      %v3149 = vadd.f32 %v3120, %v3148
      %v3150 = vpop.f32.mrf.mxu0
      %v3151 = vadd.f32 %v3122, %v3150
      %3152 = vmatmul.bf16.gmra.mxu0 %v2535
      %v3153 = vpop.f32.mrf.mxu0
      %v3154 = vadd.f32 %v3125, %v3153
      %v3155 = vpop.f32.mrf.mxu0
      %v3156 = vadd.f32 %v3127, %v3155
      %3157 = vmatmul.bf16.gmra.mxu0 %v2540
      %v3158 = vpop.f32.mrf.mxu0
      %v3159 = vadd.f32 %v3130, %v3158
      %v3160 = vpop.f32.mrf.mxu0
      %v3161 = vadd.f32 %v3132, %v3160
      %3162 = vmatmul.bf16.gmra.mxu0 %v2545
      %v3163 = vpop.f32.mrf.mxu0
      %v3164 = vadd.f32 %v3135, %v3163
      %v3165 = vpop.f32.mrf.mxu0
      %v3166 = vadd.f32 %v3137, %v3165
      %3167 = vdwg.mxu0
      %3168 = vmatpush.bf16.msra.mxu0 %v2946
      %3169 = vmatpush.bf16.msra.mxu0 %v2943
      %3170 = vmatpush.bf16.msra.mxu0 %v2940
      %3171 = vmatpush.bf16.msra.mxu0 %v2937
      %3172 = vmatpush.bf16.msra.mxu0 %v2934
      %3173 = vmatpush.bf16.msra.mxu0 %v2931
      %3174 = vmatpush.bf16.msra.mxu0 %v2928
      %3175 = vmatpush.bf16.msra.mxu0 %v2925
      %3176 = vmatmul.bf16.gmra.mxu0 %v2531
      %v3177 = vpop.f32.mrf.mxu0
      %v3178 = vadd.f32 %v3149, %v3177
      %v3179 = vpop.f32.mrf.mxu0
      %v3180 = vadd.f32 %v3151, %v3179
      %3181 = vmatmul.bf16.gmra.mxu0 %v2536
      %v3182 = vpop.f32.mrf.mxu0
      %v3183 = vadd.f32 %v3154, %v3182
      %v3184 = vpop.f32.mrf.mxu0
      %v3185 = vadd.f32 %v3156, %v3184
      %3186 = vmatmul.bf16.gmra.mxu0 %v2541
      %v3187 = vpop.f32.mrf.mxu0
      %v3188 = vadd.f32 %v3159, %v3187
      %v3189 = vpop.f32.mrf.mxu0
      %v3190 = vadd.f32 %v3161, %v3189
      %3191 = vmatmul.bf16.gmra.mxu0 %v2546
      %v3192 = vpop.f32.mrf.mxu0
      %v3193 = vadd.f32 %v3164, %v3192
      %v3194 = vpop.f32.mrf.mxu0
      %v3195 = vadd.f32 %v3166, %v3194
      %3196 = vdwg.mxu0
      %3197 = vmatpush.bf16.msra.mxu0 0
      %3198 = vmatpush.bf16.msra.mxu0 0
      %3199 = vmatpush.bf16.msra.mxu0 0
      %3200 = vmatpush.bf16.msra.mxu0 0
      %3201 = vmatpush.bf16.msra.mxu0 %v2958
      %3202 = vmatpush.bf16.msra.mxu0 %v2955
      %3203 = vmatpush.bf16.msra.mxu0 %v2952
      %3204 = vmatpush.bf16.msra.mxu0 %v2949
      %3205 = vmatmul.bf16.gmra.mxu0 %v3070
      %v3206 = vpop.f32.mrf.mxu0
      %v3207 = vadd.f32 %v3178, %v3206
      %v3208 = vpop.f32.mrf.mxu0
      %v3209 = vadd.f32 %v3180, %v3208
      %3210 = vmatmul.bf16.gmra.mxu0 %v3073
      %v3211 = vpop.f32.mrf.mxu0
      %v3212 = vadd.f32 %v3183, %v3211
      %v3213 = vpop.f32.mrf.mxu0
      %v3214 = vadd.f32 %v3185, %v3213
      %3215 = vmatmul.bf16.gmra.mxu0 %v3076
      %v3216 = vpop.f32.mrf.mxu0
      %v3217 = vadd.f32 %v3188, %v3216
      %v3218 = vpop.f32.mrf.mxu0
      %v3219 = vadd.f32 %v3190, %v3218
      %3220 = vmatmul.bf16.gmra.mxu0 %v3079
      %v3221 = vpop.f32.mrf.mxu0
      %v3222 = vadd.f32 %v3193, %v3221
      %v3223 = vpop.f32.mrf.mxu0
      %v3224 = vadd.f32 %v3195, %v3223
      %3225 = vdwg.mxu0
      %3226 = vmatpush.bf16.msra.mxu0 %v2875
      %3227 = vmatpush.bf16.msra.mxu0 %v2872
      %3228 = vmatpush.bf16.msra.mxu0 %v2869
      %3229 = vmatpush.bf16.msra.mxu0 %v2866
      %3230 = vmatpush.bf16.msra.mxu0 %v2863
      %3231 = vmatpush.bf16.msra.mxu0 %v2860
      %3232 = vmatpush.bf16.msra.mxu0 %v2857
      %3233 = vmatpush.bf16.msra.mxu0 %v2854
      %3234 = vmatmul.bf16.gmra.mxu0 %v2528
      %v3235 = vpop.f32.mrf.mxu0
      %v3236 = vadd.f32 %v2427, %v3235
      %v3237 = vpop.f32.mrf.mxu0
      %v3238 = vadd.f32 %v2432, %v3237
      %3239 = vmatmul.bf16.gmra.mxu0 %v2533
      %v3240 = vpop.f32.mrf.mxu0
      %v3241 = vadd.f32 %v2437, %v3240
      %v3242 = vpop.f32.mrf.mxu0
      %v3243 = vadd.f32 %v2442, %v3242
      %3244 = vmatmul.bf16.gmra.mxu0 %v2538
      %v3245 = vpop.f32.mrf.mxu0
      %v3246 = vadd.f32 %v2447, %v3245
      %v3247 = vpop.f32.mrf.mxu0
      %v3248 = vadd.f32 %v2452, %v3247
      %3249 = vmatmul.bf16.gmra.mxu0 %v2543
      %v3250 = vpop.f32.mrf.mxu0
      %v3251 = vadd.f32 %v2457, %v3250
      %v3252 = vpop.f32.mrf.mxu0
      %v3253 = vadd.f32 %v2462, %v3252
      %3254 = vdwg.mxu0
      %3255 = vmatpush.bf16.msra.mxu0 %v2899
      %3256 = vmatpush.bf16.msra.mxu0 %v2896
      %3257 = vmatpush.bf16.msra.mxu0 %v2893
      %3258 = vmatpush.bf16.msra.mxu0 %v2890
      %3259 = vmatpush.bf16.msra.mxu0 %v2887
      %3260 = vmatpush.bf16.msra.mxu0 %v2884
      %3261 = vmatpush.bf16.msra.mxu0 %v2881
      %3262 = vmatpush.bf16.msra.mxu0 %v2878
      %3263 = vmatmul.bf16.gmra.mxu0 %v2529
      %v3264 = vpop.f32.mrf.mxu0
      %v3265 = vadd.f32 %v3236, %v3264
      %v3266 = vpop.f32.mrf.mxu0
      %v3267 = vadd.f32 %v3238, %v3266
      %3268 = vmatmul.bf16.gmra.mxu0 %v2534
      %v3269 = vpop.f32.mrf.mxu0
      %v3270 = vadd.f32 %v3241, %v3269
      %v3271 = vpop.f32.mrf.mxu0
      %v3272 = vadd.f32 %v3243, %v3271
      %3273 = vmatmul.bf16.gmra.mxu0 %v2539
      %v3274 = vpop.f32.mrf.mxu0
      %v3275 = vadd.f32 %v3246, %v3274
      %v3276 = vpop.f32.mrf.mxu0
      %v3277 = vadd.f32 %v3248, %v3276
      %3278 = vmatmul.bf16.gmra.mxu0 %v2544
      %v3279 = vpop.f32.mrf.mxu0
      %v3280 = vadd.f32 %v3251, %v3279
      %v3281 = vpop.f32.mrf.mxu0
      %v3282 = vadd.f32 %v3253, %v3281
      %3283 = vdwg.mxu0
      %3284 = vmatpush.bf16.msra.mxu0 %v2923
      %3285 = vmatpush.bf16.msra.mxu0 %v2920
      %3286 = vmatpush.bf16.msra.mxu0 %v2917
      %3287 = vmatpush.bf16.msra.mxu0 %v2914
      %3288 = vmatpush.bf16.msra.mxu0 %v2911
      %3289 = vmatpush.bf16.msra.mxu0 %v2908
      %3290 = vmatpush.bf16.msra.mxu0 %v2905
      %3291 = vmatpush.bf16.msra.mxu0 %v2902
      %3292 = vmatmul.bf16.gmra.mxu0 %v2530
      %v3293 = vpop.f32.mrf.mxu0
      %v3294 = vadd.f32 %v3265, %v3293
      %v3295 = vpop.f32.mrf.mxu0
      %v3296 = vadd.f32 %v3267, %v3295
      %3297 = vmatmul.bf16.gmra.mxu0 %v2535
      %v3298 = vpop.f32.mrf.mxu0
      %v3299 = vadd.f32 %v3270, %v3298
      %v3300 = vpop.f32.mrf.mxu0
      %v3301 = vadd.f32 %v3272, %v3300
      %3302 = vmatmul.bf16.gmra.mxu0 %v2540
      %v3303 = vpop.f32.mrf.mxu0
      %v3304 = vadd.f32 %v3275, %v3303
      %v3305 = vpop.f32.mrf.mxu0
      %v3306 = vadd.f32 %v3277, %v3305
      %3307 = vmatmul.bf16.gmra.mxu0 %v2545
      %v3308 = vpop.f32.mrf.mxu0
      %v3309 = vadd.f32 %v3280, %v3308
      %v3310 = vpop.f32.mrf.mxu0
      %v3311 = vadd.f32 %v3282, %v3310
      %3312 = vdwg.mxu0
      %3313 = vmatpush.bf16.msra.mxu0 %v2947
      %3314 = vmatpush.bf16.msra.mxu0 %v2944
      %3315 = vmatpush.bf16.msra.mxu0 %v2941
      %3316 = vmatpush.bf16.msra.mxu0 %v2938
      %3317 = vmatpush.bf16.msra.mxu0 %v2935
      %3318 = vmatpush.bf16.msra.mxu0 %v2932
      %3319 = vmatpush.bf16.msra.mxu0 %v2929
      %3320 = vmatpush.bf16.msra.mxu0 %v2926
      %3321 = vmatmul.bf16.gmra.mxu0 %v2531
      %v3322 = vpop.f32.mrf.mxu0
      %v3323 = vadd.f32 %v3294, %v3322
      %v3324 = vpop.f32.mrf.mxu0
      %v3325 = vadd.f32 %v3296, %v3324
      %3326 = vmatmul.bf16.gmra.mxu0 %v2536
      %v3327 = vpop.f32.mrf.mxu0
      %v3328 = vadd.f32 %v3299, %v3327
      %v3329 = vpop.f32.mrf.mxu0
      %v3330 = vadd.f32 %v3301, %v3329
      %3331 = vmatmul.bf16.gmra.mxu0 %v2541
      %v3332 = vpop.f32.mrf.mxu0
      %v3333 = vadd.f32 %v3304, %v3332
      %v3334 = vpop.f32.mrf.mxu0
      %v3335 = vadd.f32 %v3306, %v3334
      %3336 = vmatmul.bf16.gmra.mxu0 %v2546
      %v3337 = vpop.f32.mrf.mxu0
      %v3338 = vadd.f32 %v3309, %v3337
      %v3339 = vpop.f32.mrf.mxu0
      %v3340 = vadd.f32 %v3311, %v3339
      %3341 = vdwg.mxu0
      %3342 = vmatpush.bf16.msra.mxu0 0
      %3343 = vmatpush.bf16.msra.mxu0 0
      %3344 = vmatpush.bf16.msra.mxu0 0
      %3345 = vmatpush.bf16.msra.mxu0 0
      %3346 = vmatpush.bf16.msra.mxu0 %v2959
      %3347 = vmatpush.bf16.msra.mxu0 %v2956
      %3348 = vmatpush.bf16.msra.mxu0 %v2953
      %3349 = vmatpush.bf16.msra.mxu0 %v2950
      %3350 = vmatmul.bf16.gmra.mxu0 %v3070
      %v3351 = vpop.f32.mrf.mxu0
      %v3352 = vadd.f32 %v3323, %v3351
      %v3353 = vpop.f32.mrf.mxu0
      %v3354 = vadd.f32 %v3325, %v3353
      %3355 = vmatmul.bf16.gmra.mxu0 %v3073
      %v3356 = vpop.f32.mrf.mxu0
      %v3357 = vadd.f32 %v3328, %v3356
      %v3358 = vpop.f32.mrf.mxu0
      %v3359 = vadd.f32 %v3330, %v3358
      %3360 = vmatmul.bf16.gmra.mxu0 %v3076
      %v3361 = vpop.f32.mrf.mxu0
      %v3362 = vadd.f32 %v3333, %v3361
      %v3363 = vpop.f32.mrf.mxu0
      %v3364 = vadd.f32 %v3335, %v3363
      %3365 = vmatmul.bf16.gmra.mxu0 %v3079
      %v3366 = vpop.f32.mrf.mxu0
      %v3367 = vadd.f32 %v3338, %v3366
      %v3368 = vpop.f32.mrf.mxu0
      %v3369 = vadd.f32 %v3340, %v3368
      %3370 = vdwg.mxu0
      %3371 = vmatpush.bf16.msra.mxu0 %v2876
      %3372 = vmatpush.bf16.msra.mxu0 %v2873
      %3373 = vmatpush.bf16.msra.mxu0 %v2870
      %3374 = vmatpush.bf16.msra.mxu0 %v2867
      %3375 = vmatpush.bf16.msra.mxu0 %v2864
      %3376 = vmatpush.bf16.msra.mxu0 %v2861
      %3377 = vmatpush.bf16.msra.mxu0 %v2858
      %3378 = vmatpush.bf16.msra.mxu0 %v2855
      %3379 = vmatmul.bf16.gmra.mxu0 %v2528
      %v3380 = vpop.f32.mrf.mxu0
      %v3381 = vadd.f32 %v2427, %v3380
      %v3382 = vpop.f32.mrf.mxu0
      %v3383 = vadd.f32 %v2432, %v3382
      %3384 = vmatmul.bf16.gmra.mxu0 %v2533
      %v3385 = vpop.f32.mrf.mxu0
      %v3386 = vadd.f32 %v2437, %v3385
      %v3387 = vpop.f32.mrf.mxu0
      %v3388 = vadd.f32 %v2442, %v3387
      %3389 = vmatmul.bf16.gmra.mxu0 %v2538
      %v3390 = vpop.f32.mrf.mxu0
      %v3391 = vadd.f32 %v2447, %v3390
      %v3392 = vpop.f32.mrf.mxu0
      %v3393 = vadd.f32 %v2452, %v3392
      %3394 = vmatmul.bf16.gmra.mxu0 %v2543
      %v3395 = vpop.f32.mrf.mxu0
      %v3396 = vadd.f32 %v2457, %v3395
      %v3397 = vpop.f32.mrf.mxu0
      %v3398 = vadd.f32 %v2462, %v3397
      %3399 = vdwg.mxu0
      %3400 = vmatpush.bf16.msra.mxu0 %v2900
      %3401 = vmatpush.bf16.msra.mxu0 %v2897
      %3402 = vmatpush.bf16.msra.mxu0 %v2894
      %3403 = vmatpush.bf16.msra.mxu0 %v2891
      %3404 = vmatpush.bf16.msra.mxu0 %v2888
      %3405 = vmatpush.bf16.msra.mxu0 %v2885
      %3406 = vmatpush.bf16.msra.mxu0 %v2882
      %3407 = vmatpush.bf16.msra.mxu0 %v2879
      %3408 = vmatmul.bf16.gmra.mxu0 %v2529
      %v3409 = vpop.f32.mrf.mxu0
      %v3410 = vadd.f32 %v3381, %v3409
      %v3411 = vpop.f32.mrf.mxu0
      %v3412 = vadd.f32 %v3383, %v3411
      %3413 = vmatmul.bf16.gmra.mxu0 %v2534
      %v3414 = vpop.f32.mrf.mxu0
      %v3415 = vadd.f32 %v3386, %v3414
      %v3416 = vpop.f32.mrf.mxu0
      %v3417 = vadd.f32 %v3388, %v3416
      %3418 = vmatmul.bf16.gmra.mxu0 %v2539
      %v3419 = vpop.f32.mrf.mxu0
      %v3420 = vadd.f32 %v3391, %v3419
      %v3421 = vpop.f32.mrf.mxu0
      %v3422 = vadd.f32 %v3393, %v3421
      %3423 = vmatmul.bf16.gmra.mxu0 %v2544
      %v3424 = vpop.f32.mrf.mxu0
      %v3425 = vadd.f32 %v3396, %v3424
      %v3426 = vpop.f32.mrf.mxu0
      %v3427 = vadd.f32 %v3398, %v3426
      %3428 = vdwg.mxu0
      %3429 = vmatpush.bf16.msra.mxu0 %v2924
      %3430 = vmatpush.bf16.msra.mxu0 %v2921
      %3431 = vmatpush.bf16.msra.mxu0 %v2918
      %3432 = vmatpush.bf16.msra.mxu0 %v2915
      %3433 = vmatpush.bf16.msra.mxu0 %v2912
      %3434 = vmatpush.bf16.msra.mxu0 %v2909
      %3435 = vmatpush.bf16.msra.mxu0 %v2906
      %3436 = vmatpush.bf16.msra.mxu0 %v2903
      %3437 = vmatmul.bf16.gmra.mxu0 %v2530
      %v3438 = vpop.f32.mrf.mxu0
      %v3439 = vadd.f32 %v3410, %v3438
      %v3440 = vpop.f32.mrf.mxu0
      %v3441 = vadd.f32 %v3412, %v3440
      %3442 = vmatmul.bf16.gmra.mxu0 %v2535
      %v3443 = vpop.f32.mrf.mxu0
      %v3444 = vadd.f32 %v3415, %v3443
      %v3445 = vpop.f32.mrf.mxu0
      %v3446 = vadd.f32 %v3417, %v3445
      %3447 = vmatmul.bf16.gmra.mxu0 %v2540
      %v3448 = vpop.f32.mrf.mxu0
      %v3449 = vadd.f32 %v3420, %v3448
      %v3450 = vpop.f32.mrf.mxu0
      %v3451 = vadd.f32 %v3422, %v3450
      %3452 = vmatmul.bf16.gmra.mxu0 %v2545
      %v3453 = vpop.f32.mrf.mxu0
      %v3454 = vadd.f32 %v3425, %v3453
      %v3455 = vpop.f32.mrf.mxu0
      %v3456 = vadd.f32 %v3427, %v3455
      %3457 = vdwg.mxu0
      %3458 = vmatpush.bf16.msra.mxu0 %v2948
      %3459 = vmatpush.bf16.msra.mxu0 %v2945
      %3460 = vmatpush.bf16.msra.mxu0 %v2942
      %3461 = vmatpush.bf16.msra.mxu0 %v2939
      %3462 = vmatpush.bf16.msra.mxu0 %v2936
      %3463 = vmatpush.bf16.msra.mxu0 %v2933
      %3464 = vmatpush.bf16.msra.mxu0 %v2930
      %3465 = vmatpush.bf16.msra.mxu0 %v2927
      %3466 = vmatmul.bf16.gmra.mxu0 %v2531
      %v3467 = vpop.f32.mrf.mxu0
      %v3468 = vadd.f32 %v3439, %v3467
      %v3469 = vpop.f32.mrf.mxu0
      %v3470 = vadd.f32 %v3441, %v3469
      %3471 = vmatmul.bf16.gmra.mxu0 %v2536
      %v3472 = vpop.f32.mrf.mxu0
      %v3473 = vadd.f32 %v3444, %v3472
      %v3474 = vpop.f32.mrf.mxu0
      %v3475 = vadd.f32 %v3446, %v3474
      %3476 = vmatmul.bf16.gmra.mxu0 %v2541
      %v3477 = vpop.f32.mrf.mxu0
      %v3478 = vadd.f32 %v3449, %v3477
      %v3479 = vpop.f32.mrf.mxu0
      %v3480 = vadd.f32 %v3451, %v3479
      %3481 = vmatmul.bf16.gmra.mxu0 %v2546
      %v3482 = vpop.f32.mrf.mxu0
      %v3483 = vadd.f32 %v3454, %v3482
      %v3484 = vpop.f32.mrf.mxu0
      %v3485 = vadd.f32 %v3456, %v3484
      %3486 = vdwg.mxu0
      %3487 = vmatpush.bf16.msra.mxu0 0
      %3488 = vmatpush.bf16.msra.mxu0 0
      %3489 = vmatpush.bf16.msra.mxu0 0
      %3490 = vmatpush.bf16.msra.mxu0 0
      %3491 = vmatpush.bf16.msra.mxu0 %v2960
      %3492 = vmatpush.bf16.msra.mxu0 %v2957
      %3493 = vmatpush.bf16.msra.mxu0 %v2954
      %3494 = vmatpush.bf16.msra.mxu0 %v2951
      %3495 = vmatmul.bf16.gmra.mxu0 %v3070
      %v3496 = vpop.f32.mrf.mxu0
      %v3497 = vadd.f32 %v3468, %v3496
      %v3498 = vpop.f32.mrf.mxu0
      %v3499 = vadd.f32 %v3470, %v3498
      %3500 = vmatmul.bf16.gmra.mxu0 %v3073
      %v3501 = vpop.f32.mrf.mxu0
      %v3502 = vadd.f32 %v3473, %v3501
      %v3503 = vpop.f32.mrf.mxu0
      %v3504 = vadd.f32 %v3475, %v3503
      %3505 = vmatmul.bf16.gmra.mxu0 %v3076
      %v3506 = vpop.f32.mrf.mxu0
      %v3507 = vadd.f32 %v3478, %v3506
      %v3508 = vpop.f32.mrf.mxu0
      %v3509 = vadd.f32 %v3480, %v3508
      %3510 = vmatmul.bf16.gmra.mxu0 %v3079
      %v3511 = vpop.f32.mrf.mxu0
      %v3512 = vadd.f32 %v3483, %v3511
      %v3513 = vpop.f32.mrf.mxu0
      %v3514 = vadd.f32 %v3485, %v3513
      %3515 = vdwg.mxu0
      %v3516 = vld [vmem:[%s266] sm:$0xff]
      %v3517 = vld [vmem:[%s266 + $0x8] sm:$0xff]
      %v3518 = vld [vmem:[%s266 + $0x10] sm:$0xff]
      %v3519 = vld [vmem:[%s266 + $0x18] sm:$0xff]
      %v3520 = vld [vmem:[%s266 + $0x20] sm:$0xff]
      %v3521 = vld [vmem:[%s266 + $0x28] sm:$0xff]
      %v3522 = vld [vmem:[%s266 + $0x30] sm:$0xff]
      %v3523 = vld [vmem:[%s266 + $0x38] sm:$0xff]
      %v3524 = vld [vmem:[%s266 + $0x40] sm:$0xff]
      %v3525 = vld [vmem:[%s266 + $0x48] sm:$0xff]
      %v3526 = vld [vmem:[%s266 + $0x50] sm:$0xff]
      %v3527 = vld [vmem:[%s266 + $0x58] sm:$0xff]
      %v3528 = vld [vmem:[%s266 + $0x60] sm:$0xff]
      %v3529 = vld [vmem:[%s266 + $0x68] sm:$0xff]
      %v3530 = vld [vmem:[%s266 + $0x70] sm:$0xff]
      %v3531 = vld [vmem:[%s266 + $0x78] sm:$0xff]
      %v3532 = vld [vmem:[%s266 + $0x80] sm:$0xff]
      %v3533 = vld [vmem:[%s266 + $0x88] sm:$0xff]
      %v3534 = vld [vmem:[%s266 + $0x90] sm:$0xff]
      %v3535 = vld [vmem:[%s266 + $0x98] sm:$0xff]
      %v3536 = vld [vmem:[%s266 + $0xa0] sm:$0xff]
      %v3537 = vld [vmem:[%s266 + $0xa8] sm:$0xff]
      %v3538 = vld [vmem:[%s266 + $0xb0] sm:$0xff]
      %v3539 = vld [vmem:[%s266 + $0xb8] sm:$0xff]
      %v3540 = vadd.f32 %v3207, %v3516
      %v3541 = vadd.f32 %v3352, %v3517
      %v3542 = vadd.f32 %v3497, %v3518
      %v3543 = vadd.f32 %v3209, %v3519
      %v3544 = vadd.f32 %v3354, %v3520
      %v3545 = vadd.f32 %v3499, %v3521
      %v3546 = vadd.f32 %v3212, %v3522
      %v3547 = vadd.f32 %v3357, %v3523
      %v3548 = vadd.f32 %v3502, %v3524
      %v3549 = vadd.f32 %v3214, %v3525
      %v3550 = vadd.f32 %v3359, %v3526
      %v3551 = vadd.f32 %v3504, %v3527
      %v3552 = vadd.f32 %v3217, %v3528
      %v3553 = vadd.f32 %v3362, %v3529
      %v3554 = vadd.f32 %v3507, %v3530
      %v3555 = vadd.f32 %v3219, %v3531
      %v3556 = vadd.f32 %v3364, %v3532
      %v3557 = vadd.f32 %v3509, %v3533
      %v3558 = vadd.f32 %v3222, %v3534
      %v3559 = vadd.f32 %v3367, %v3535
      %v3560 = vadd.f32 %v3512, %v3536
      %v3561 = vadd.f32 %v3224, %v3537
      %v3562 = vadd.f32 %v3369, %v3538
      %v3563 = vadd.f32 %v3514, %v3539
      %3564 = vst [vmem:[%s271] sm:$0xff] %v3540
      %3565 = vst [vmem:[%s271 + $0x8] sm:$0xff] %v3541
      %3566 = vst [vmem:[%s271 + $0x10] sm:$0xff] %v3542
      %3567 = vst [vmem:[%s271 + $0x18] sm:$0xff] %v3543
      %3568 = vst [vmem:[%s271 + $0x20] sm:$0xff] %v3544
      %3569 = vst [vmem:[%s271 + $0x28] sm:$0xff] %v3545
      %3570 = vst [vmem:[%s271 + $0x30] sm:$0xff] %v3546
      %3571 = vst [vmem:[%s271 + $0x38] sm:$0xff] %v3547
      %3572 = vst [vmem:[%s271 + $0x40] sm:$0xff] %v3548
      %3573 = vst [vmem:[%s271 + $0x48] sm:$0xff] %v3549
      %3574 = vst [vmem:[%s271 + $0x50] sm:$0xff] %v3550
      %3575 = vst [vmem:[%s271 + $0x58] sm:$0xff] %v3551
      %3576 = vst [vmem:[%s271 + $0x60] sm:$0xff] %v3552
      %3577 = vst [vmem:[%s271 + $0x68] sm:$0xff] %v3553
      %3578 = vst [vmem:[%s271 + $0x70] sm:$0xff] %v3554
      %3579 = vst [vmem:[%s271 + $0x78] sm:$0xff] %v3555
      %3580 = vst [vmem:[%s271 + $0x80] sm:$0xff] %v3556
      %3581 = vst [vmem:[%s271 + $0x88] sm:$0xff] %v3557
      %3582 = vst [vmem:[%s271 + $0x90] sm:$0xff] %v3558
      %3583 = vst [vmem:[%s271 + $0x98] sm:$0xff] %v3559
      %3584 = vst [vmem:[%s271 + $0xa0] sm:$0xff] %v3560
      %3585 = vst [vmem:[%s271 + $0xa8] sm:$0xff] %v3561
      %3586 = vst [vmem:[%s271 + $0xb0] sm:$0xff] %v3562
      %3587 = vst [vmem:[%s271 + $0xb8] sm:$0xff] %v3563
      %p3588 = scmp.lt.s32.totalorder %s17, 1
      %s3589 = scalar_select %p3588, %s17, 1
      %s3590 = smul.addr %s3589, 24
      %s3591 = smul.addr %s3590, 8
      %s3592 = scalar_lea.vmem %s6, %s3591
      // Predicated region
      $region45: #{residual_block_nchw.1} parent=43 // pred_check
        %p3593 = pneg %p171
      $region46: #{residual_block_nchw.1} parent=43 // pred_check_branch
        %3595 = sbr.rel (%p3593) target = $region48
      $region47: #{residual_block_nchw.1} parent=43 // pred_region
        _
      $region48: #{residual_block_nchw.1} parent=43 // pred_fallthru
        _
    $region44: #{residual_block_nchw.1} parent=5 // pred_fallthru
      _
    %p3596 = scmp.le.s32.totalorder 2, %s12
    // Predicated region
    $region49: #{residual_block_nchw.1} parent=5 // pred_check
      %p3597 = pneg %p3596
    $region50: #{residual_block_nchw.1} parent=5 // pred_check_branch
      %3599 = sbr.rel (%p3597) target = $region52
    $region51: #{residual_block_nchw.1} parent=5 // pred_region
      %s3600 = ssub.s32 %s12, 2
      // Predicated region
      $region53: #{residual_block_nchw.1} parent=51 // pred_check
        %p3601 = pneg %p177
      $region54: #{residual_block_nchw.1} parent=51 // pred_check_branch
        %3603 = sbr.rel (%p3601) target = $region56
      $region55: #{residual_block_nchw.1} parent=51 // pred_region
        %p3604 = scmp.lt.s32.totalorder %s18, 1
        %s3605 = scalar_select %p3604, %s18, 1
        %s3606 = smul.addr %s3605, 24
        %s3607 = smul.addr %s3606, 8
        %s3608 = scalar_lea.vmem %s6, %s3607
      $region56: #{residual_block_nchw.1} parent=51 // pred_fallthru
        _
    $region52: #{residual_block_nchw.1} parent=5 // pred_fallthru
      _
  $region6: #{residual_block_nchw.1} parent=0 // loop_footer
    %s16 = sadd.s32 1, %s12
  $region7: #{residual_block_nchw.1} parent=0 // loop_footer_branch
    %11 = sbr.rel target = $region3
  $region8: #{residual_block_nchw.1} parent=0 // loop_exit
    _

</llo_original>
